<compile_context>
chip_gen: v7x
topology: tpu7x:2x2x1
jax: 0.10.0
libtpu: 0.0.40
codegen_flags: <defaults>
</compile_context>

<pallas_src>
import numpy as np

import jax
import jax.numpy as jnp
from jax import lax
from jax.experimental import pallas as pl
from jax.experimental.pallas import tpu as pltpu

# ---- small synthetic configuration ----
B = 2                        # batch
N = 8                        # number of points (set size)
R = B * N                    # flattened rows (batch-major)
RDIM = 3                     # reparam.dim (xyz)
FDIM = 32                    # backbone.feature_dim
TDIM = 32                    # time-feature dim fed to the backbone
CONTEXT_DIMS = (16, 16)      # channels of each CNN feature map
CSUM = sum(CONTEXT_DIMS)     # 32, divisible by 16 groups
FEAT_SHAPES = ((8, 8), (4, 4))   # (H, W) of each feature map
H0, W0 = FEAT_SHAPES[0]
H1, W1 = FEAT_SHAPES[1]
HW0, HW1 = H0 * W0, H1 * W1
C0, C1 = CONTEXT_DIMS
NGROUPS = 16
EPS = 1e-5                   # nn.GroupNorm default

FCOLS = C0                   # per-level channel count (lane width of features)
WBLK = 32                    # per-batch lane block in the wide geometry layout
DCOLS = B * WBLK             # 64: lane width of the per-call data pack
PCOLS = 64                   # lane width of the params/constants pack
XYZ_COL = WBLK               # xyz-embed output columns inside the fused matmul
FEAT_ROWS = B * (HW0 + HW1)  # 160 batch-flattened pixels across both levels

# Row-stacked image-feature GroupNorm assumes both pyramid levels have the
# same channel count and that no 2-channel group crosses the level boundary.
assert C0 == C1 == FCOLS and C0 % (CSUM // NGROUPS) == 0
assert PCOLS >= 2 * (2 * R) and DCOLS >= max(TDIM, FCOLS)


def _r8(n):
    return (n + 7) // 8 * 8


# ---- call-invariant params + hoisted constants pack: (name, rows, cols) ----
_PLAYOUT = (
    ("w_img",   CSUM,         FDIM),
    ("b_img",   1,            FDIM),
    ("w1t",     FDIM + TDIM,  FDIM),       # [w1 ; wt] stacked over rows
    ("b1t",     1,            FDIM),       # b1 + bt
    ("w2",      FDIM,         FDIM),
    ("b2",      1,            FDIM),
    ("w_out",   FDIM,         FDIM),       # (FDIM, RDIM) padded to FDIM cols
    ("b_out",   1,            FDIM),
    # GroupNorm(16, FDIM) constants for rows=R, segments=B
    ("gfd_ccg", FDIM,         NGROUPS),
    ("gfd_gc",  NGROUPS,      FDIM),
    ("gfd_sr",  2 * B,        2 * R),
    ("gfd_rs",  2 * R,        2 * B),
    # GroupNorm(16, CSUM) constants on the row-stacked [lk0 ; lk1] layout
    ("gim_ccg", CSUM // 2,    NGROUPS // 2),
    ("gim_gc",  NGROUPS // 2, CSUM // 2),
    ("gim_sr",  2 * (2 * B),  2 * (2 * R)),
    ("gim_rs",  2 * (2 * R),  2 * (2 * B)),
    # per-row bilinear constants: col0=W, col1=H, col2=base pixel-row offset
    ("bilin",   2 * R,        8),
)
_PSLICE = {}
_off = 0
for _name, _rows, _cols in _PLAYOUT:
    _PSLICE[_name] = (_off, _rows, _cols)
    _off += _r8(_rows)
PROWS = _off                 # 408

# ---- per-call data pack layout (DCOLS lanes) ----
GEOMW_OFF = 0                            # wide geometry           (R, DCOLS)
RHS_OFF = _r8(R)                         # block-diag proj+xyz RHS (B*WBLK, DCOLS)
T_OFF = RHS_OFF + B * WBLK               # replicated t            (R, TDIM)
FEAT_OFF = T_OFF + _r8(R)                # feature pyramid         (FEAT_ROWS, FCOLS)
DATA_ROWS = FEAT_OFF + _r8(FEAT_ROWS)    # 256


# ---------------------------------------------------------------------------
# in-kernel helpers
# ---------------------------------------------------------------------------
def _gn(x, g_cg, g_gc, p_sr, p_rs, n_seg, inv_cnt, eps=EPS):
    """GroupNorm(affine=False) on x:(rows, c) with per-(segment, group) stats.

    All projector matrices come pre-packed from the host; the [x ; x*x] and
    [scale ; shift] sublane stacks make each reduce/broadcast direction a
    single MXU matmul (4 per call).  Stats path stays in f32."""
    f32 = jnp.float32
    r = x.shape[0]
    xs = jnp.concatenate([x, x * x], axis=0)                         # (2r, c)
    stats = jnp.dot(p_sr, jnp.dot(xs, g_cg, preferred_element_type=f32),
                    preferred_element_type=f32) * inv_cnt            # (2s, g)
    mean = stats[:n_seg]
    var = jnp.maximum(stats[n_seg:] - mean * mean, 0.0)
    inv = lax.rsqrt(var + eps)
    ss = jnp.concatenate([inv, -mean * inv], axis=0)                 # (2s, g)
    both = jnp.dot(p_rs, jnp.dot(ss, g_gc, preferred_element_type=f32),
                   preferred_element_type=f32)                       # (2r, c)
    return x * both[:r] + both[r:]


# ---------------------------------------------------------------------------
# the kernel (single grid step: whole forward pass, batch folded into rows)
# ---------------------------------------------------------------------------
def _ray_network_kernel(data_ref, pack_ref, out_ref):
    f32, bf16 = jnp.float32, jnp.bfloat16

    def blk(name):
        off, rows, cols = _PSLICE[name]
        return pack_ref[off:off + rows, 0:cols]

    # ---- fused projection + xyz embed: one block-diagonal matmul (f32) -----
    # geom_wide row r: xyz in lane block of its batch, plus a 1-lane that
    # carries the folded (mu @ K^T, b_xyz) affine terms through the matmul.
    geomw = data_ref[GEOMW_OFF:GEOMW_OFF + R, :]                     # (R, 64)
    rhs = data_ref[RHS_OFF:RHS_OFF + B * WBLK, :]                    # (64, 64)
    big = jnp.dot(geomw, rhs, preferred_element_type=f32)            # (R, 64)
    proj = big[:, 0:RDIM]                    # = (geom*sigma + mu) @ K^T
    xyz_feat = big[:, XYZ_COL:XYZ_COL + FDIM]  # = geom @ w_xyz + b_xyz

    z = proj[:, 2:3]
    z_safe = jnp.where(jnp.abs(z) < 1e-8, 1e-8, z)   # guard: no inf/NaN coords
    inv_z = pl.reciprocal(z_safe, approx=True)       # EUP slot, off VALU path
    u = proj[:, 0:1] * inv_z                         # image-plane x in ~[0, 1]
    v = proj[:, 1:2] * inv_z                         # image-plane y in ~[0, 1]

    # ---- fused bilinear grid_sample over BOTH pyramid levels (one matmul) --
    # rows [0, R) select from level 0, rows [R, 2R) from level 1; per-row
    # W/H/base constants come from the pack, so no level branching in-kernel.
    # TODO(synk): at realistic pyramid sizes (HW >> 128) switch this dense
    # selection matmul to a 4-corner DMA/row gather to keep VMEM O(N*C).
    bc = blk("bilin")                                                # (2R, 8)
    wv, hv, base = bc[:, 0:1], bc[:, 1:2], bc[:, 2:3]
    us = jnp.concatenate([u, u], axis=0)                             # (2R, 1)
    vs = jnp.concatenate([v, v], axis=0)
    # torch grid_sample(align_corners=False): pixel = coord01 * size - 0.5;
    # clamp keeps index math bounded (out-of-view corners contribute 0).
    x = jnp.clip(us * wv - 0.5, -1.0, wv)
    y = jnp.clip(vs * hv - 0.5, -1.0, hv)
    x0 = jnp.floor(x)
    y0 = jnp.floor(y)
    wx1 = x - x0
    wy1 = y - y0
    cols = lax.broadcasted_iota(jnp.int32, (2 * R, FEAT_ROWS), 1)
    sel = jnp.zeros((2 * R, FEAT_ROWS), f32)
    for dy, wy in ((0.0, 1.0 - wy1), (1.0, wy1)):
        for dx, wx in ((0.0, 1.0 - wx1), (1.0, wx1)):
            xi = x0 + dx
            yi = y0 + dy
            valid = ((xi >= 0.0) & (xi < wv)
                     & (yi >= 0.0) & (yi < hv)).astype(f32)
            flat = (base + jnp.clip(yi, 0.0, hv - 1.0) * wv
                    + jnp.clip(xi, 0.0, wv - 1.0)).astype(jnp.int32)
            sel = sel + (cols == flat).astype(f32) * (wy * wx * valid)
    feat = data_ref[FEAT_OFF:FEAT_OFF + FEAT_ROWS, 0:FCOLS]          # (160, 16)
    lk = jnp.dot(sel.astype(bf16), feat.astype(bf16),
                 preferred_element_type=f32)                         # (2R, 16) = [lk0 ; lk1]

    # ---- img_feature_proj: GroupNormBNC(16, CSUM, affine=False) + Linear ---
    # Levels are row-stacked (each (level, batch) is its own GN segment); no
    # group spans the level boundary so statistics match torch exactly.
    gn_im = _gn(lk, blk("gim_ccg"), blk("gim_gc"), blk("gim_sr"), blk("gim_rs"),
                n_seg=2 * B, inv_cnt=1.0 / float(N * (CSUM // NGROUPS)))
    img_in = jnp.concatenate([gn_im[:R], gn_im[R:]], axis=1)         # (R, 32)
    img_feat = jnp.dot(img_in.astype(bf16), blk("w_img").astype(bf16),
                       preferred_element_type=f32) + blk("b_img")

    point_feat = xyz_feat + img_feat                                 # (R, FDIM)

    # ---- backbone ---
    # TODO(synk): the SetTransformer backbone definition is not provided; using
    # a single pre-norm residual MLP block with additive time conditioning as a
    # stand-in (do_cache=False path, out_cache=None).
    t_rep = data_ref[T_OFF:T_OFF + R, 0:TDIM]                        # (R, TDIM)
    h = _gn(point_feat, blk("gfd_ccg"), blk("gfd_gc"), blk("gfd_sr"),
            blk("gfd_rs"), n_seg=B, inv_cnt=1.0 / float(N * (FDIM // NGROUPS)))
    h = jnp.concatenate([h, t_rep], axis=1)                          # (R, 64)
    h = jnp.dot(h.astype(bf16), blk("w1t").astype(bf16),
                preferred_element_type=f32) + blk("b1t")
    h = jax.nn.gelu(h)
    processed = point_feat + jnp.dot(h.astype(bf16), blk("w2").astype(bf16),
                                     preferred_element_type=f32) + blk("b2")

    # ---- output_proj: GroupNormBNC(16, FDIM, affine=False) + Linear(FDIM,3) -
    og = _gn(processed, blk("gfd_ccg"), blk("gfd_gc"), blk("gfd_sr"),
             blk("gfd_rs"), n_seg=B, inv_cnt=1.0 / float(N * (FDIM // NGROUPS)))
    out = jnp.dot(og.astype(bf16), blk("w_out").astype(bf16),
                  preferred_element_type=f32) + blk("b_out")
    out_ref[...] = out                                               # (R, 32)


# ---------------------------------------------------------------------------
# host-side packing
# ---------------------------------------------------------------------------
def _gn_consts_np(rows, n_seg, c, g):
    """One-hot projector constants for matmul-based segment GroupNorm."""
    seg = rows // n_seg
    cg = c // g
    g_cg = (np.arange(c)[:, None] // cg
            == np.arange(g)[None, :]).astype(np.float32)             # (c, g)
    r2 = np.arange(2 * rows)
    s2 = np.arange(2 * n_seg)
    p_sr = ((((r2[None, :] % rows) // seg) == (s2[:, None] % n_seg))
            & ((r2[None, :] // rows) == (s2[:, None] // n_seg))
            ).astype(np.float32)                                     # (2s, 2r)
    return (g_cg, np.ascontiguousarray(g_cg.T),
            p_sr, np.ascontiguousarray(p_sr.T))


def build_param_pack(params):
    """Call-invariant: packed ONCE.  Weights + hoisted GN/bilinear constants."""
    p = {k: np.asarray(v, np.float32) for k, v in params.items()}
    blocks = {
        "w_img": p["w_img"], "b_img": p["b_img"],
        "w1t": np.concatenate([p["w1"], p["wt"]], axis=0),
        "b1t": p["b1"] + p["bt"],
        "w2": p["w2"], "b2": p["b2"],
        "w_out": np.pad(p["w_out"], ((0, 0), (0, FDIM - p["w_out"].shape[1]))),
        "b_out": np.pad(p["b_out"], ((0, 0), (0, FDIM - p["b_out"].shape[1]))),
    }
    (blocks["gfd_ccg"], blocks["gfd_gc"],
     blocks["gfd_sr"], blocks["gfd_rs"]) = _gn_consts_np(R, B, FDIM, NGROUPS)
    (blocks["gim_ccg"], blocks["gim_gc"],
     blocks["gim_sr"], blocks["gim_rs"]) = _gn_consts_np(
        2 * R, 2 * B, CSUM // 2, NGROUPS // 2)

    batch = np.repeat(np.arange(B), N).astype(np.float32)            # (R,)
    bilin = np.zeros((2 * R, 8), np.float32)
    bilin[:R, 0], bilin[R:, 0] = float(W0), float(W1)
    bilin[:R, 1], bilin[R:, 1] = float(H0), float(H1)
    bilin[:R, 2] = batch * HW0                      # level-0 pixel-row base
    bilin[R:, 2] = B * HW0 + batch * HW1            # level-1 pixel-row base
    blocks["bilin"] = bilin

    pack = np.zeros((PROWS, PCOLS), np.float32)
    for name, rows, cols in _PLAYOUT:
        a = blocks[name]
        assert a.shape == (rows, cols), (name, a.shape, (rows, cols))
        off = _PSLICE[name][0]
        pack[off:off + rows, :cols] = a
    return jnp.asarray(pack)


def _pack_call_data(geometry, t, k_normalized, features, params):
    """Per-call data pack (single DMA): wide geometry, folded proj+xyz RHS,
    replicated t, and the batch-flattened feature pyramid."""
    f32 = jnp.float32
    g = geometry.astype(f32)                                         # (B, N, 3)
    musig = jnp.asarray(params["musig"], f32)
    mu3, sg3 = musig[0, :RDIM], musig[1, :RDIM]
    w_xyz = jnp.asarray(params["w_xyz"], f32)                        # (3, FDIM)
    b_xyz = jnp.asarray(params["b_xyz"], f32)                        # (1, FDIM)

    data = jnp.zeros((DATA_ROWS, DCOLS), f32)

    # wide geometry: batch b's raw xyz in lane block b, plus a 1-lane that
    # picks up the folded affine rows of the RHS.
    gw = jnp.zeros((B, N, DCOLS), f32)
    for b in range(B):
        gw = gw.at[b, :, b * WBLK:b * WBLK + RDIM].set(g[b])
        gw = gw.at[b, :, b * WBLK + RDIM].set(1.0)
    data = data.at[GEOMW_OFF:GEOMW_OFF + R, :].set(gw.reshape(R, DCOLS))

    # block-diagonal RHS: cols 0:32  -> diag(sigma) @ K^T  (+ mu @ K^T row)
    #                     cols 32:64 -> w_xyz              (+ b_xyz row)
    # so  geom_wide @ rhs  ==  [ (geom*sigma+mu) @ K^T  |  geom @ w_xyz + b_xyz ]
    kt = jnp.swapaxes(k_normalized.astype(f32), 1, 2)                # (B, 3, 3)
    kt_s = sg3[:, None] * kt
    mu_kt = jnp.einsum("c,bcj->bj", mu3, kt)                         # (B, 3)
    rhs = jnp.zeros((B * WBLK, DCOLS), f32)
    for b in range(B):
        r0 = b * WBLK
        rhs = rhs.at[r0:r0 + RDIM, 0:RDIM].set(kt_s[b])
        rhs = rhs.at[r0 + RDIM, 0:RDIM].set(mu_kt[b])
        rhs = rhs.at[r0:r0 + RDIM, XYZ_COL:XYZ_COL + FDIM].set(w_xyz)
        rhs = rhs.at[r0 + RDIM, XYZ_COL:XYZ_COL + FDIM].set(b_xyz[0])
    data = data.at[RHS_OFF:RHS_OFF + B * WBLK, :].set(rhs)

    # time features replicated per point (drops the in-kernel broadcast matmul)
    data = data.at[T_OFF:T_OFF + R, :TDIM].set(
        jnp.repeat(t.astype(f32), N, axis=0))

    # feature pyramid: pixels x channels, level-major then batch-major (NHWC)
    off = FEAT_OFF
    for f, (h, w) in zip(features, FEAT_SHAPES):
        bb, c, fh, fw = f.shape
        assert (fh, fw) == (h, w) and bb == B and c == FCOLS
        flat = jnp.transpose(f.astype(f32), (0, 2, 3, 1)).reshape(bb * fh * fw, c)
        data = data.at[off:off + bb * fh * fw, :c].set(flat)
        off += bb * fh * fw
    return data


@jax.jit
def ray_network_forward(geometry, t, k_normalized, features, params, param_pack):
    """Forward pass of RayNetwork.  Returns (output, out_cache=None)."""
    data = _pack_call_data(geometry, t, k_normalized, features, params)

    out = pl.pallas_call(
        _ray_network_kernel,
        grid=(1,),
        in_specs=[
            pl.BlockSpec((DATA_ROWS, DCOLS), lambda i: (0, 0)),
            pl.BlockSpec((PROWS, PCOLS), lambda i: (0, 0)),
        ],
        out_specs=pl.BlockSpec((R, FDIM), lambda i: (0, 0)),
        out_shape=jax.ShapeDtypeStruct((R, FDIM), jnp.float32),
        compiler_params=pltpu.CompilerParams(
            dimension_semantics=("arbitrary",)),
    )(data, param_pack)

    return out[:, :RDIM].reshape(B, N, RDIM), None


def _init_params(key):
    """Deterministic parameters; Linear init matches nn.Linear (U[-1/sqrt(fan_in)])."""
    def lin(k, din, dout):
        kw, kb = jax.random.split(k)
        s = 1.0 / float(din) ** 0.5
        w = jax.random.uniform(kw, (din, dout), jnp.float32, -s, s)
        b = jax.random.uniform(kb, (1, dout), jnp.float32, -s, s)
        return w, b

    ks = jax.random.split(key, 6)
    w_xyz, b_xyz = lin(ks[0], RDIM, FDIM)
    w_img, b_img = lin(ks[1], CSUM, FDIM)
    w1, b1 = lin(ks[2], FDIM, FDIM)
    wt, bt = lin(ks[3], TDIM, FDIM)
    w2, b2 = lin(ks[4], FDIM, FDIM)
    w_out, b_out = lin(ks[5], FDIM, RDIM)
    # Gaussian reparam: mean/sigma chosen so camera-space z stays positive.
    musig = jnp.array([[0.0, 0.0, 2.5],
                       [0.5, 0.5, 0.5]], jnp.float32)
    return dict(musig=musig,
                w_xyz=w_xyz, b_xyz=b_xyz,
                w_img=w_img, b_img=b_img,
                w1=w1, b1=b1, wt=wt, bt=bt, w2=w2, b2=b2,
                w_out=w_out, b_out=b_out)


if __name__ == "__main__":
    key = jax.random.PRNGKey(0)
    k_geom, k_t, k_f0, k_f1, k_par = jax.random.split(key, 5)

    geometry = jax.random.normal(k_geom, (B, N, RDIM), jnp.float32)
    t = jax.random.normal(k_t, (B, TDIM), jnp.float32)
    # normalized pinhole intrinsics (projected coords land roughly in [0, 1])
    k_norm = jnp.tile(
        jnp.array([[0.8, 0.0, 0.5],
                   [0.0, 0.8, 0.5],
                   [0.0, 0.0, 1.0]], jnp.float32)[None], (B, 1, 1))
    features = [
        jax.random.normal(k_f0, (B, C0, H0, W0), jnp.float32),  # NCHW, like torch
        jax.random.normal(k_f1, (B, C1, H1, W1), jnp.float32),
    ]
    params = _init_params(k_par)

    # call-invariant packing hoisted out of the per-call path
    param_pack = build_param_pack(params)

    out, out_cache = ray_network_forward(geometry, t, k_norm, features,
                                         params, param_pack)
    out = jax.block_until_ready(out)
    assert out.shape == (B, N, RDIM) and out.dtype == jnp.float32
    assert bool(jnp.all(jnp.isfinite(out)))
    print("KERNEL_OK")
</pallas_src>

<mosaic_0001>
module attributes {stable_mosaic.version = 11 : i64} {
  func.func @_ray_network_kernel(%arg0: i32, %arg1: memref<256x64xf32, #tpu.memory_space<vmem>>, %arg2: memref<408x64xf32, #tpu.memory_space<vmem>>, %arg3: memref<16x32xf32, #tpu.memory_space<vmem>>) attributes {dimension_semantics = [#tpu.dimension_semantics<arbitrary>], iteration_bounds = array<i64: 1>, scalar_prefetch = 0 : i64, scratch_operands = 0 : i64, tpu.core_type = #tpu.core_type<tc>, window_params = [{pipeline_mode = #tpu.pipeline_mode<synchronous>, transform_indices = @transform_0, window_bounds = array<i64: 256, 64>}, {pipeline_mode = #tpu.pipeline_mode<synchronous>, transform_indices = @transform_1, window_bounds = array<i64: 408, 64>}, {pipeline_mode = #tpu.pipeline_mode<synchronous>, transform_indices = @transform_2, window_bounds = array<i64: 16, 32>}]} {
    %c0 = arith.constant 0 : index
    %c0_0 = arith.constant 0 : index
    %0 = vector.load %arg1[%c0, %c0_0] : memref<256x64xf32, #tpu.memory_space<vmem>>, vector<16x64xf32>
    %c16 = arith.constant 16 : index
    %c0_1 = arith.constant 0 : index
    %1 = vector.load %arg1[%c16, %c0_1] : memref<256x64xf32, #tpu.memory_space<vmem>>, vector<64x64xf32>
    %cst = arith.constant dense<0.000000e+00> : vector<16x64xf32>
    %2 = tpu.matmul %0, %1, %cst {dimension_numbers = #tpu.dot_dimension_numbers<[1], [0], [0], [1], [0, 0, 1, 1], [], []>} : vector<16x64xf32>, vector<64x64xf32>, vector<16x64xf32> -> vector<16x64xf32>
    %3 = vector.extract_strided_slice %2 {offsets = [0, 0], sizes = [16, 3], strides = [1, 1]} : vector<16x64xf32> to vector<16x3xf32>
    %4 = vector.extract_strided_slice %2 {offsets = [0, 32], sizes = [16, 32], strides = [1, 1]} : vector<16x64xf32> to vector<16x32xf32>
    %5 = vector.extract_strided_slice %3 {offsets = [0, 2], sizes = [16, 1], strides = [1, 1]} : vector<16x3xf32> to vector<16x1xf32>
    %6 = math.absf %5 : vector<16x1xf32>
    %cst_2 = arith.constant 9.99999993E-9 : f32
    %7 = vector.broadcast %cst_2 : f32 to vector<16x1xf32>
    %8 = arith.cmpf olt, %6, %7 : vector<16x1xf32>
    %cst_3 = arith.constant 9.99999993E-9 : f32
    %9 = vector.broadcast %cst_3 : f32 to vector<16x1xf32>
    %10 = arith.select %8, %9, %5 : vector<16x1xi1>, vector<16x1xf32>
    %11 = tpu.reciprocal %10 {approx = true} : vector<16x1xf32> -> vector<16x1xf32>
    %12 = vector.extract_strided_slice %3 {offsets = [0, 0], sizes = [16, 1], strides = [1, 1]} : vector<16x3xf32> to vector<16x1xf32>
    %13 = arith.mulf %12, %11 : vector<16x1xf32>
    %14 = vector.extract_strided_slice %3 {offsets = [0, 1], sizes = [16, 1], strides = [1, 1]} : vector<16x3xf32> to vector<16x1xf32>
    %15 = arith.mulf %14, %11 : vector<16x1xf32>
    %c376 = arith.constant 376 : index
    %c0_4 = arith.constant 0 : index
    %16 = vector.load %arg2[%c376, %c0_4] : memref<408x64xf32, #tpu.memory_space<vmem>>, vector<32x8xf32>
    %17 = vector.extract_strided_slice %16 {offsets = [0, 0], sizes = [32, 1], strides = [1, 1]} : vector<32x8xf32> to vector<32x1xf32>
    %18 = vector.extract_strided_slice %16 {offsets = [0, 1], sizes = [32, 1], strides = [1, 1]} : vector<32x8xf32> to vector<32x1xf32>
    %19 = vector.extract_strided_slice %16 {offsets = [0, 2], sizes = [32, 1], strides = [1, 1]} : vector<32x8xf32> to vector<32x1xf32>
    %20 = tpu.concatenate %13, %13 in 0 : vector<16x1xf32>, vector<16x1xf32> -> vector<32x1xf32>
    %21 = tpu.concatenate %15, %15 in 0 : vector<16x1xf32>, vector<16x1xf32> -> vector<32x1xf32>
    %22 = arith.mulf %20, %17 : vector<32x1xf32>
    %cst_5 = arith.constant 5.000000e-01 : f32
    %23 = vector.broadcast %cst_5 : f32 to vector<32x1xf32>
    %24 = arith.subf %22, %23 : vector<32x1xf32>
    %cst_6 = arith.constant -1.000000e+00 : f32
    %25 = vector.broadcast %cst_6 : f32 to vector<32x1xf32>
    %26 = arith.maximumf %25, %24 : vector<32x1xf32>
    %27 = arith.minimumf %17, %26 : vector<32x1xf32>
    %28 = arith.mulf %21, %18 : vector<32x1xf32>
    %cst_7 = arith.constant 5.000000e-01 : f32
    %29 = vector.broadcast %cst_7 : f32 to vector<32x1xf32>
    %30 = arith.subf %28, %29 : vector<32x1xf32>
    %cst_8 = arith.constant -1.000000e+00 : f32
    %31 = vector.broadcast %cst_8 : f32 to vector<32x1xf32>
    %32 = arith.maximumf %31, %30 : vector<32x1xf32>
    %33 = arith.minimumf %18, %32 : vector<32x1xf32>
    %34 = math.floor %27 : vector<32x1xf32>
    %35 = math.floor %33 : vector<32x1xf32>
    %36 = arith.subf %27, %34 : vector<32x1xf32>
    %37 = arith.subf %33, %35 : vector<32x1xf32>
    %38 = tpu.iota {dimensions = array<i32: 1>} : vector<32x160xi32>
    %cst_9 = arith.constant 0.000000e+00 : f32
    %39 = vector.broadcast %cst_9 : f32 to vector<32x160xf32>
    %cst_10 = arith.constant 1.000000e+00 : f32
    %40 = vector.broadcast %cst_10 : f32 to vector<32x1xf32>
    %41 = arith.subf %40, %37 : vector<32x1xf32>
    %cst_11 = arith.constant 1.000000e+00 : f32
    %42 = vector.broadcast %cst_11 : f32 to vector<32x1xf32>
    %43 = arith.subf %42, %36 : vector<32x1xf32>
    %cst_12 = arith.constant 0.000000e+00 : f32
    %44 = vector.broadcast %cst_12 : f32 to vector<32x1xf32>
    %45 = arith.addf %34, %44 : vector<32x1xf32>
    %cst_13 = arith.constant 0.000000e+00 : f32
    %46 = vector.broadcast %cst_13 : f32 to vector<32x1xf32>
    %47 = arith.addf %35, %46 : vector<32x1xf32>
    %cst_14 = arith.constant 0.000000e+00 : f32
    %48 = vector.broadcast %cst_14 : f32 to vector<32x1xf32>
    %49 = arith.cmpf oge, %45, %48 : vector<32x1xf32>
    %50 = arith.cmpf olt, %45, %17 : vector<32x1xf32>
    %51 = arith.andi %49, %50 : vector<32x1xi1>
    %cst_15 = arith.constant 0.000000e+00 : f32
    %52 = vector.broadcast %cst_15 : f32 to vector<32x1xf32>
    %53 = arith.cmpf oge, %47, %52 : vector<32x1xf32>
    %54 = arith.andi %51, %53 : vector<32x1xi1>
    %55 = arith.cmpf olt, %47, %18 : vector<32x1xf32>
    %56 = arith.andi %54, %55 : vector<32x1xi1>
    %57 = arith.extui %56 : vector<32x1xi1> to vector<32x1xi32>
    %58 = arith.sitofp %57 : vector<32x1xi32> to vector<32x1xf32>
    %cst_16 = arith.constant 1.000000e+00 : f32
    %59 = vector.broadcast %cst_16 : f32 to vector<32x1xf32>
    %60 = arith.subf %18, %59 : vector<32x1xf32>
    %cst_17 = arith.constant 0.000000e+00 : f32
    %61 = vector.broadcast %cst_17 : f32 to vector<32x1xf32>
    %62 = arith.maximumf %61, %47 : vector<32x1xf32>
    %63 = arith.minimumf %60, %62 : vector<32x1xf32>
    %64 = arith.mulf %63, %17 : vector<32x1xf32>
    %65 = arith.addf %19, %64 : vector<32x1xf32>
    %cst_18 = arith.constant 1.000000e+00 : f32
    %66 = vector.broadcast %cst_18 : f32 to vector<32x1xf32>
    %67 = arith.subf %17, %66 : vector<32x1xf32>
    %cst_19 = arith.constant 0.000000e+00 : f32
    %68 = vector.broadcast %cst_19 : f32 to vector<32x1xf32>
    %69 = arith.maximumf %68, %45 : vector<32x1xf32>
    %70 = arith.minimumf %67, %69 : vector<32x1xf32>
    %71 = arith.addf %65, %70 : vector<32x1xf32>
    %72 = arith.fptosi %71 : vector<32x1xf32> to vector<32x1xi32>
    %73 = vector.broadcast %72 : vector<32x1xi32> to vector<32x160xi32>
    %74 = arith.cmpi eq, %38, %73 : vector<32x160xi32>
    %75 = arith.extui %74 : vector<32x160xi1> to vector<32x160xi32>
    %76 = arith.sitofp %75 : vector<32x160xi32> to vector<32x160xf32>
    %77 = arith.mulf %41, %43 : vector<32x1xf32>
    %78 = arith.mulf %77, %58 : vector<32x1xf32>
    %79 = vector.broadcast %78 : vector<32x1xf32> to vector<32x160xf32>
    %80 = arith.mulf %76, %79 : vector<32x160xf32>
    %81 = arith.addf %39, %80 : vector<32x160xf32>
    %cst_20 = arith.constant 1.000000e+00 : f32
    %82 = vector.broadcast %cst_20 : f32 to vector<32x1xf32>
    %83 = arith.addf %34, %82 : vector<32x1xf32>
    %cst_21 = arith.constant 0.000000e+00 : f32
    %84 = vector.broadcast %cst_21 : f32 to vector<32x1xf32>
    %85 = arith.addf %35, %84 : vector<32x1xf32>
    %cst_22 = arith.constant 0.000000e+00 : f32
    %86 = vector.broadcast %cst_22 : f32 to vector<32x1xf32>
    %87 = arith.cmpf oge, %83, %86 : vector<32x1xf32>
    %88 = arith.cmpf olt, %83, %17 : vector<32x1xf32>
    %89 = arith.andi %87, %88 : vector<32x1xi1>
    %cst_23 = arith.constant 0.000000e+00 : f32
    %90 = vector.broadcast %cst_23 : f32 to vector<32x1xf32>
    %91 = arith.cmpf oge, %85, %90 : vector<32x1xf32>
    %92 = arith.andi %89, %91 : vector<32x1xi1>
    %93 = arith.cmpf olt, %85, %18 : vector<32x1xf32>
    %94 = arith.andi %92, %93 : vector<32x1xi1>
    %95 = arith.extui %94 : vector<32x1xi1> to vector<32x1xi32>
    %96 = arith.sitofp %95 : vector<32x1xi32> to vector<32x1xf32>
    %cst_24 = arith.constant 1.000000e+00 : f32
    %97 = vector.broadcast %cst_24 : f32 to vector<32x1xf32>
    %98 = arith.subf %18, %97 : vector<32x1xf32>
    %cst_25 = arith.constant 0.000000e+00 : f32
    %99 = vector.broadcast %cst_25 : f32 to vector<32x1xf32>
    %100 = arith.maximumf %99, %85 : vector<32x1xf32>
    %101 = arith.minimumf %98, %100 : vector<32x1xf32>
    %102 = arith.mulf %101, %17 : vector<32x1xf32>
    %103 = arith.addf %19, %102 : vector<32x1xf32>
    %cst_26 = arith.constant 1.000000e+00 : f32
    %104 = vector.broadcast %cst_26 : f32 to vector<32x1xf32>
    %105 = arith.subf %17, %104 : vector<32x1xf32>
    %cst_27 = arith.constant 0.000000e+00 : f32
    %106 = vector.broadcast %cst_27 : f32 to vector<32x1xf32>
    %107 = arith.maximumf %106, %83 : vector<32x1xf32>
    %108 = arith.minimumf %105, %107 : vector<32x1xf32>
    %109 = arith.addf %103, %108 : vector<32x1xf32>
    %110 = arith.fptosi %109 : vector<32x1xf32> to vector<32x1xi32>
    %111 = vector.broadcast %110 : vector<32x1xi32> to vector<32x160xi32>
    %112 = arith.cmpi eq, %38, %111 : vector<32x160xi32>
    %113 = arith.extui %112 : vector<32x160xi1> to vector<32x160xi32>
    %114 = arith.sitofp %113 : vector<32x160xi32> to vector<32x160xf32>
    %115 = arith.mulf %41, %36 : vector<32x1xf32>
    %116 = arith.mulf %115, %96 : vector<32x1xf32>
    %117 = vector.broadcast %116 : vector<32x1xf32> to vector<32x160xf32>
    %118 = arith.mulf %114, %117 : vector<32x160xf32>
    %119 = arith.addf %81, %118 : vector<32x160xf32>
    %cst_28 = arith.constant 1.000000e+00 : f32
    %120 = vector.broadcast %cst_28 : f32 to vector<32x1xf32>
    %121 = arith.subf %120, %36 : vector<32x1xf32>
    %cst_29 = arith.constant 0.000000e+00 : f32
    %122 = vector.broadcast %cst_29 : f32 to vector<32x1xf32>
    %123 = arith.addf %34, %122 : vector<32x1xf32>
    %cst_30 = arith.constant 1.000000e+00 : f32
    %124 = vector.broadcast %cst_30 : f32 to vector<32x1xf32>
    %125 = arith.addf %35, %124 : vector<32x1xf32>
    %cst_31 = arith.constant 0.000000e+00 : f32
    %126 = vector.broadcast %cst_31 : f32 to vector<32x1xf32>
    %127 = arith.cmpf oge, %123, %126 : vector<32x1xf32>
    %128 = arith.cmpf olt, %123, %17 : vector<32x1xf32>
    %129 = arith.andi %127, %128 : vector<32x1xi1>
    %cst_32 = arith.constant 0.000000e+00 : f32
    %130 = vector.broadcast %cst_32 : f32 to vector<32x1xf32>
    %131 = arith.cmpf oge, %125, %130 : vector<32x1xf32>
    %132 = arith.andi %129, %131 : vector<32x1xi1>
    %133 = arith.cmpf olt, %125, %18 : vector<32x1xf32>
    %134 = arith.andi %132, %133 : vector<32x1xi1>
    %135 = arith.extui %134 : vector<32x1xi1> to vector<32x1xi32>
    %136 = arith.sitofp %135 : vector<32x1xi32> to vector<32x1xf32>
    %cst_33 = arith.constant 1.000000e+00 : f32
    %137 = vector.broadcast %cst_33 : f32 to vector<32x1xf32>
    %138 = arith.subf %18, %137 : vector<32x1xf32>
    %cst_34 = arith.constant 0.000000e+00 : f32
    %139 = vector.broadcast %cst_34 : f32 to vector<32x1xf32>
    %140 = arith.maximumf %139, %125 : vector<32x1xf32>
    %141 = arith.minimumf %138, %140 : vector<32x1xf32>
    %142 = arith.mulf %141, %17 : vector<32x1xf32>
    %143 = arith.addf %19, %142 : vector<32x1xf32>
    %cst_35 = arith.constant 1.000000e+00 : f32
    %144 = vector.broadcast %cst_35 : f32 to vector<32x1xf32>
    %145 = arith.subf %17, %144 : vector<32x1xf32>
    %cst_36 = arith.constant 0.000000e+00 : f32
    %146 = vector.broadcast %cst_36 : f32 to vector<32x1xf32>
    %147 = arith.maximumf %146, %123 : vector<32x1xf32>
    %148 = arith.minimumf %145, %147 : vector<32x1xf32>
    %149 = arith.addf %143, %148 : vector<32x1xf32>
    %150 = arith.fptosi %149 : vector<32x1xf32> to vector<32x1xi32>
    %151 = vector.broadcast %150 : vector<32x1xi32> to vector<32x160xi32>
    %152 = arith.cmpi eq, %38, %151 : vector<32x160xi32>
    %153 = arith.extui %152 : vector<32x160xi1> to vector<32x160xi32>
    %154 = arith.sitofp %153 : vector<32x160xi32> to vector<32x160xf32>
    %155 = arith.mulf %37, %121 : vector<32x1xf32>
    %156 = arith.mulf %155, %136 : vector<32x1xf32>
    %157 = vector.broadcast %156 : vector<32x1xf32> to vector<32x160xf32>
    %158 = arith.mulf %154, %157 : vector<32x160xf32>
    %159 = arith.addf %119, %158 : vector<32x160xf32>
    %cst_37 = arith.constant 1.000000e+00 : f32
    %160 = vector.broadcast %cst_37 : f32 to vector<32x1xf32>
    %161 = arith.addf %34, %160 : vector<32x1xf32>
    %cst_38 = arith.constant 1.000000e+00 : f32
    %162 = vector.broadcast %cst_38 : f32 to vector<32x1xf32>
    %163 = arith.addf %35, %162 : vector<32x1xf32>
    %cst_39 = arith.constant 0.000000e+00 : f32
    %164 = vector.broadcast %cst_39 : f32 to vector<32x1xf32>
    %165 = arith.cmpf oge, %161, %164 : vector<32x1xf32>
    %166 = arith.cmpf olt, %161, %17 : vector<32x1xf32>
    %167 = arith.andi %165, %166 : vector<32x1xi1>
    %cst_40 = arith.constant 0.000000e+00 : f32
    %168 = vector.broadcast %cst_40 : f32 to vector<32x1xf32>
    %169 = arith.cmpf oge, %163, %168 : vector<32x1xf32>
    %170 = arith.andi %167, %169 : vector<32x1xi1>
    %171 = arith.cmpf olt, %163, %18 : vector<32x1xf32>
    %172 = arith.andi %170, %171 : vector<32x1xi1>
    %173 = arith.extui %172 : vector<32x1xi1> to vector<32x1xi32>
    %174 = arith.sitofp %173 : vector<32x1xi32> to vector<32x1xf32>
    %cst_41 = arith.constant 1.000000e+00 : f32
    %175 = vector.broadcast %cst_41 : f32 to vector<32x1xf32>
    %176 = arith.subf %18, %175 : vector<32x1xf32>
    %cst_42 = arith.constant 0.000000e+00 : f32
    %177 = vector.broadcast %cst_42 : f32 to vector<32x1xf32>
    %178 = arith.maximumf %177, %163 : vector<32x1xf32>
    %179 = arith.minimumf %176, %178 : vector<32x1xf32>
    %180 = arith.mulf %179, %17 : vector<32x1xf32>
    %181 = arith.addf %19, %180 : vector<32x1xf32>
    %cst_43 = arith.constant 1.000000e+00 : f32
    %182 = vector.broadcast %cst_43 : f32 to vector<32x1xf32>
    %183 = arith.subf %17, %182 : vector<32x1xf32>
    %cst_44 = arith.constant 0.000000e+00 : f32
    %184 = vector.broadcast %cst_44 : f32 to vector<32x1xf32>
    %185 = arith.maximumf %184, %161 : vector<32x1xf32>
    %186 = arith.minimumf %183, %185 : vector<32x1xf32>
    %187 = arith.addf %181, %186 : vector<32x1xf32>
    %188 = arith.fptosi %187 : vector<32x1xf32> to vector<32x1xi32>
    %189 = vector.broadcast %188 : vector<32x1xi32> to vector<32x160xi32>
    %190 = arith.cmpi eq, %38, %189 : vector<32x160xi32>
    %191 = arith.extui %190 : vector<32x160xi1> to vector<32x160xi32>
    %192 = arith.sitofp %191 : vector<32x160xi32> to vector<32x160xf32>
    %193 = arith.mulf %37, %36 : vector<32x1xf32>
    %194 = arith.mulf %193, %174 : vector<32x1xf32>
    %195 = vector.broadcast %194 : vector<32x1xf32> to vector<32x160xf32>
    %196 = arith.mulf %192, %195 : vector<32x160xf32>
    %197 = arith.addf %159, %196 : vector<32x160xf32>
    %c96 = arith.constant 96 : index
    %c0_45 = arith.constant 0 : index
    %198 = vector.load %arg1[%c96, %c0_45] : memref<256x64xf32, #tpu.memory_space<vmem>>, vector<160x16xf32>
    %199 = arith.truncf %197 : vector<32x160xf32> to vector<32x160xbf16>
    %200 = arith.truncf %198 : vector<160x16xf32> to vector<160x16xbf16>
    %cst_46 = arith.constant dense<0.000000e+00> : vector<32x16xf32>
    %201 = tpu.matmul %199, %200, %cst_46 {dimension_numbers = #tpu.dot_dimension_numbers<[1], [0], [0], [1], [0, 0, 1, 1], [], []>} : vector<32x160xbf16>, vector<160x16xbf16>, vector<32x16xf32> -> vector<32x16xf32>
    %c280 = arith.constant 280 : index
    %c0_47 = arith.constant 0 : index
    %202 = vector.load %arg2[%c280, %c0_47] : memref<408x64xf32, #tpu.memory_space<vmem>>, vector<16x8xf32>
    %c296 = arith.constant 296 : index
    %c0_48 = arith.constant 0 : index
    %203 = vector.load %arg2[%c296, %c0_48] : memref<408x64xf32, #tpu.memory_space<vmem>>, vector<8x16xf32>
    %c304 = arith.constant 304 : index
    %c0_49 = arith.constant 0 : index
    %204 = vector.load %arg2[%c304, %c0_49] : memref<408x64xf32, #tpu.memory_space<vmem>>, vector<8x64xf32>
    %c312 = arith.constant 312 : index
    %c0_50 = arith.constant 0 : index
    %205 = vector.load %arg2[%c312, %c0_50] : memref<408x64xf32, #tpu.memory_space<vmem>>, vector<64x8xf32>
    %206 = arith.mulf %201, %201 : vector<32x16xf32>
    %207 = tpu.concatenate %201, %206 in 0 : vector<32x16xf32>, vector<32x16xf32> -> vector<64x16xf32>
    %cst_51 = arith.constant dense<0.000000e+00> : vector<64x8xf32>
    %208 = tpu.matmul %207, %202, %cst_51 {dimension_numbers = #tpu.dot_dimension_numbers<[1], [0], [0], [1], [0, 0, 1, 1], [], []>} : vector<64x16xf32>, vector<16x8xf32>, vector<64x8xf32> -> vector<64x8xf32>
    %cst_52 = arith.constant dense<0.000000e+00> : vector<8x8xf32>
    %209 = tpu.matmul %204, %208, %cst_52 {dimension_numbers = #tpu.dot_dimension_numbers<[1], [0], [0], [1], [0, 0, 1, 1], [], []>} : vector<8x64xf32>, vector<64x8xf32>, vector<8x8xf32> -> vector<8x8xf32>
    %cst_53 = arith.constant 6.250000e-02 : f32
    %210 = vector.broadcast %cst_53 : f32 to vector<8x8xf32>
    %211 = arith.mulf %209, %210 : vector<8x8xf32>
    %212 = vector.extract_strided_slice %211 {offsets = [0, 0], sizes = [4, 8], strides = [1, 1]} : vector<8x8xf32> to vector<4x8xf32>
    %213 = vector.extract_strided_slice %211 {offsets = [4, 0], sizes = [4, 8], strides = [1, 1]} : vector<8x8xf32> to vector<4x8xf32>
    %214 = arith.mulf %212, %212 : vector<4x8xf32>
    %215 = arith.subf %213, %214 : vector<4x8xf32>
    %cst_54 = arith.constant 0.000000e+00 : f32
    %216 = vector.broadcast %cst_54 : f32 to vector<4x8xf32>
    %217 = arith.maximumf %215, %216 : vector<4x8xf32>
    %cst_55 = arith.constant 9.99999974E-6 : f32
    %218 = vector.broadcast %cst_55 : f32 to vector<4x8xf32>
    %219 = arith.addf %217, %218 : vector<4x8xf32>
    %220 = math.rsqrt %219 : vector<4x8xf32>
    %cst_56 = arith.constant 0.000000e+00 : f32
    %221 = vector.broadcast %cst_56 : f32 to vector<4x8xf32>
    %222 = arith.subf %221, %212 : vector<4x8xf32>
    %223 = arith.mulf %222, %220 : vector<4x8xf32>
    %224 = tpu.concatenate %220, %223 in 0 : vector<4x8xf32>, vector<4x8xf32> -> vector<8x8xf32>
    %cst_57 = arith.constant dense<0.000000e+00> : vector<8x16xf32>
    %225 = tpu.matmul %224, %203, %cst_57 {dimension_numbers = #tpu.dot_dimension_numbers<[1], [0], [0], [1], [0, 0, 1, 1], [], []>} : vector<8x8xf32>, vector<8x16xf32>, vector<8x16xf32> -> vector<8x16xf32>
    %cst_58 = arith.constant dense<0.000000e+00> : vector<64x16xf32>
    %226 = tpu.matmul %205, %225, %cst_58 {dimension_numbers = #tpu.dot_dimension_numbers<[1], [0], [0], [1], [0, 0, 1, 1], [], []>} : vector<64x8xf32>, vector<8x16xf32>, vector<64x16xf32> -> vector<64x16xf32>
    %227 = vector.extract_strided_slice %226 {offsets = [0, 0], sizes = [32, 16], strides = [1, 1]} : vector<64x16xf32> to vector<32x16xf32>
    %228 = arith.mulf %201, %227 : vector<32x16xf32>
    %229 = vector.extract_strided_slice %226 {offsets = [32, 0], sizes = [32, 16], strides = [1, 1]} : vector<64x16xf32> to vector<32x16xf32>
    %230 = arith.addf %228, %229 : vector<32x16xf32>
    %231 = vector.extract_strided_slice %230 {offsets = [0, 0], sizes = [16, 16], strides = [1, 1]} : vector<32x16xf32> to vector<16x16xf32>
    %232 = vector.extract_strided_slice %230 {offsets = [16, 0], sizes = [16, 16], strides = [1, 1]} : vector<32x16xf32> to vector<16x16xf32>
    %233 = tpu.concatenate %231, %232 in 1 : vector<16x16xf32>, vector<16x16xf32> -> vector<16x32xf32>
    %234 = arith.truncf %233 : vector<16x32xf32> to vector<16x32xbf16>
    %c0_59 = arith.constant 0 : index
    %c0_60 = arith.constant 0 : index
    %235 = vector.load %arg2[%c0_59, %c0_60] : memref<408x64xf32, #tpu.memory_space<vmem>>, vector<32x32xf32>
    %236 = arith.truncf %235 : vector<32x32xf32> to vector<32x32xbf16>
    %cst_61 = arith.constant dense<0.000000e+00> : vector<16x32xf32>
    %237 = tpu.matmul %234, %236, %cst_61 {dimension_numbers = #tpu.dot_dimension_numbers<[1], [0], [0], [1], [0, 0, 1, 1], [], []>} : vector<16x32xbf16>, vector<32x32xbf16>, vector<16x32xf32> -> vector<16x32xf32>
    %c32 = arith.constant 32 : index
    %c0_62 = arith.constant 0 : index
    %238 = vector.load %arg2[%c32, %c0_62] : memref<408x64xf32, #tpu.memory_space<vmem>>, vector<1x32xf32>
    %239 = vector.broadcast %238 : vector<1x32xf32> to vector<16x32xf32>
    %240 = arith.addf %237, %239 : vector<16x32xf32>
    %241 = arith.addf %4, %240 : vector<16x32xf32>
    %c80 = arith.constant 80 : index
    %c0_63 = arith.constant 0 : index
    %242 = vector.load %arg1[%c80, %c0_63] : memref<256x64xf32, #tpu.memory_space<vmem>>, vector<16x32xf32>
    %c192 = arith.constant 192 : index
    %c0_64 = arith.constant 0 : index
    %243 = vector.load %arg2[%c192, %c0_64] : memref<408x64xf32, #tpu.memory_space<vmem>>, vector<32x16xf32>
    %c224 = arith.constant 224 : index
    %c0_65 = arith.constant 0 : index
    %244 = vector.load %arg2[%c224, %c0_65] : memref<408x64xf32, #tpu.memory_space<vmem>>, vector<16x32xf32>
    %c240 = arith.constant 240 : index
    %c0_66 = arith.constant 0 : index
    %245 = vector.load %arg2[%c240, %c0_66] : memref<408x64xf32, #tpu.memory_space<vmem>>, vector<4x32xf32>
    %c248 = arith.constant 248 : index
    %c0_67 = arith.constant 0 : index
    %246 = vector.load %arg2[%c248, %c0_67] : memref<408x64xf32, #tpu.memory_space<vmem>>, vector<32x4xf32>
    %247 = arith.mulf %241, %241 : vector<16x32xf32>
    %248 = tpu.concatenate %241, %247 in 0 : vector<16x32xf32>, vector<16x32xf32> -> vector<32x32xf32>
    %cst_68 = arith.constant dense<0.000000e+00> : vector<32x16xf32>
    %249 = tpu.matmul %248, %243, %cst_68 {dimension_numbers = #tpu.dot_dimension_numbers<[1], [0], [0], [1], [0, 0, 1, 1], [], []>} : vector<32x32xf32>, vector<32x16xf32>, vector<32x16xf32> -> vector<32x16xf32>
    %cst_69 = arith.constant dense<0.000000e+00> : vector<4x16xf32>
    %250 = tpu.matmul %245, %249, %cst_69 {dimension_numbers = #tpu.dot_dimension_numbers<[1], [0], [0], [1], [0, 0, 1, 1], [], []>} : vector<4x32xf32>, vector<32x16xf32>, vector<4x16xf32> -> vector<4x16xf32>
    %cst_70 = arith.constant 6.250000e-02 : f32
    %251 = vector.broadcast %cst_70 : f32 to vector<4x16xf32>
    %252 = arith.mulf %250, %251 : vector<4x16xf32>
    %253 = vector.extract_strided_slice %252 {offsets = [0, 0], sizes = [2, 16], strides = [1, 1]} : vector<4x16xf32> to vector<2x16xf32>
    %254 = vector.extract_strided_slice %252 {offsets = [2, 0], sizes = [2, 16], strides = [1, 1]} : vector<4x16xf32> to vector<2x16xf32>
    %255 = arith.mulf %253, %253 : vector<2x16xf32>
    %256 = arith.subf %254, %255 : vector<2x16xf32>
    %cst_71 = arith.constant 0.000000e+00 : f32
    %257 = vector.broadcast %cst_71 : f32 to vector<2x16xf32>
    %258 = arith.maximumf %256, %257 : vector<2x16xf32>
    %cst_72 = arith.constant 9.99999974E-6 : f32
    %259 = vector.broadcast %cst_72 : f32 to vector<2x16xf32>
    %260 = arith.addf %258, %259 : vector<2x16xf32>
    %261 = math.rsqrt %260 : vector<2x16xf32>
    %cst_73 = arith.constant 0.000000e+00 : f32
    %262 = vector.broadcast %cst_73 : f32 to vector<2x16xf32>
    %263 = arith.subf %262, %253 : vector<2x16xf32>
    %264 = arith.mulf %263, %261 : vector<2x16xf32>
    %265 = tpu.concatenate %261, %264 in 0 : vector<2x16xf32>, vector<2x16xf32> -> vector<4x16xf32>
    %cst_74 = arith.constant dense<0.000000e+00> : vector<4x32xf32>
    %266 = tpu.matmul %265, %244, %cst_74 {dimension_numbers = #tpu.dot_dimension_numbers<[1], [0], [0], [1], [0, 0, 1, 1], [], []>} : vector<4x16xf32>, vector<16x32xf32>, vector<4x32xf32> -> vector<4x32xf32>
    %cst_75 = arith.constant dense<0.000000e+00> : vector<32x32xf32>
    %267 = tpu.matmul %246, %266, %cst_75 {dimension_numbers = #tpu.dot_dimension_numbers<[1], [0], [0], [1], [0, 0, 1, 1], [], []>} : vector<32x4xf32>, vector<4x32xf32>, vector<32x32xf32> -> vector<32x32xf32>
    %268 = vector.extract_strided_slice %267 {offsets = [0, 0], sizes = [16, 32], strides = [1, 1]} : vector<32x32xf32> to vector<16x32xf32>
    %269 = arith.mulf %241, %268 : vector<16x32xf32>
    %270 = vector.extract_strided_slice %267 {offsets = [16, 0], sizes = [16, 32], strides = [1, 1]} : vector<32x32xf32> to vector<16x32xf32>
    %271 = arith.addf %269, %270 : vector<16x32xf32>
    %272 = tpu.concatenate %271, %242 in 1 : vector<16x32xf32>, vector<16x32xf32> -> vector<16x64xf32>
    %273 = arith.truncf %272 : vector<16x64xf32> to vector<16x64xbf16>
    %c40 = arith.constant 40 : index
    %c0_76 = arith.constant 0 : index
    %274 = vector.load %arg2[%c40, %c0_76] : memref<408x64xf32, #tpu.memory_space<vmem>>, vector<64x32xf32>
    %275 = arith.truncf %274 : vector<64x32xf32> to vector<64x32xbf16>
    %cst_77 = arith.constant dense<0.000000e+00> : vector<16x32xf32>
    %276 = tpu.matmul %273, %275, %cst_77 {dimension_numbers = #tpu.dot_dimension_numbers<[1], [0], [0], [1], [0, 0, 1, 1], [], []>} : vector<16x64xbf16>, vector<64x32xbf16>, vector<16x32xf32> -> vector<16x32xf32>
    %c104 = arith.constant 104 : index
    %c0_78 = arith.constant 0 : index
    %277 = vector.load %arg2[%c104, %c0_78] : memref<408x64xf32, #tpu.memory_space<vmem>>, vector<1x32xf32>
    %278 = vector.broadcast %277 : vector<1x32xf32> to vector<16x32xf32>
    %279 = arith.addf %276, %278 : vector<16x32xf32>
    %280 = arith.mulf %279, %279 : vector<16x32xf32>
    %281 = arith.mulf %279, %280 : vector<16x32xf32>
    %cst_79 = arith.constant 4.471500e-02 : f32
    %282 = vector.broadcast %cst_79 : f32 to vector<16x32xf32>
    %283 = arith.mulf %282, %281 : vector<16x32xf32>
    %284 = arith.addf %279, %283 : vector<16x32xf32>
    %cst_80 = arith.constant 0.797884583 : f32
    %285 = vector.broadcast %cst_80 : f32 to vector<16x32xf32>
    %286 = arith.mulf %285, %284 : vector<16x32xf32>
    %287 = math.tanh %286 : vector<16x32xf32>
    %cst_81 = arith.constant 1.000000e+00 : f32
    %288 = vector.broadcast %cst_81 : f32 to vector<16x32xf32>
    %289 = arith.addf %288, %287 : vector<16x32xf32>
    %cst_82 = arith.constant 5.000000e-01 : f32
    %290 = vector.broadcast %cst_82 : f32 to vector<16x32xf32>
    %291 = arith.mulf %290, %289 : vector<16x32xf32>
    %292 = arith.mulf %279, %291 : vector<16x32xf32>
    %293 = arith.truncf %292 : vector<16x32xf32> to vector<16x32xbf16>
    %c112 = arith.constant 112 : index
    %c0_83 = arith.constant 0 : index
    %294 = vector.load %arg2[%c112, %c0_83] : memref<408x64xf32, #tpu.memory_space<vmem>>, vector<32x32xf32>
    %295 = arith.truncf %294 : vector<32x32xf32> to vector<32x32xbf16>
    %cst_84 = arith.constant dense<0.000000e+00> : vector<16x32xf32>
    %296 = tpu.matmul %293, %295, %cst_84 {dimension_numbers = #tpu.dot_dimension_numbers<[1], [0], [0], [1], [0, 0, 1, 1], [], []>} : vector<16x32xbf16>, vector<32x32xbf16>, vector<16x32xf32> -> vector<16x32xf32>
    %297 = arith.addf %241, %296 : vector<16x32xf32>
    %c144 = arith.constant 144 : index
    %c0_85 = arith.constant 0 : index
    %298 = vector.load %arg2[%c144, %c0_85] : memref<408x64xf32, #tpu.memory_space<vmem>>, vector<1x32xf32>
    %299 = vector.broadcast %298 : vector<1x32xf32> to vector<16x32xf32>
    %300 = arith.addf %297, %299 : vector<16x32xf32>
    %c192_86 = arith.constant 192 : index
    %c0_87 = arith.constant 0 : index
    %301 = vector.load %arg2[%c192_86, %c0_87] : memref<408x64xf32, #tpu.memory_space<vmem>>, vector<32x16xf32>
    %c224_88 = arith.constant 224 : index
    %c0_89 = arith.constant 0 : index
    %302 = vector.load %arg2[%c224_88, %c0_89] : memref<408x64xf32, #tpu.memory_space<vmem>>, vector<16x32xf32>
    %c240_90 = arith.constant 240 : index
    %c0_91 = arith.constant 0 : index
    %303 = vector.load %arg2[%c240_90, %c0_91] : memref<408x64xf32, #tpu.memory_space<vmem>>, vector<4x32xf32>
    %c248_92 = arith.constant 248 : index
    %c0_93 = arith.constant 0 : index
    %304 = vector.load %arg2[%c248_92, %c0_93] : memref<408x64xf32, #tpu.memory_space<vmem>>, vector<32x4xf32>
    %305 = arith.mulf %300, %300 : vector<16x32xf32>
    %306 = tpu.concatenate %300, %305 in 0 : vector<16x32xf32>, vector<16x32xf32> -> vector<32x32xf32>
    %cst_94 = arith.constant dense<0.000000e+00> : vector<32x16xf32>
    %307 = tpu.matmul %306, %301, %cst_94 {dimension_numbers = #tpu.dot_dimension_numbers<[1], [0], [0], [1], [0, 0, 1, 1], [], []>} : vector<32x32xf32>, vector<32x16xf32>, vector<32x16xf32> -> vector<32x16xf32>
    %cst_95 = arith.constant dense<0.000000e+00> : vector<4x16xf32>
    %308 = tpu.matmul %303, %307, %cst_95 {dimension_numbers = #tpu.dot_dimension_numbers<[1], [0], [0], [1], [0, 0, 1, 1], [], []>} : vector<4x32xf32>, vector<32x16xf32>, vector<4x16xf32> -> vector<4x16xf32>
    %cst_96 = arith.constant 6.250000e-02 : f32
    %309 = vector.broadcast %cst_96 : f32 to vector<4x16xf32>
    %310 = arith.mulf %308, %309 : vector<4x16xf32>
    %311 = vector.extract_strided_slice %310 {offsets = [0, 0], sizes = [2, 16], strides = [1, 1]} : vector<4x16xf32> to vector<2x16xf32>
    %312 = vector.extract_strided_slice %310 {offsets = [2, 0], sizes = [2, 16], strides = [1, 1]} : vector<4x16xf32> to vector<2x16xf32>
    %313 = arith.mulf %311, %311 : vector<2x16xf32>
    %314 = arith.subf %312, %313 : vector<2x16xf32>
    %cst_97 = arith.constant 0.000000e+00 : f32
    %315 = vector.broadcast %cst_97 : f32 to vector<2x16xf32>
    %316 = arith.maximumf %314, %315 : vector<2x16xf32>
    %cst_98 = arith.constant 9.99999974E-6 : f32
    %317 = vector.broadcast %cst_98 : f32 to vector<2x16xf32>
    %318 = arith.addf %316, %317 : vector<2x16xf32>
    %319 = math.rsqrt %318 : vector<2x16xf32>
    %cst_99 = arith.constant 0.000000e+00 : f32
    %320 = vector.broadcast %cst_99 : f32 to vector<2x16xf32>
    %321 = arith.subf %320, %311 : vector<2x16xf32>
    %322 = arith.mulf %321, %319 : vector<2x16xf32>
    %323 = tpu.concatenate %319, %322 in 0 : vector<2x16xf32>, vector<2x16xf32> -> vector<4x16xf32>
    %cst_100 = arith.constant dense<0.000000e+00> : vector<4x32xf32>
    %324 = tpu.matmul %323, %302, %cst_100 {dimension_numbers = #tpu.dot_dimension_numbers<[1], [0], [0], [1], [0, 0, 1, 1], [], []>} : vector<4x16xf32>, vector<16x32xf32>, vector<4x32xf32> -> vector<4x32xf32>
    %cst_101 = arith.constant dense<0.000000e+00> : vector<32x32xf32>
    %325 = tpu.matmul %304, %324, %cst_101 {dimension_numbers = #tpu.dot_dimension_numbers<[1], [0], [0], [1], [0, 0, 1, 1], [], []>} : vector<32x4xf32>, vector<4x32xf32>, vector<32x32xf32> -> vector<32x32xf32>
    %326 = vector.extract_strided_slice %325 {offsets = [0, 0], sizes = [16, 32], strides = [1, 1]} : vector<32x32xf32> to vector<16x32xf32>
    %327 = arith.mulf %300, %326 : vector<16x32xf32>
    %328 = vector.extract_strided_slice %325 {offsets = [16, 0], sizes = [16, 32], strides = [1, 1]} : vector<32x32xf32> to vector<16x32xf32>
    %329 = arith.addf %327, %328 : vector<16x32xf32>
    %330 = arith.truncf %329 : vector<16x32xf32> to vector<16x32xbf16>
    %c152 = arith.constant 152 : index
    %c0_102 = arith.constant 0 : index
    %331 = vector.load %arg2[%c152, %c0_102] : memref<408x64xf32, #tpu.memory_space<vmem>>, vector<32x32xf32>
    %332 = arith.truncf %331 : vector<32x32xf32> to vector<32x32xbf16>
    %cst_103 = arith.constant dense<0.000000e+00> : vector<16x32xf32>
    %333 = tpu.matmul %330, %332, %cst_103 {dimension_numbers = #tpu.dot_dimension_numbers<[1], [0], [0], [1], [0, 0, 1, 1], [], []>} : vector<16x32xbf16>, vector<32x32xbf16>, vector<16x32xf32> -> vector<16x32xf32>
    %c184 = arith.constant 184 : index
    %c0_104 = arith.constant 0 : index
    %334 = vector.load %arg2[%c184, %c0_104] : memref<408x64xf32, #tpu.memory_space<vmem>>, vector<1x32xf32>
    %335 = vector.broadcast %334 : vector<1x32xf32> to vector<16x32xf32>
    %336 = arith.addf %333, %335 : vector<16x32xf32>
    %c0_105 = arith.constant 0 : index
    %c0_106 = arith.constant 0 : index
    %337 = vector.load %arg3[%c0_105, %c0_106] : memref<16x32xf32, #tpu.memory_space<vmem>>, vector<16x32xf32>
    tpu.vector_store %arg3[%c0_105, %c0_106], %336 {strides = array<i32>} : memref<16x32xf32, #tpu.memory_space<vmem>>, vector<16x32xf32>,
    return
  }
  func.func @transform_0(%arg0: i32) -> (i32, i32) {
    %c0_i32 = arith.constant 0 : i32
    %c0_i32_0 = arith.constant 0 : i32
    %c0_i32_1 = arith.constant 0 : i32
    return %c0_i32, %c0_i32_0 : i32, i32
  }
  func.func @transform_1(%arg0: i32) -> (i32, i32) {
    %c0_i32 = arith.constant 0 : i32
    %c0_i32_0 = arith.constant 0 : i32
    %c0_i32_1 = arith.constant 0 : i32
    return %c0_i32, %c0_i32_0 : i32, i32
  }
  func.func @transform_2(%arg0: i32) -> (i32, i32) {
    %c0_i32 = arith.constant 0 : i32
    %c0_i32_0 = arith.constant 0 : i32
    %c0_i32_1 = arith.constant 0 : i32
    return %c0_i32, %c0_i32_0 : i32, i32
  }
}

</mosaic_0001>

<llo_original>
// kernel: ray_network_forward.1
$region0: #{ray_network_forward.1}
  #allocation0 [shape = 'u32[]', space=smem, size = 0x4, offset = 0x4, fixed_abs, tag = 'smem constant byte address 0x4 - core index']
  #allocation1 [shape = 'u32[144,128]{1,0:T(1,128)}', space=vmem, size = 0x12000, scoped, tag = 'internal scratch']
  %s0 = inlined_call_operand.vmem [shape: f32[256,64], index: 0, kind: input, shape index: {}]
  %s1 = inlined_call_operand.vmem [shape: f32[408,64], index: 1, kind: input, shape index: {}]
  %s2 = inlined_call_operand.vmem [shape: f32[16,32], index: 2, kind: output, shape index: {}]
  %s3 = sld [smem:[#allocation0]]
  $region18: #{ray_network_forward.1} parent=0
    _
  %s5 = ssub.s32 1, %s3
  %s6 = scalar_select 0, %s5, %s3
  // Predicated region
  $region2: #{ray_network_forward.1} parent=0 // pred_check
    _
  $region3: #{ray_network_forward.1} parent=0 // pred_check_branch
    %8 = sbr.rel (0) target = $region5
  $region4: #{ray_network_forward.1} parent=0 // pred_region
    _
  $region5: #{ray_network_forward.1} parent=0 // pred_fallthru
    _
  // Predicated region
  $region6: #{ray_network_forward.1} parent=0 // pred_check
    _
  $region7: #{ray_network_forward.1} parent=0 // pred_check_branch
    %10 = sbr.rel (0) target = $region9
  $region8: #{ray_network_forward.1} parent=0 // pred_region
    _
  $region9: #{ray_network_forward.1} parent=0 // pred_fallthru
    _
  %v12 = vld [vmem:[%s0] sm:$0xff]
  %v13 = vld [vmem:[%s0 + $0x8] sm:$0xff]
  %v14 = vld [vmem:[%s0 + $0x10] sm:$0xff]
  %v15 = vld [vmem:[%s0 + $0x18] sm:$0xff]
  %v16 = vld [vmem:[%s0 + $0x20] sm:$0xff]
  %v17 = vld [vmem:[%s0 + $0x28] sm:$0xff]
  %v18 = vld [vmem:[%s0 + $0x30] sm:$0xff]
  %v19 = vld [vmem:[%s0 + $0x38] sm:$0xff]
  %v20 = vld [vmem:[%s0 + $0x40] sm:$0xff]
  %v21 = vld [vmem:[%s0 + $0x48] sm:$0xff]
  %vm22 = vcmask 523264
  %v24 = vsel %vm22, %v12, 0
  %v27 = vsel %vm22, %v13, 0
  %29 = vmatprep.subr.mxu0 0.0
  %30 = vmatpush1.msra.mxu0 %v14
  %31 = vmatprep.subr.mxu0 0.0
  %32 = vmatpush1.msra.mxu0 %v15
  %33 = vmatprep.subr.mxu0 0.0
  %34 = vmatpush1.msra.mxu0 %v16
  %35 = vmatprep.subr.mxu0 0.0
  %36 = vmatpush1.msra.mxu0 %v17
  %37 = vmatprep.subr.mxu0 0.0
  %38 = vmatpush1.msra.mxu0 %v18
  %39 = vmatprep.subr.mxu0 0.0
  %40 = vmatpush1.msra.mxu0 %v19
  %41 = vmatprep.subr.mxu0 0.0
  %42 = vmatpush1.msra.mxu0 %v20
  %43 = vmatprep.subr.mxu0 0.0
  %44 = vmatpush1.msra.mxu0 %v21
  %45 = vmatprep.subr.mxu0 0.0
  %46 = vmatpush1.msra.mxu0 0.0
  %47 = vmatprep.subr.mxu0 0.0
  %48 = vmatpush1.msra.mxu0 0.0
  %49 = vmatprep.subr.mxu0 0.0
  %50 = vmatpush1.msra.mxu0 0.0
  %51 = vmatprep.subr.mxu0 0.0
  %52 = vmatpush1.msra.mxu0 0.0
  %53 = vmatprep.subr.mxu0 0.0
  %54 = vmatpush1.msra.mxu0 0.0
  %55 = vmatprep.subr.mxu0 0.0
  %56 = vmatpush1.msra.mxu0 0.0
  %57 = vmatprep.subr.mxu0 0.0
  %58 = vmatpush1.msra.mxu0 0.0
  %59 = vmatprep.subr.mxu0 0.0
  %60 = vmatpush1.msra.mxu0 0.0
  %61 = vmatprep.subr.mxu0 0.0
  %62 = vmatpush1.msra.mxu0 0.0
  %63 = vmatprep.subr.mxu0 0.0
  %64 = vmatpush1.msra.mxu0 0.0
  %65 = vmatprep.subr.mxu0 0.0
  %66 = vmatpush1.msra.mxu0 0.0
  %67 = vmatprep.subr.mxu0 0.0
  %68 = vmatpush1.msra.mxu0 0.0
  %69 = vmatprep.subr.mxu0 0.0
  %70 = vmatpush1.msra.mxu0 0.0
  %71 = vmatprep.subr.mxu0 0.0
  %72 = vmatpush1.msra.mxu0 0.0
  %73 = vmatprep.subr.mxu0 0.0
  %74 = vmatpush1.msra.mxu0 0.0
  %75 = vmatprep.subr.mxu0 0.0
  %76 = vmatpush1.msra.mxu0 0.0
  %77 = vmatprep.subr.mxu0 0.0
  %78 = vmatpush1.msra.mxu0 0.0
  %79 = vmatprep.subr.mxu0 0.0
  %80 = vmatpush1.msra.mxu0 0.0
  %81 = vmatprep.subr.mxu0 0.0
  %82 = vmatpush1.msra.mxu0 0.0
  %83 = vmatprep.subr.mxu0 0.0
  %84 = vmatpush1.msra.mxu0 0.0
  %85 = vmatprep.subr.mxu0 0.0
  %86 = vmatpush1.msra.mxu0 0.0
  %87 = vmatprep.subr.mxu0 0.0
  %88 = vmatpush1.msra.mxu0 0.0
  %89 = vmatprep.subr.mxu0 0.0
  %90 = vmatpush1.msra.mxu0 0.0
  %91 = vmatprep.subr.mxu0 0.0
  %92 = vmatpush1.msra.mxu0 0.0
  %93 = vmatprep.mubr.f32.mxu0 0.0
  %94 = vmatmul.mubr.f32.gmra.mrb[0].mxu0 %v24
  %v95 = vpop.f32.mrb[0].mxu0
  %v96 = vadd.f32 0.0, %v95
  %v97 = vpop.f32.mrb[0].mxu0
  %98 = vmatprep.mubr.f32.mxu0 0.0
  %99 = vmatmul.mubr.f32.gmra.mrb[0].mxu0 %v27
  %v100 = vpop.f32.mrb[0].mxu0
  %v101 = vadd.f32 0.0, %v100
  %v102 = vpop.f32.mrb[0].mxu0
  %103 = vdwg.mxu0
  %v104 = vand.u32 2147483647, %v96
  %v105 = vand.u32 2147483647, %v101
  %vm106 = vcmp.lt.f32.partialorder %v104, 1e-08
  %vm107 = vcmp.lt.f32.partialorder %v105, 1e-08
  %v108 = vsel %vm106, 1e-08, %v96
  %v109 = vsel %vm107, 1e-08, %v101
  %v110 = vrcp.pop %v108
  %v111 = vrcp.pop %v109
  %114 = vrot.lane.b32.xlu0 %v110, 126
  %v115 = vpop.permute.xlu0 %114
  %116 = vrot.lane.b32.xlu0 %v111, 126
  %v117 = vpop.permute.xlu0 %116
  %v120 = vmul.f32 %v96, %v115
  %v121 = vmul.f32 %v101, %v117
  %122 = vrot.lane.b32.xlu0 %v110, 127
  %v123 = vpop.permute.xlu0 %122
  %124 = vrot.lane.b32.xlu0 %v111, 127
  %v125 = vpop.permute.xlu0 %124
  %v128 = vmul.f32 %v96, %v123
  %v129 = vmul.f32 %v101, %v125
  %v130 = vld [vmem:[%s1 + $0x178] sm:$0xff]
  %v131 = vld [vmem:[%s1 + $0x180] sm:$0xff]
  %v132 = vld [vmem:[%s1 + $0x188] sm:$0xff]
  %v133 = vld [vmem:[%s1 + $0x190] sm:$0xff]
  %v134 = vmul.f32 %v120, %v130
  %v135 = vmul.f32 %v121, %v131
  %v136 = vmul.f32 %v120, %v132
  %v137 = vmul.f32 %v121, %v133
  %v138 = vsub.f32 %v134, 0.5
  %v139 = vsub.f32 %v135, 0.5
  %v140 = vsub.f32 %v136, 0.5
  %v141 = vsub.f32 %v137, 0.5
  %v142 = vmax.f32 %v138, -1.0
  %v143 = vmax.f32 %v139, -1.0
  %v144 = vmax.f32 %v140, -1.0
  %v145 = vmax.f32 %v141, -1.0
  %v146 = vmin.f32 %v130, %v142
  %v147 = vmin.f32 %v131, %v143
  %v148 = vmin.f32 %v132, %v144
  %v149 = vmin.f32 %v133, %v145
  %v150 = vmul.f32 %v128, %v130
  %v151 = vmul.f32 %v129, %v131
  %v152 = vmul.f32 %v128, %v132
  %v153 = vmul.f32 %v129, %v133
  %v154 = vsub.f32 %v150, 0.5
  %v155 = vsub.f32 %v151, 0.5
  %v156 = vsub.f32 %v152, 0.5
  %v157 = vsub.f32 %v153, 0.5
  %v158 = vmax.f32 %v154, -1.0
  %v159 = vmax.f32 %v155, -1.0
  %v160 = vmax.f32 %v156, -1.0
  %v161 = vmax.f32 %v157, -1.0
  %v162 = vmin.f32 %v130, %v158
  %v163 = vmin.f32 %v131, %v159
  %v164 = vmin.f32 %v132, %v160
  %v165 = vmin.f32 %v133, %v161
  %v166 = vfloor.f32 %v146
  %v167 = vfloor.f32 %v147
  %v168 = vfloor.f32 %v148
  %v169 = vfloor.f32 %v149
  %v170 = vfloor.f32 %v162
  %v171 = vfloor.f32 %v163
  %v172 = vfloor.f32 %v164
  %v173 = vfloor.f32 %v165
  %v174 = vsub.f32 %v146, %v166
  %v175 = vsub.f32 %v147, %v167
  %v176 = vsub.f32 %v148, %v168
  %v177 = vsub.f32 %v149, %v169
  %v178 = vsub.f32 %v162, %v170
  %v179 = vsub.f32 %v163, %v171
  %v180 = vsub.f32 %v164, %v172
  %v181 = vsub.f32 %v165, %v173
  %v182 = vlaneseq
  %v183 = vand.u32 %v182, 127
  %v184 = vadd.s32 %v183, 128
  %v185 = vsub.f32 1.0, %v178
  %v186 = vsub.f32 1.0, %v179
  %v187 = vsub.f32 1.0, %v180
  %v188 = vsub.f32 1.0, %v181
  %v189 = vsub.f32 1.0, %v174
  %v190 = vsub.f32 1.0, %v175
  %v191 = vsub.f32 1.0, %v176
  %v192 = vsub.f32 1.0, %v177
  %v193 = vadd.f32 %v166, 0.0
  %v194 = vadd.f32 %v167, 0.0
  %v195 = vadd.f32 %v168, 0.0
  %v196 = vadd.f32 %v169, 0.0
  %v197 = vadd.f32 %v170, 0.0
  %v198 = vadd.f32 %v171, 0.0
  %v199 = vadd.f32 %v172, 0.0
  %v200 = vadd.f32 %v173, 0.0
  %vm201 = vcmp.ge.f32.partialorder %v193, 0.0
  %vm202 = vcmp.ge.f32.partialorder %v194, 0.0
  %vm203 = vcmp.ge.f32.partialorder %v195, 0.0
  %vm204 = vcmp.ge.f32.partialorder %v196, 0.0
  %vm205 = vcmp.lt.f32.partialorder %v193, %v130
  %vm206 = vcmp.lt.f32.partialorder %v194, %v131
  %vm207 = vcmp.lt.f32.partialorder %v195, %v132
  %vm208 = vcmp.lt.f32.partialorder %v196, %v133
  %vm209 = vmand %vm201, %vm205
  %vm210 = vmand %vm202, %vm206
  %vm211 = vmand %vm203, %vm207
  %vm212 = vmand %vm204, %vm208
  %vm213 = vcmp.ge.f32.partialorder %v197, 0.0
  %vm214 = vcmp.ge.f32.partialorder %v198, 0.0
  %vm215 = vcmp.ge.f32.partialorder %v199, 0.0
  %vm216 = vcmp.ge.f32.partialorder %v200, 0.0
  %v217 = vsel %vm213, 1, 0
  %v218 = vsel %vm214, 1, 0
  %v219 = vsel %vm215, 1, 0
  %v220 = vsel %vm216, 1, 0
  %221 = vrot.lane.b32.xlu0 %v217, 127
  %v222 = vpop.permute.xlu0 %221
  %223 = vrot.lane.b32.xlu0 %v218, 127
  %v224 = vpop.permute.xlu0 %223
  %225 = vrot.lane.b32.xlu0 %v219, 127
  %v226 = vpop.permute.xlu0 %225
  %227 = vrot.lane.b32.xlu0 %v220, 127
  %v228 = vpop.permute.xlu0 %227
  %vm229 = vcmp.ne.s32.totalorder %v222, 0
  %vm230 = vcmp.ne.s32.totalorder %v224, 0
  %vm231 = vcmp.ne.s32.totalorder %v226, 0
  %vm232 = vcmp.ne.s32.totalorder %v228, 0
  %vm233 = vmand %vm209, %vm229
  %vm234 = vmand %vm210, %vm230
  %vm235 = vmand %vm211, %vm231
  %vm236 = vmand %vm212, %vm232
  %vm237 = vcmp.lt.f32.partialorder %v197, %v130
  %vm238 = vcmp.lt.f32.partialorder %v198, %v131
  %vm239 = vcmp.lt.f32.partialorder %v199, %v132
  %vm240 = vcmp.lt.f32.partialorder %v200, %v133
  %v241 = vsel %vm237, 1, 0
  %v242 = vsel %vm238, 1, 0
  %v243 = vsel %vm239, 1, 0
  %v244 = vsel %vm240, 1, 0
  %245 = vrot.lane.b32.xlu0 %v241, 127
  %v246 = vpop.permute.xlu0 %245
  %247 = vrot.lane.b32.xlu0 %v242, 127
  %v248 = vpop.permute.xlu0 %247
  %249 = vrot.lane.b32.xlu0 %v243, 127
  %v250 = vpop.permute.xlu0 %249
  %251 = vrot.lane.b32.xlu0 %v244, 127
  %v252 = vpop.permute.xlu0 %251
  %vm253 = vcmp.ne.s32.totalorder %v246, 0
  %vm254 = vcmp.ne.s32.totalorder %v248, 0
  %vm255 = vcmp.ne.s32.totalorder %v250, 0
  %vm256 = vcmp.ne.s32.totalorder %v252, 0
  %vm257 = vmand %vm233, %vm253
  %vm258 = vmand %vm234, %vm254
  %vm259 = vmand %vm235, %vm255
  %vm260 = vmand %vm236, %vm256
  %v261 = vsel %vm257, 1, 0
  %v262 = vsel %vm258, 1, 0
  %v263 = vsel %vm259, 1, 0
  %v264 = vsel %vm260, 1, 0
  %v265 = vcvt.s32.f32 %v261
  %v266 = vcvt.s32.f32 %v262
  %v267 = vcvt.s32.f32 %v263
  %v268 = vcvt.s32.f32 %v264
  %v269 = vsub.f32 %v130, 1.0
  %v270 = vsub.f32 %v131, 1.0
  %v271 = vsub.f32 %v132, 1.0
  %v272 = vsub.f32 %v133, 1.0
  %v273 = vmax.f32 %v197, 0.0
  %v274 = vmax.f32 %v198, 0.0
  %v275 = vmax.f32 %v199, 0.0
  %v276 = vmax.f32 %v200, 0.0
  %v277 = vmin.f32 %v269, %v273
  %v278 = vmin.f32 %v270, %v274
  %v279 = vmin.f32 %v271, %v275
  %v280 = vmin.f32 %v272, %v276
  %285 = vrot.lane.b32.xlu0 %v130, 1
  %v286 = vpop.permute.xlu0 %285
  %287 = vrot.lane.b32.xlu0 %v131, 1
  %v288 = vpop.permute.xlu0 %287
  %289 = vrot.lane.b32.xlu0 %v132, 1
  %v290 = vpop.permute.xlu0 %289
  %291 = vrot.lane.b32.xlu0 %v133, 1
  %v292 = vpop.permute.xlu0 %291
  %v297 = vmul.f32 %v277, %v286
  %v298 = vmul.f32 %v278, %v288
  %v299 = vmul.f32 %v279, %v290
  %v300 = vmul.f32 %v280, %v292
  %305 = vrot.lane.b32.xlu0 %v297, 1
  %v306 = vpop.permute.xlu0 %305
  %307 = vrot.lane.b32.xlu0 %v298, 1
  %v308 = vpop.permute.xlu0 %307
  %309 = vrot.lane.b32.xlu0 %v299, 1
  %v310 = vpop.permute.xlu0 %309
  %311 = vrot.lane.b32.xlu0 %v300, 1
  %v312 = vpop.permute.xlu0 %311
  %v317 = vadd.f32 %v130, %v306
  %v318 = vadd.f32 %v131, %v308
  %v319 = vadd.f32 %v132, %v310
  %v320 = vadd.f32 %v133, %v312
  %v321 = vmax.f32 %v193, 0.0
  %v322 = vmax.f32 %v194, 0.0
  %v323 = vmax.f32 %v195, 0.0
  %v324 = vmax.f32 %v196, 0.0
  %v325 = vmin.f32 %v269, %v321
  %v326 = vmin.f32 %v270, %v322
  %v327 = vmin.f32 %v271, %v323
  %v328 = vmin.f32 %v272, %v324
  %333 = vrot.lane.b32.xlu0 %v325, 2
  %v334 = vpop.permute.xlu0 %333
  %335 = vrot.lane.b32.xlu0 %v326, 2
  %v336 = vpop.permute.xlu0 %335
  %337 = vrot.lane.b32.xlu0 %v327, 2
  %v338 = vpop.permute.xlu0 %337
  %339 = vrot.lane.b32.xlu0 %v328, 2
  %v340 = vpop.permute.xlu0 %339
  %v345 = vadd.f32 %v317, %v334
  %v346 = vadd.f32 %v318, %v336
  %v347 = vadd.f32 %v319, %v338
  %v348 = vadd.f32 %v320, %v340
  %v349 = vcvt.f32.s32.to.zero.pseudo %v345
  %v350 = vcvt.f32.s32.to.zero.pseudo %v346
  %v351 = vcvt.f32.s32.to.zero.pseudo %v347
  %v352 = vcvt.f32.s32.to.zero.pseudo %v348
  %353 = vset.pattern.permute.xlu0 2
  %354 = vperm.xlu0 %353, %v349
  %v355 = vpop.permute.xlu0 %354
  %356 = vset.pattern.permute.xlu0 2
  %357 = vperm.xlu0 %356, %v350
  %v358 = vpop.permute.xlu0 %357
  %359 = vset.pattern.permute.xlu0 2
  %360 = vperm.xlu0 %359, %v351
  %v361 = vpop.permute.xlu0 %360
  %362 = vset.pattern.permute.xlu0 2
  %363 = vperm.xlu0 %362, %v352
  %v364 = vpop.permute.xlu0 %363
  %vm365 = vcmp.eq.s32.totalorder %v183, %v355
  %vm366 = vcmp.eq.s32.totalorder %v184, %v355
  %vm367 = vcmp.eq.s32.totalorder %v183, %v358
  %vm368 = vcmp.eq.s32.totalorder %v184, %v358
  %vm369 = vcmp.eq.s32.totalorder %v183, %v361
  %vm370 = vcmp.eq.s32.totalorder %v184, %v361
  %vm371 = vcmp.eq.s32.totalorder %v183, %v364
  %vm372 = vcmp.eq.s32.totalorder %v184, %v364
  %v373 = vsel %vm365, 1, 0
  %v374 = vsel %vm366, 1, 0
  %v375 = vsel %vm367, 1, 0
  %v376 = vsel %vm368, 1, 0
  %v377 = vsel %vm369, 1, 0
  %v378 = vsel %vm370, 1, 0
  %v379 = vsel %vm371, 1, 0
  %v380 = vsel %vm372, 1, 0
  %v381 = vcvt.s32.f32 %v373
  %v382 = vcvt.s32.f32 %v374
  %v383 = vcvt.s32.f32 %v375
  %v384 = vcvt.s32.f32 %v376
  %v385 = vcvt.s32.f32 %v377
  %v386 = vcvt.s32.f32 %v378
  %v387 = vcvt.s32.f32 %v379
  %v388 = vcvt.s32.f32 %v380
  %393 = vrot.lane.b32.xlu0 %v189, 1
  %v394 = vpop.permute.xlu0 %393
  %395 = vrot.lane.b32.xlu0 %v190, 1
  %v396 = vpop.permute.xlu0 %395
  %397 = vrot.lane.b32.xlu0 %v191, 1
  %v398 = vpop.permute.xlu0 %397
  %399 = vrot.lane.b32.xlu0 %v192, 1
  %v400 = vpop.permute.xlu0 %399
  %v405 = vmul.f32 %v185, %v394
  %v406 = vmul.f32 %v186, %v396
  %v407 = vmul.f32 %v187, %v398
  %v408 = vmul.f32 %v188, %v400
  %413 = vrot.lane.b32.xlu0 %v265, 1
  %v414 = vpop.permute.xlu0 %413
  %415 = vrot.lane.b32.xlu0 %v266, 1
  %v416 = vpop.permute.xlu0 %415
  %417 = vrot.lane.b32.xlu0 %v267, 1
  %v418 = vpop.permute.xlu0 %417
  %419 = vrot.lane.b32.xlu0 %v268, 1
  %v420 = vpop.permute.xlu0 %419
  %v425 = vmul.f32 %v405, %v414
  %v426 = vmul.f32 %v406, %v416
  %v427 = vmul.f32 %v407, %v418
  %v428 = vmul.f32 %v408, %v420
  %430 = vset.pattern.permute.xlu0 1
  %431 = vperm.xlu0 %430, %v425
  %v432 = vpop.permute.xlu0 %431
  %435 = vset.pattern.permute.xlu0 1
  %436 = vperm.xlu0 %435, %v426
  %v437 = vpop.permute.xlu0 %436
  %440 = vset.pattern.permute.xlu0 1
  %441 = vperm.xlu0 %440, %v427
  %v442 = vpop.permute.xlu0 %441
  %445 = vset.pattern.permute.xlu0 1
  %446 = vperm.xlu0 %445, %v428
  %v447 = vpop.permute.xlu0 %446
  %v449 = vmul.f32 %v381, %v432
  %v450 = vmul.f32 %v382, %v432
  %v451 = vmul.f32 %v383, %v437
  %v452 = vmul.f32 %v384, %v437
  %v453 = vmul.f32 %v385, %v442
  %v454 = vmul.f32 %v386, %v442
  %v455 = vmul.f32 %v387, %v447
  %v456 = vmul.f32 %v388, %v447
  %v457 = vadd.f32 %v449, 0.0
  %v458 = vadd.f32 %v450, 0.0
  %v459 = vadd.f32 %v451, 0.0
  %v460 = vadd.f32 %v452, 0.0
  %v461 = vadd.f32 %v453, 0.0
  %v462 = vadd.f32 %v454, 0.0
  %v463 = vadd.f32 %v455, 0.0
  %v464 = vadd.f32 %v456, 0.0
  %v465 = vadd.f32 %v166, 1.0
  %v466 = vadd.f32 %v167, 1.0
  %v467 = vadd.f32 %v168, 1.0
  %v468 = vadd.f32 %v169, 1.0
  %vm469 = vcmp.ge.f32.partialorder %v465, 0.0
  %vm470 = vcmp.ge.f32.partialorder %v466, 0.0
  %vm471 = vcmp.ge.f32.partialorder %v467, 0.0
  %vm472 = vcmp.ge.f32.partialorder %v468, 0.0
  %vm473 = vcmp.lt.f32.partialorder %v465, %v130
  %vm474 = vcmp.lt.f32.partialorder %v466, %v131
  %vm475 = vcmp.lt.f32.partialorder %v467, %v132
  %vm476 = vcmp.lt.f32.partialorder %v468, %v133
  %vm477 = vmand %vm469, %vm473
  %vm478 = vmand %vm470, %vm474
  %vm479 = vmand %vm471, %vm475
  %vm480 = vmand %vm472, %vm476
  %vm481 = vmand %vm477, %vm229
  %vm482 = vmand %vm478, %vm230
  %vm483 = vmand %vm479, %vm231
  %vm484 = vmand %vm480, %vm232
  %vm485 = vmand %vm481, %vm253
  %vm486 = vmand %vm482, %vm254
  %vm487 = vmand %vm483, %vm255
  %vm488 = vmand %vm484, %vm256
  %v489 = vsel %vm485, 1, 0
  %v490 = vsel %vm486, 1, 0
  %v491 = vsel %vm487, 1, 0
  %v492 = vsel %vm488, 1, 0
  %v493 = vcvt.s32.f32 %v489
  %v494 = vcvt.s32.f32 %v490
  %v495 = vcvt.s32.f32 %v491
  %v496 = vcvt.s32.f32 %v492
  %v497 = vmax.f32 %v465, 0.0
  %v498 = vmax.f32 %v466, 0.0
  %v499 = vmax.f32 %v467, 0.0
  %v500 = vmax.f32 %v468, 0.0
  %v501 = vmin.f32 %v269, %v497
  %v502 = vmin.f32 %v270, %v498
  %v503 = vmin.f32 %v271, %v499
  %v504 = vmin.f32 %v272, %v500
  %509 = vrot.lane.b32.xlu0 %v501, 2
  %v510 = vpop.permute.xlu0 %509
  %511 = vrot.lane.b32.xlu0 %v502, 2
  %v512 = vpop.permute.xlu0 %511
  %513 = vrot.lane.b32.xlu0 %v503, 2
  %v514 = vpop.permute.xlu0 %513
  %515 = vrot.lane.b32.xlu0 %v504, 2
  %v516 = vpop.permute.xlu0 %515
  %v521 = vadd.f32 %v317, %v510
  %v522 = vadd.f32 %v318, %v512
  %v523 = vadd.f32 %v319, %v514
  %v524 = vadd.f32 %v320, %v516
  %v525 = vcvt.f32.s32.to.zero.pseudo %v521
  %v526 = vcvt.f32.s32.to.zero.pseudo %v522
  %v527 = vcvt.f32.s32.to.zero.pseudo %v523
  %v528 = vcvt.f32.s32.to.zero.pseudo %v524
  %529 = vset.pattern.permute.xlu0 2
  %530 = vperm.xlu0 %529, %v525
  %v531 = vpop.permute.xlu0 %530
  %532 = vset.pattern.permute.xlu0 2
  %533 = vperm.xlu0 %532, %v526
  %v534 = vpop.permute.xlu0 %533
  %535 = vset.pattern.permute.xlu0 2
  %536 = vperm.xlu0 %535, %v527
  %v537 = vpop.permute.xlu0 %536
  %538 = vset.pattern.permute.xlu0 2
  %539 = vperm.xlu0 %538, %v528
  %v540 = vpop.permute.xlu0 %539
  %vm541 = vcmp.eq.s32.totalorder %v183, %v531
  %vm542 = vcmp.eq.s32.totalorder %v184, %v531
  %vm543 = vcmp.eq.s32.totalorder %v183, %v534
  %vm544 = vcmp.eq.s32.totalorder %v184, %v534
  %vm545 = vcmp.eq.s32.totalorder %v183, %v537
  %vm546 = vcmp.eq.s32.totalorder %v184, %v537
  %vm547 = vcmp.eq.s32.totalorder %v183, %v540
  %vm548 = vcmp.eq.s32.totalorder %v184, %v540
  %v549 = vsel %vm541, 1, 0
  %v550 = vsel %vm542, 1, 0
  %v551 = vsel %vm543, 1, 0
  %v552 = vsel %vm544, 1, 0
  %v553 = vsel %vm545, 1, 0
  %v554 = vsel %vm546, 1, 0
  %v555 = vsel %vm547, 1, 0
  %v556 = vsel %vm548, 1, 0
  %v557 = vcvt.s32.f32 %v549
  %v558 = vcvt.s32.f32 %v550
  %v559 = vcvt.s32.f32 %v551
  %v560 = vcvt.s32.f32 %v552
  %v561 = vcvt.s32.f32 %v553
  %v562 = vcvt.s32.f32 %v554
  %v563 = vcvt.s32.f32 %v555
  %v564 = vcvt.s32.f32 %v556
  %569 = vrot.lane.b32.xlu0 %v174, 1
  %v570 = vpop.permute.xlu0 %569
  %571 = vrot.lane.b32.xlu0 %v175, 1
  %v572 = vpop.permute.xlu0 %571
  %573 = vrot.lane.b32.xlu0 %v176, 1
  %v574 = vpop.permute.xlu0 %573
  %575 = vrot.lane.b32.xlu0 %v177, 1
  %v576 = vpop.permute.xlu0 %575
  %v581 = vmul.f32 %v185, %v570
  %v582 = vmul.f32 %v186, %v572
  %v583 = vmul.f32 %v187, %v574
  %v584 = vmul.f32 %v188, %v576
  %589 = vrot.lane.b32.xlu0 %v493, 1
  %v590 = vpop.permute.xlu0 %589
  %591 = vrot.lane.b32.xlu0 %v494, 1
  %v592 = vpop.permute.xlu0 %591
  %593 = vrot.lane.b32.xlu0 %v495, 1
  %v594 = vpop.permute.xlu0 %593
  %595 = vrot.lane.b32.xlu0 %v496, 1
  %v596 = vpop.permute.xlu0 %595
  %v601 = vmul.f32 %v581, %v590
  %v602 = vmul.f32 %v582, %v592
  %v603 = vmul.f32 %v583, %v594
  %v604 = vmul.f32 %v584, %v596
  %606 = vset.pattern.permute.xlu0 1
  %607 = vperm.xlu0 %606, %v601
  %v608 = vpop.permute.xlu0 %607
  %611 = vset.pattern.permute.xlu0 1
  %612 = vperm.xlu0 %611, %v602
  %v613 = vpop.permute.xlu0 %612
  %616 = vset.pattern.permute.xlu0 1
  %617 = vperm.xlu0 %616, %v603
  %v618 = vpop.permute.xlu0 %617
  %621 = vset.pattern.permute.xlu0 1
  %622 = vperm.xlu0 %621, %v604
  %v623 = vpop.permute.xlu0 %622
  %v625 = vmul.f32 %v557, %v608
  %v626 = vmul.f32 %v558, %v608
  %v627 = vmul.f32 %v559, %v613
  %v628 = vmul.f32 %v560, %v613
  %v629 = vmul.f32 %v561, %v618
  %v630 = vmul.f32 %v562, %v618
  %v631 = vmul.f32 %v563, %v623
  %v632 = vmul.f32 %v564, %v623
  %v633 = vadd.f32 %v457, %v625
  %v634 = vadd.f32 %v458, %v626
  %v635 = vadd.f32 %v459, %v627
  %v636 = vadd.f32 %v460, %v628
  %v637 = vadd.f32 %v461, %v629
  %v638 = vadd.f32 %v462, %v630
  %v639 = vadd.f32 %v463, %v631
  %v640 = vadd.f32 %v464, %v632
  %v641 = vadd.f32 %v170, 1.0
  %v642 = vadd.f32 %v171, 1.0
  %v643 = vadd.f32 %v172, 1.0
  %v644 = vadd.f32 %v173, 1.0
  %vm645 = vcmp.ge.f32.partialorder %v641, 0.0
  %vm646 = vcmp.ge.f32.partialorder %v642, 0.0
  %vm647 = vcmp.ge.f32.partialorder %v643, 0.0
  %vm648 = vcmp.ge.f32.partialorder %v644, 0.0
  %v649 = vsel %vm645, 1, 0
  %v650 = vsel %vm646, 1, 0
  %v651 = vsel %vm647, 1, 0
  %v652 = vsel %vm648, 1, 0
  %653 = vrot.lane.b32.xlu0 %v649, 127
  %v654 = vpop.permute.xlu0 %653
  %655 = vrot.lane.b32.xlu0 %v650, 127
  %v656 = vpop.permute.xlu0 %655
  %657 = vrot.lane.b32.xlu0 %v651, 127
  %v658 = vpop.permute.xlu0 %657
  %659 = vrot.lane.b32.xlu0 %v652, 127
  %v660 = vpop.permute.xlu0 %659
  %vm661 = vcmp.ne.s32.totalorder %v654, 0
  %vm662 = vcmp.ne.s32.totalorder %v656, 0
  %vm663 = vcmp.ne.s32.totalorder %v658, 0
  %vm664 = vcmp.ne.s32.totalorder %v660, 0
  %vm665 = vmand %vm209, %vm661
  %vm666 = vmand %vm210, %vm662
  %vm667 = vmand %vm211, %vm663
  %vm668 = vmand %vm212, %vm664
  %vm669 = vcmp.lt.f32.partialorder %v641, %v130
  %vm670 = vcmp.lt.f32.partialorder %v642, %v131
  %vm671 = vcmp.lt.f32.partialorder %v643, %v132
  %vm672 = vcmp.lt.f32.partialorder %v644, %v133
  %v673 = vsel %vm669, 1, 0
  %v674 = vsel %vm670, 1, 0
  %v675 = vsel %vm671, 1, 0
  %v676 = vsel %vm672, 1, 0
  %677 = vrot.lane.b32.xlu0 %v673, 127
  %v678 = vpop.permute.xlu0 %677
  %679 = vrot.lane.b32.xlu0 %v674, 127
  %v680 = vpop.permute.xlu0 %679
  %681 = vrot.lane.b32.xlu0 %v675, 127
  %v682 = vpop.permute.xlu0 %681
  %683 = vrot.lane.b32.xlu0 %v676, 127
  %v684 = vpop.permute.xlu0 %683
  %vm685 = vcmp.ne.s32.totalorder %v678, 0
  %vm686 = vcmp.ne.s32.totalorder %v680, 0
  %vm687 = vcmp.ne.s32.totalorder %v682, 0
  %vm688 = vcmp.ne.s32.totalorder %v684, 0
  %vm689 = vmand %vm665, %vm685
  %vm690 = vmand %vm666, %vm686
  %vm691 = vmand %vm667, %vm687
  %vm692 = vmand %vm668, %vm688
  %v693 = vsel %vm689, 1, 0
  %v694 = vsel %vm690, 1, 0
  %v695 = vsel %vm691, 1, 0
  %v696 = vsel %vm692, 1, 0
  %v697 = vcvt.s32.f32 %v693
  %v698 = vcvt.s32.f32 %v694
  %v699 = vcvt.s32.f32 %v695
  %v700 = vcvt.s32.f32 %v696
  %v701 = vmax.f32 %v641, 0.0
  %v702 = vmax.f32 %v642, 0.0
  %v703 = vmax.f32 %v643, 0.0
  %v704 = vmax.f32 %v644, 0.0
  %v705 = vmin.f32 %v269, %v701
  %v706 = vmin.f32 %v270, %v702
  %v707 = vmin.f32 %v271, %v703
  %v708 = vmin.f32 %v272, %v704
  %v709 = vmul.f32 %v705, %v286
  %v710 = vmul.f32 %v706, %v288
  %v711 = vmul.f32 %v707, %v290
  %v712 = vmul.f32 %v708, %v292
  %717 = vrot.lane.b32.xlu0 %v709, 1
  %v718 = vpop.permute.xlu0 %717
  %719 = vrot.lane.b32.xlu0 %v710, 1
  %v720 = vpop.permute.xlu0 %719
  %721 = vrot.lane.b32.xlu0 %v711, 1
  %v722 = vpop.permute.xlu0 %721
  %723 = vrot.lane.b32.xlu0 %v712, 1
  %v724 = vpop.permute.xlu0 %723
  %v729 = vadd.f32 %v130, %v718
  %v730 = vadd.f32 %v131, %v720
  %v731 = vadd.f32 %v132, %v722
  %v732 = vadd.f32 %v133, %v724
  %v733 = vadd.f32 %v729, %v334
  %v734 = vadd.f32 %v730, %v336
  %v735 = vadd.f32 %v731, %v338
  %v736 = vadd.f32 %v732, %v340
  %v737 = vcvt.f32.s32.to.zero.pseudo %v733
  %v738 = vcvt.f32.s32.to.zero.pseudo %v734
  %v739 = vcvt.f32.s32.to.zero.pseudo %v735
  %v740 = vcvt.f32.s32.to.zero.pseudo %v736
  %741 = vset.pattern.permute.xlu0 2
  %742 = vperm.xlu0 %741, %v737
  %v743 = vpop.permute.xlu0 %742
  %744 = vset.pattern.permute.xlu0 2
  %745 = vperm.xlu0 %744, %v738
  %v746 = vpop.permute.xlu0 %745
  %747 = vset.pattern.permute.xlu0 2
  %748 = vperm.xlu0 %747, %v739
  %v749 = vpop.permute.xlu0 %748
  %750 = vset.pattern.permute.xlu0 2
  %751 = vperm.xlu0 %750, %v740
  %v752 = vpop.permute.xlu0 %751
  %vm753 = vcmp.eq.s32.totalorder %v183, %v743
  %vm754 = vcmp.eq.s32.totalorder %v184, %v743
  %vm755 = vcmp.eq.s32.totalorder %v183, %v746
  %vm756 = vcmp.eq.s32.totalorder %v184, %v746
  %vm757 = vcmp.eq.s32.totalorder %v183, %v749
  %vm758 = vcmp.eq.s32.totalorder %v184, %v749
  %vm759 = vcmp.eq.s32.totalorder %v183, %v752
  %vm760 = vcmp.eq.s32.totalorder %v184, %v752
  %v761 = vsel %vm753, 1, 0
  %v762 = vsel %vm754, 1, 0
  %v763 = vsel %vm755, 1, 0
  %v764 = vsel %vm756, 1, 0
  %v765 = vsel %vm757, 1, 0
  %v766 = vsel %vm758, 1, 0
  %v767 = vsel %vm759, 1, 0
  %v768 = vsel %vm760, 1, 0
  %v769 = vcvt.s32.f32 %v761
  %v770 = vcvt.s32.f32 %v762
  %v771 = vcvt.s32.f32 %v763
  %v772 = vcvt.s32.f32 %v764
  %v773 = vcvt.s32.f32 %v765
  %v774 = vcvt.s32.f32 %v766
  %v775 = vcvt.s32.f32 %v767
  %v776 = vcvt.s32.f32 %v768
  %v777 = vmul.f32 %v178, %v394
  %v778 = vmul.f32 %v179, %v396
  %v779 = vmul.f32 %v180, %v398
  %v780 = vmul.f32 %v181, %v400
  %785 = vrot.lane.b32.xlu0 %v697, 1
  %v786 = vpop.permute.xlu0 %785
  %787 = vrot.lane.b32.xlu0 %v698, 1
  %v788 = vpop.permute.xlu0 %787
  %789 = vrot.lane.b32.xlu0 %v699, 1
  %v790 = vpop.permute.xlu0 %789
  %791 = vrot.lane.b32.xlu0 %v700, 1
  %v792 = vpop.permute.xlu0 %791
  %v797 = vmul.f32 %v777, %v786
  %v798 = vmul.f32 %v778, %v788
  %v799 = vmul.f32 %v779, %v790
  %v800 = vmul.f32 %v780, %v792
  %802 = vset.pattern.permute.xlu0 1
  %803 = vperm.xlu0 %802, %v797
  %v804 = vpop.permute.xlu0 %803
  %807 = vset.pattern.permute.xlu0 1
  %808 = vperm.xlu0 %807, %v798
  %v809 = vpop.permute.xlu0 %808
  %812 = vset.pattern.permute.xlu0 1
  %813 = vperm.xlu0 %812, %v799
  %v814 = vpop.permute.xlu0 %813
  %817 = vset.pattern.permute.xlu0 1
  %818 = vperm.xlu0 %817, %v800
  %v819 = vpop.permute.xlu0 %818
  %v821 = vmul.f32 %v769, %v804
  %v822 = vmul.f32 %v770, %v804
  %v823 = vmul.f32 %v771, %v809
  %v824 = vmul.f32 %v772, %v809
  %v825 = vmul.f32 %v773, %v814
  %v826 = vmul.f32 %v774, %v814
  %v827 = vmul.f32 %v775, %v819
  %v828 = vmul.f32 %v776, %v819
  %v829 = vadd.f32 %v633, %v821
  %v830 = vadd.f32 %v634, %v822
  %v831 = vadd.f32 %v635, %v823
  %v832 = vadd.f32 %v636, %v824
  %v833 = vadd.f32 %v637, %v825
  %v834 = vadd.f32 %v638, %v826
  %v835 = vadd.f32 %v639, %v827
  %v836 = vadd.f32 %v640, %v828
  %vm837 = vmand %vm477, %vm661
  %vm838 = vmand %vm478, %vm662
  %vm839 = vmand %vm479, %vm663
  %vm840 = vmand %vm480, %vm664
  %vm841 = vmand %vm837, %vm685
  %vm842 = vmand %vm838, %vm686
  %vm843 = vmand %vm839, %vm687
  %vm844 = vmand %vm840, %vm688
  %v845 = vsel %vm841, 1, 0
  %v846 = vsel %vm842, 1, 0
  %v847 = vsel %vm843, 1, 0
  %v848 = vsel %vm844, 1, 0
  %v849 = vcvt.s32.f32 %v845
  %v850 = vcvt.s32.f32 %v846
  %v851 = vcvt.s32.f32 %v847
  %v852 = vcvt.s32.f32 %v848
  %v853 = vadd.f32 %v729, %v510
  %v854 = vadd.f32 %v730, %v512
  %v855 = vadd.f32 %v731, %v514
  %v856 = vadd.f32 %v732, %v516
  %v857 = vcvt.f32.s32.to.zero.pseudo %v853
  %v858 = vcvt.f32.s32.to.zero.pseudo %v854
  %v859 = vcvt.f32.s32.to.zero.pseudo %v855
  %v860 = vcvt.f32.s32.to.zero.pseudo %v856
  %861 = vset.pattern.permute.xlu0 2
  %862 = vperm.xlu0 %861, %v857
  %v863 = vpop.permute.xlu0 %862
  %864 = vset.pattern.permute.xlu0 2
  %865 = vperm.xlu0 %864, %v858
  %v866 = vpop.permute.xlu0 %865
  %867 = vset.pattern.permute.xlu0 2
  %868 = vperm.xlu0 %867, %v859
  %v869 = vpop.permute.xlu0 %868
  %870 = vset.pattern.permute.xlu0 2
  %871 = vperm.xlu0 %870, %v860
  %v872 = vpop.permute.xlu0 %871
  %vm873 = vcmp.eq.s32.totalorder %v183, %v863
  %vm874 = vcmp.eq.s32.totalorder %v184, %v863
  %vm875 = vcmp.eq.s32.totalorder %v183, %v866
  %vm876 = vcmp.eq.s32.totalorder %v184, %v866
  %vm877 = vcmp.eq.s32.totalorder %v183, %v869
  %vm878 = vcmp.eq.s32.totalorder %v184, %v869
  %vm879 = vcmp.eq.s32.totalorder %v183, %v872
  %vm880 = vcmp.eq.s32.totalorder %v184, %v872
  %v881 = vsel %vm873, 1, 0
  %v882 = vsel %vm874, 1, 0
  %v883 = vsel %vm875, 1, 0
  %v884 = vsel %vm876, 1, 0
  %v885 = vsel %vm877, 1, 0
  %v886 = vsel %vm878, 1, 0
  %v887 = vsel %vm879, 1, 0
  %v888 = vsel %vm880, 1, 0
  %v889 = vcvt.s32.f32 %v881
  %v890 = vcvt.s32.f32 %v882
  %v891 = vcvt.s32.f32 %v883
  %v892 = vcvt.s32.f32 %v884
  %v893 = vcvt.s32.f32 %v885
  %v894 = vcvt.s32.f32 %v886
  %v895 = vcvt.s32.f32 %v887
  %v896 = vcvt.s32.f32 %v888
  %v897 = vmul.f32 %v178, %v570
  %v898 = vmul.f32 %v179, %v572
  %v899 = vmul.f32 %v180, %v574
  %v900 = vmul.f32 %v181, %v576
  %905 = vrot.lane.b32.xlu0 %v849, 1
  %v906 = vpop.permute.xlu0 %905
  %907 = vrot.lane.b32.xlu0 %v850, 1
  %v908 = vpop.permute.xlu0 %907
  %909 = vrot.lane.b32.xlu0 %v851, 1
  %v910 = vpop.permute.xlu0 %909
  %911 = vrot.lane.b32.xlu0 %v852, 1
  %v912 = vpop.permute.xlu0 %911
  %v917 = vmul.f32 %v897, %v906
  %v918 = vmul.f32 %v898, %v908
  %v919 = vmul.f32 %v899, %v910
  %v920 = vmul.f32 %v900, %v912
  %922 = vset.pattern.permute.xlu0 1
  %923 = vperm.xlu0 %922, %v917
  %v924 = vpop.permute.xlu0 %923
  %927 = vset.pattern.permute.xlu0 1
  %928 = vperm.xlu0 %927, %v918
  %v929 = vpop.permute.xlu0 %928
  %932 = vset.pattern.permute.xlu0 1
  %933 = vperm.xlu0 %932, %v919
  %v934 = vpop.permute.xlu0 %933
  %937 = vset.pattern.permute.xlu0 1
  %938 = vperm.xlu0 %937, %v920
  %v939 = vpop.permute.xlu0 %938
  %v941 = vmul.f32 %v889, %v924
  %v942 = vmul.f32 %v890, %v924
  %v943 = vmul.f32 %v891, %v929
  %v944 = vmul.f32 %v892, %v929
  %v945 = vmul.f32 %v893, %v934
  %v946 = vmul.f32 %v894, %v934
  %v947 = vmul.f32 %v895, %v939
  %v948 = vmul.f32 %v896, %v939
  %v949 = vadd.f32 %v829, %v941
  %v950 = vadd.f32 %v830, %v942
  %v951 = vadd.f32 %v831, %v943
  %v952 = vadd.f32 %v832, %v944
  %v953 = vadd.f32 %v833, %v945
  %v954 = vadd.f32 %v834, %v946
  %v955 = vadd.f32 %v835, %v947
  %v956 = vadd.f32 %v836, %v948
  %v957 = vld [vmem:[%s0 + $0x60] sm:$0xff]
  %v958 = vld [vmem:[%s0 + $0x68] sm:$0xff]
  %v959 = vld [vmem:[%s0 + $0x70] sm:$0xff]
  %v960 = vld [vmem:[%s0 + $0x78] sm:$0xff]
  %v961 = vld [vmem:[%s0 + $0x80] sm:$0xff]
  %v962 = vld [vmem:[%s0 + $0x88] sm:$0xff]
  %v963 = vld [vmem:[%s0 + $0x90] sm:$0xff]
  %v964 = vld [vmem:[%s0 + $0x98] sm:$0xff]
  %v965 = vld [vmem:[%s0 + $0xa0] sm:$0xff]
  %v966 = vld [vmem:[%s0 + $0xa8] sm:$0xff]
  %v967 = vld [vmem:[%s0 + $0xb0] sm:$0xff]
  %v968 = vld [vmem:[%s0 + $0xb8] sm:$0xff]
  %v969 = vld [vmem:[%s0 + $0xc0] sm:$0xff]
  %v970 = vld [vmem:[%s0 + $0xc8] sm:$0xff]
  %v971 = vld [vmem:[%s0 + $0xd0] sm:$0xff]
  %v972 = vld [vmem:[%s0 + $0xd8] sm:$0xff]
  %v973 = vld [vmem:[%s0 + $0xe0] sm:$0xff]
  %v974 = vld [vmem:[%s0 + $0xe8] sm:$0xff]
  %v975 = vld [vmem:[%s0 + $0xf0] sm:$0xff]
  %v976 = vld [vmem:[%s0 + $0xf8] sm:$0xff]
  %v977 = vpack.c.bf16 %v951, %v949
  %v978 = vpack.c.bf16 %v952, %v950
  %v979 = vpack.c.bf16 %v955, %v953
  %v980 = vpack.c.bf16 %v956, %v954
  %v981 = vpack.c.bf16 %v958, %v957
  %v982 = vpack.c.bf16 %v960, %v959
  %v983 = vpack.c.bf16 %v962, %v961
  %v984 = vpack.c.bf16 %v964, %v963
  %v985 = vpack.c.bf16 %v966, %v965
  %v986 = vpack.c.bf16 %v968, %v967
  %v987 = vpack.c.bf16 %v970, %v969
  %v988 = vpack.c.bf16 %v972, %v971
  %v989 = vpack.c.bf16 %v974, %v973
  %v990 = vpack.c.bf16 %v976, %v975
  %vm991 = vcmask 261120
  %v993 = vsel %vm991, %v978, 0
  %v996 = vsel %vm991, %v980, 0
  %998 = vmatprep.subr.bf16.mxu0 0
  %999 = vmatpush1.bf16.msra.mxu0 %v981
  %1000 = vmatprep.subr.bf16.mxu0 0
  %1001 = vmatpush1.bf16.msra.mxu0 %v982
  %1002 = vmatprep.subr.bf16.mxu0 0
  %1003 = vmatpush1.bf16.msra.mxu0 %v983
  %1004 = vmatprep.subr.bf16.mxu0 0
  %1005 = vmatpush1.bf16.msra.mxu0 %v984
  %1006 = vmatprep.subr.bf16.mxu0 0
  %1007 = vmatpush1.bf16.msra.mxu0 %v985
  %1008 = vmatprep.subr.bf16.mxu0 0
  %1009 = vmatpush1.bf16.msra.mxu0 %v986
  %1010 = vmatprep.subr.bf16.mxu0 0
  %1011 = vmatpush1.bf16.msra.mxu0 %v987
  %1012 = vmatprep.subr.bf16.mxu0 0
  %1013 = vmatpush1.bf16.msra.mxu0 %v988
  %1014 = vmatprep.subr.bf16.mxu0 0
  %1015 = vmatpush1.bf16.msra.mxu0 %v989
  %1016 = vmatprep.subr.bf16.mxu0 0
  %1017 = vmatpush1.bf16.msra.mxu0 %v990
  %1018 = vmatprep.subr.bf16.mxu0 0
  %1019 = vmatpush1.bf16.msra.mxu0 0
  %1020 = vmatprep.subr.bf16.mxu0 0
  %1021 = vmatpush1.bf16.msra.mxu0 0
  %1022 = vmatprep.subr.bf16.mxu0 0
  %1023 = vmatpush1.bf16.msra.mxu0 0
  %1024 = vmatprep.subr.bf16.mxu0 0
  %1025 = vmatpush1.bf16.msra.mxu0 0
  %1026 = vmatprep.subr.bf16.mxu0 0
  %1027 = vmatpush1.bf16.msra.mxu0 0
  %1028 = vmatprep.subr.bf16.mxu0 0
  %1029 = vmatpush1.bf16.msra.mxu0 0
  %1030 = vmatprep.mubr.bf16.mxu0 %v993
  %1031 = vmatmul.mubr.bf16.gmra.mrb[0].mxu0 %v977
  %v1032 = vpop.f32.mrb[0].mxu0
  %v1033 = vadd.f32 0.0, %v1032
  %v1034 = vpop.f32.mrb[0].mxu0
  %v1035 = vpop.f32.mrb[0].mxu0
  %v1036 = vadd.f32 0.0, %v1035
  %v1037 = vpop.f32.mrb[0].mxu0
  %1038 = vmatprep.mubr.bf16.mxu0 %v996
  %1039 = vmatmul.mubr.bf16.gmra.mrb[0].mxu0 %v979
  %v1040 = vpop.f32.mrb[0].mxu0
  %v1041 = vadd.f32 0.0, %v1040
  %v1042 = vpop.f32.mrb[0].mxu0
  %v1043 = vpop.f32.mrb[0].mxu0
  %v1044 = vadd.f32 0.0, %v1043
  %v1045 = vpop.f32.mrb[0].mxu0
  %1046 = vdwg.mxu0
  %v1047 = vld [vmem:[%s1 + $0x118] sm:$0xff]
  %v1048 = vld [vmem:[%s1 + $0x120] sm:$0xff]
  %v1049 = vld [vmem:[%s1 + $0x128] sm:$0xff]
  %v1050 = vld [vmem:[%s1 + $0x130] sm:$0xff]
  %v1051 = vld [vmem:[%s1 + $0x138] sm:$0xff]
  %v1052 = vld [vmem:[%s1 + $0x140] sm:$0xff]
  %v1053 = vld [vmem:[%s1 + $0x148] sm:$0xff]
  %v1054 = vld [vmem:[%s1 + $0x150] sm:$0xff]
  %v1055 = vld [vmem:[%s1 + $0x158] sm:$0xff]
  %v1056 = vld [vmem:[%s1 + $0x160] sm:$0xff]
  %v1057 = vld [vmem:[%s1 + $0x168] sm:$0xff]
  %v1058 = vld [vmem:[%s1 + $0x170] sm:$0xff]
  %v1059 = vmul.f32 %v1033, %v1033
  %v1060 = vmul.f32 %v1036, %v1036
  %v1061 = vmul.f32 %v1041, %v1041
  %v1062 = vmul.f32 %v1044, %v1044
  %vm1063 = vcmask 130048
  %v1065 = vsel %vm1063, %v1033, 0
  %v1068 = vsel %vm1063, %v1036, 0
  %v1071 = vsel %vm1063, %v1041, 0
  %v1074 = vsel %vm1063, %v1044, 0
  %v1077 = vsel %vm1063, %v1059, 0
  %v1080 = vsel %vm1063, %v1060, 0
  %v1083 = vsel %vm1063, %v1061, 0
  %v1086 = vsel %vm1063, %v1062, 0
  %1088 = vmatprep.subr.mxu0 0.0
  %1089 = vmatpush1.msra.mxu0 %v1047
  %1090 = vmatprep.subr.mxu0 0.0
  %1091 = vmatpush1.msra.mxu0 %v1048
  %1092 = vmatprep.subr.mxu0 0.0
  %1093 = vmatpush1.msra.mxu0 0.0
  %1094 = vmatprep.subr.mxu0 0.0
  %1095 = vmatpush1.msra.mxu0 0.0
  %1096 = vmatprep.subr.mxu0 0.0
  %1097 = vmatpush1.msra.mxu0 0.0
  %1098 = vmatprep.subr.mxu0 0.0
  %1099 = vmatpush1.msra.mxu0 0.0
  %1100 = vmatprep.subr.mxu0 0.0
  %1101 = vmatpush1.msra.mxu0 0.0
  %1102 = vmatprep.subr.mxu0 0.0
  %1103 = vmatpush1.msra.mxu0 0.0
  %1104 = vmatprep.subr.mxu0 0.0
  %1105 = vmatpush1.msra.mxu0 0.0
  %1106 = vmatprep.subr.mxu0 0.0
  %1107 = vmatpush1.msra.mxu0 0.0
  %1108 = vmatprep.subr.mxu0 0.0
  %1109 = vmatpush1.msra.mxu0 0.0
  %1110 = vmatprep.subr.mxu0 0.0
  %1111 = vmatpush1.msra.mxu0 0.0
  %1112 = vmatprep.subr.mxu0 0.0
  %1113 = vmatpush1.msra.mxu0 0.0
  %1114 = vmatprep.subr.mxu0 0.0
  %1115 = vmatpush1.msra.mxu0 0.0
  %1116 = vmatprep.subr.mxu0 0.0
  %1117 = vmatpush1.msra.mxu0 0.0
  %1118 = vmatprep.subr.mxu0 0.0
  %1119 = vmatpush1.msra.mxu0 0.0
  %1120 = vmatprep.subr.mxu0 0.0
  %1121 = vmatpush1.msra.mxu0 0.0
  %1122 = vmatprep.subr.mxu0 0.0
  %1123 = vmatpush1.msra.mxu0 0.0
  %1124 = vmatprep.subr.mxu0 0.0
  %1125 = vmatpush1.msra.mxu0 0.0
  %1126 = vmatprep.subr.mxu0 0.0
  %1127 = vmatpush1.msra.mxu0 0.0
  %1128 = vmatprep.subr.mxu0 0.0
  %1129 = vmatpush1.msra.mxu0 0.0
  %1130 = vmatprep.subr.mxu0 0.0
  %1131 = vmatpush1.msra.mxu0 0.0
  %1132 = vmatprep.subr.mxu0 0.0
  %1133 = vmatpush1.msra.mxu0 0.0
  %1134 = vmatprep.subr.mxu0 0.0
  %1135 = vmatpush1.msra.mxu0 0.0
  %1136 = vmatprep.subr.mxu0 0.0
  %1137 = vmatpush1.msra.mxu0 0.0
  %1138 = vmatprep.subr.mxu0 0.0
  %1139 = vmatpush1.msra.mxu0 0.0
  %1140 = vmatprep.subr.mxu0 0.0
  %1141 = vmatpush1.msra.mxu0 0.0
  %1142 = vmatprep.subr.mxu0 0.0
  %1143 = vmatpush1.msra.mxu0 0.0
  %1144 = vmatprep.subr.mxu0 0.0
  %1145 = vmatpush1.msra.mxu0 0.0
  %1146 = vmatprep.subr.mxu0 0.0
  %1147 = vmatpush1.msra.mxu0 0.0
  %1148 = vmatprep.subr.mxu0 0.0
  %1149 = vmatpush1.msra.mxu0 0.0
  %1150 = vmatprep.subr.mxu0 0.0
  %1151 = vmatpush1.msra.mxu0 0.0
  %1152 = vmatprep.mubr.f32.mxu0 0.0
  %1153 = vmatmul.mubr.f32.gmra.mrb[0].mxu0 %v1065
  %v1154 = vpop.f32.mrb[0].mxu0
  %v1155 = vadd.f32 0.0, %v1154
  %v1156 = vpop.f32.mrb[0].mxu0
  %1157 = vmatprep.mubr.f32.mxu0 0.0
  %1158 = vmatmul.mubr.f32.gmra.mrb[0].mxu0 %v1068
  %v1159 = vpop.f32.mrb[0].mxu0
  %v1160 = vadd.f32 0.0, %v1159
  %v1161 = vpop.f32.mrb[0].mxu0
  %1162 = vmatprep.mubr.f32.mxu0 0.0
  %1163 = vmatmul.mubr.f32.gmra.mrb[0].mxu0 %v1071
  %v1164 = vpop.f32.mrb[0].mxu0
  %v1165 = vadd.f32 0.0, %v1164
  %v1166 = vpop.f32.mrb[0].mxu0
  %1167 = vmatprep.mubr.f32.mxu0 0.0
  %1168 = vmatmul.mubr.f32.gmra.mrb[0].mxu0 %v1074
  %v1169 = vpop.f32.mrb[0].mxu0
  %v1170 = vadd.f32 0.0, %v1169
  %v1171 = vpop.f32.mrb[0].mxu0
  %1172 = vmatprep.mubr.f32.mxu0 0.0
  %1173 = vmatmul.mubr.f32.gmra.mrb[0].mxu0 %v1077
  %v1174 = vpop.f32.mrb[0].mxu0
  %v1175 = vadd.f32 0.0, %v1174
  %v1176 = vpop.f32.mrb[0].mxu0
  %1177 = vmatprep.mubr.f32.mxu0 0.0
  %1178 = vmatmul.mubr.f32.gmra.mrb[0].mxu0 %v1080
  %v1179 = vpop.f32.mrb[0].mxu0
  %v1180 = vadd.f32 0.0, %v1179
  %v1181 = vpop.f32.mrb[0].mxu0
  %1182 = vmatprep.mubr.f32.mxu0 0.0
  %1183 = vmatmul.mubr.f32.gmra.mrb[0].mxu0 %v1083
  %v1184 = vpop.f32.mrb[0].mxu0
  %v1185 = vadd.f32 0.0, %v1184
  %v1186 = vpop.f32.mrb[0].mxu0
  %1187 = vmatprep.mubr.f32.mxu0 0.0
  %1188 = vmatmul.mubr.f32.gmra.mrb[0].mxu0 %v1086
  %v1189 = vpop.f32.mrb[0].mxu0
  %v1190 = vadd.f32 0.0, %v1189
  %v1191 = vpop.f32.mrb[0].mxu0
  %1192 = vdwg.mxu0
  %v1194 = vsel %vm22, %v1050, 0
  %1196 = vmatprep.subr.mxu0 0.0
  %1197 = vmatpush1.msra.mxu0 %v1155
  %1198 = vmatprep.subr.mxu0 0.0
  %1199 = vmatpush1.msra.mxu0 %v1160
  %1200 = vmatprep.subr.mxu0 0.0
  %1201 = vmatpush1.msra.mxu0 %v1165
  %1202 = vmatprep.subr.mxu0 0.0
  %1203 = vmatpush1.msra.mxu0 %v1170
  %1204 = vmatprep.subr.mxu0 0.0
  %1205 = vmatpush1.msra.mxu0 %v1175
  %1206 = vmatprep.subr.mxu0 0.0
  %1207 = vmatpush1.msra.mxu0 %v1180
  %1208 = vmatprep.subr.mxu0 0.0
  %1209 = vmatpush1.msra.mxu0 %v1185
  %1210 = vmatprep.subr.mxu0 0.0
  %1211 = vmatpush1.msra.mxu0 %v1190
  %1212 = vmatprep.subr.mxu0 0.0
  %1213 = vmatpush1.msra.mxu0 0.0
  %1214 = vmatprep.subr.mxu0 0.0
  %1215 = vmatpush1.msra.mxu0 0.0
  %1216 = vmatprep.subr.mxu0 0.0
  %1217 = vmatpush1.msra.mxu0 0.0
  %1218 = vmatprep.subr.mxu0 0.0
  %1219 = vmatpush1.msra.mxu0 0.0
  %1220 = vmatprep.subr.mxu0 0.0
  %1221 = vmatpush1.msra.mxu0 0.0
  %1222 = vmatprep.subr.mxu0 0.0
  %1223 = vmatpush1.msra.mxu0 0.0
  %1224 = vmatprep.subr.mxu0 0.0
  %1225 = vmatpush1.msra.mxu0 0.0
  %1226 = vmatprep.subr.mxu0 0.0
  %1227 = vmatpush1.msra.mxu0 0.0
  %1228 = vmatprep.subr.mxu0 0.0
  %1229 = vmatpush1.msra.mxu0 0.0
  %1230 = vmatprep.subr.mxu0 0.0
  %1231 = vmatpush1.msra.mxu0 0.0
  %1232 = vmatprep.subr.mxu0 0.0
  %1233 = vmatpush1.msra.mxu0 0.0
  %1234 = vmatprep.subr.mxu0 0.0
  %1235 = vmatpush1.msra.mxu0 0.0
  %1236 = vmatprep.subr.mxu0 0.0
  %1237 = vmatpush1.msra.mxu0 0.0
  %1238 = vmatprep.subr.mxu0 0.0
  %1239 = vmatpush1.msra.mxu0 0.0
  %1240 = vmatprep.subr.mxu0 0.0
  %1241 = vmatpush1.msra.mxu0 0.0
  %1242 = vmatprep.subr.mxu0 0.0
  %1243 = vmatpush1.msra.mxu0 0.0
  %1244 = vmatprep.subr.mxu0 0.0
  %1245 = vmatpush1.msra.mxu0 0.0
  %1246 = vmatprep.subr.mxu0 0.0
  %1247 = vmatpush1.msra.mxu0 0.0
  %1248 = vmatprep.subr.mxu0 0.0
  %1249 = vmatpush1.msra.mxu0 0.0
  %1250 = vmatprep.subr.mxu0 0.0
  %1251 = vmatpush1.msra.mxu0 0.0
  %1252 = vmatprep.subr.mxu0 0.0
  %1253 = vmatpush1.msra.mxu0 0.0
  %1254 = vmatprep.subr.mxu0 0.0
  %1255 = vmatpush1.msra.mxu0 0.0
  %1256 = vmatprep.subr.mxu0 0.0
  %1257 = vmatpush1.msra.mxu0 0.0
  %1258 = vmatprep.subr.mxu0 0.0
  %1259 = vmatpush1.msra.mxu0 0.0
  %1260 = vmatprep.mubr.f32.mxu0 0.0
  %1261 = vmatmul.mubr.f32.gmra.mrb[0].mxu0 %v1194
  %v1262 = vpop.f32.mrb[0].mxu0
  %v1263 = vadd.f32 0.0, %v1262
  %v1264 = vpop.f32.mrb[0].mxu0
  %1265 = vdwg.mxu0
  %v1266 = vmul.f32 %v1263, 0.0625
  %v1267 = vmul.f32 %v1266, %v1266
  %v1269 = vrot.slane %v1267, 4
  %v1271 = vsub.f32 %v1266, %v1269
  %v1272 = vmax.f32 %v1271, 0.0
  %v1273 = vadd.f32 %v1272, 1e-05
  %v1274 = vrsqrt.pop %v1273
  %v1275 = vsub.f32 0.0, %v1266
  %v1277 = vrot.slane %v1274, 4
  %v1279 = vmul.f32 %v1275, %v1277
  %v1281 = vrot.slane %v1279, 4
  %vm1283 = vcmask 1043456
  %v1284 = vsel %vm1283, %v1277, %v1281
  %vm1285 = vcmask 64512
  %v1287 = vsel %vm1285, %v1284, 0
  %1289 = vmatprep.subr.mxu0 0.0
  %1290 = vmatpush1.msra.mxu0 %v1049
  %1291 = vmatprep.subr.mxu0 0.0
  %1292 = vmatpush1.msra.mxu0 0.0
  %1293 = vmatprep.subr.mxu0 0.0
  %1294 = vmatpush1.msra.mxu0 0.0
  %1295 = vmatprep.subr.mxu0 0.0
  %1296 = vmatpush1.msra.mxu0 0.0
  %1297 = vmatprep.subr.mxu0 0.0
  %1298 = vmatpush1.msra.mxu0 0.0
  %1299 = vmatprep.subr.mxu0 0.0
  %1300 = vmatpush1.msra.mxu0 0.0
  %1301 = vmatprep.subr.mxu0 0.0
  %1302 = vmatpush1.msra.mxu0 0.0
  %1303 = vmatprep.subr.mxu0 0.0
  %1304 = vmatpush1.msra.mxu0 0.0
  %1305 = vmatprep.subr.mxu0 0.0
  %1306 = vmatpush1.msra.mxu0 0.0
  %1307 = vmatprep.subr.mxu0 0.0
  %1308 = vmatpush1.msra.mxu0 0.0
  %1309 = vmatprep.subr.mxu0 0.0
  %1310 = vmatpush1.msra.mxu0 0.0
  %1311 = vmatprep.subr.mxu0 0.0
  %1312 = vmatpush1.msra.mxu0 0.0
  %1313 = vmatprep.subr.mxu0 0.0
  %1314 = vmatpush1.msra.mxu0 0.0
  %1315 = vmatprep.subr.mxu0 0.0
  %1316 = vmatpush1.msra.mxu0 0.0
  %1317 = vmatprep.subr.mxu0 0.0
  %1318 = vmatpush1.msra.mxu0 0.0
  %1319 = vmatprep.subr.mxu0 0.0
  %1320 = vmatpush1.msra.mxu0 0.0
  %1321 = vmatprep.subr.mxu0 0.0
  %1322 = vmatpush1.msra.mxu0 0.0
  %1323 = vmatprep.subr.mxu0 0.0
  %1324 = vmatpush1.msra.mxu0 0.0
  %1325 = vmatprep.subr.mxu0 0.0
  %1326 = vmatpush1.msra.mxu0 0.0
  %1327 = vmatprep.subr.mxu0 0.0
  %1328 = vmatpush1.msra.mxu0 0.0
  %1329 = vmatprep.subr.mxu0 0.0
  %1330 = vmatpush1.msra.mxu0 0.0
  %1331 = vmatprep.subr.mxu0 0.0
  %1332 = vmatpush1.msra.mxu0 0.0
  %1333 = vmatprep.subr.mxu0 0.0
  %1334 = vmatpush1.msra.mxu0 0.0
  %1335 = vmatprep.subr.mxu0 0.0
  %1336 = vmatpush1.msra.mxu0 0.0
  %1337 = vmatprep.subr.mxu0 0.0
  %1338 = vmatpush1.msra.mxu0 0.0
  %1339 = vmatprep.subr.mxu0 0.0
  %1340 = vmatpush1.msra.mxu0 0.0
  %1341 = vmatprep.subr.mxu0 0.0
  %1342 = vmatpush1.msra.mxu0 0.0
  %1343 = vmatprep.subr.mxu0 0.0
  %1344 = vmatpush1.msra.mxu0 0.0
  %1345 = vmatprep.subr.mxu0 0.0
  %1346 = vmatpush1.msra.mxu0 0.0
  %1347 = vmatprep.subr.mxu0 0.0
  %1348 = vmatpush1.msra.mxu0 0.0
  %1349 = vmatprep.subr.mxu0 0.0
  %1350 = vmatpush1.msra.mxu0 0.0
  %1351 = vmatprep.subr.mxu0 0.0
  %1352 = vmatpush1.msra.mxu0 0.0
  %1353 = vmatprep.mubr.f32.mxu0 0.0
  %1354 = vmatmul.mubr.f32.gmra.mrb[0].mxu0 %v1287
  %v1355 = vpop.f32.mrb[0].mxu0
  %v1356 = vadd.f32 0.0, %v1355
  %v1357 = vpop.f32.mrb[0].mxu0
  %1358 = vdwg.mxu0
  %v1360 = vsel %vm1285, %v1051, 0
  %v1363 = vsel %vm1285, %v1052, 0
  %v1366 = vsel %vm1285, %v1053, 0
  %v1369 = vsel %vm1285, %v1054, 0
  %v1372 = vsel %vm1285, %v1055, 0
  %v1375 = vsel %vm1285, %v1056, 0
  %v1378 = vsel %vm1285, %v1057, 0
  %v1381 = vsel %vm1285, %v1058, 0
  %1383 = vmatprep.subr.mxu0 0.0
  %1384 = vmatpush1.msra.mxu0 %v1356
  %1385 = vmatprep.subr.mxu0 0.0
  %1386 = vmatpush1.msra.mxu0 0.0
  %1387 = vmatprep.subr.mxu0 0.0
  %1388 = vmatpush1.msra.mxu0 0.0
  %1389 = vmatprep.subr.mxu0 0.0
  %1390 = vmatpush1.msra.mxu0 0.0
  %1391 = vmatprep.subr.mxu0 0.0
  %1392 = vmatpush1.msra.mxu0 0.0
  %1393 = vmatprep.subr.mxu0 0.0
  %1394 = vmatpush1.msra.mxu0 0.0
  %1395 = vmatprep.subr.mxu0 0.0
  %1396 = vmatpush1.msra.mxu0 0.0
  %1397 = vmatprep.subr.mxu0 0.0
  %1398 = vmatpush1.msra.mxu0 0.0
  %1399 = vmatprep.subr.mxu0 0.0
  %1400 = vmatpush1.msra.mxu0 0.0
  %1401 = vmatprep.subr.mxu0 0.0
  %1402 = vmatpush1.msra.mxu0 0.0
  %1403 = vmatprep.subr.mxu0 0.0
  %1404 = vmatpush1.msra.mxu0 0.0
  %1405 = vmatprep.subr.mxu0 0.0
  %1406 = vmatpush1.msra.mxu0 0.0
  %1407 = vmatprep.subr.mxu0 0.0
  %1408 = vmatpush1.msra.mxu0 0.0
  %1409 = vmatprep.subr.mxu0 0.0
  %1410 = vmatpush1.msra.mxu0 0.0
  %1411 = vmatprep.subr.mxu0 0.0
  %1412 = vmatpush1.msra.mxu0 0.0
  %1413 = vmatprep.subr.mxu0 0.0
  %1414 = vmatpush1.msra.mxu0 0.0
  %1415 = vmatprep.subr.mxu0 0.0
  %1416 = vmatpush1.msra.mxu0 0.0
  %1417 = vmatprep.subr.mxu0 0.0
  %1418 = vmatpush1.msra.mxu0 0.0
  %1419 = vmatprep.subr.mxu0 0.0
  %1420 = vmatpush1.msra.mxu0 0.0
  %1421 = vmatprep.subr.mxu0 0.0
  %1422 = vmatpush1.msra.mxu0 0.0
  %1423 = vmatprep.subr.mxu0 0.0
  %1424 = vmatpush1.msra.mxu0 0.0
  %1425 = vmatprep.subr.mxu0 0.0
  %1426 = vmatpush1.msra.mxu0 0.0
  %1427 = vmatprep.subr.mxu0 0.0
  %1428 = vmatpush1.msra.mxu0 0.0
  %1429 = vmatprep.subr.mxu0 0.0
  %1430 = vmatpush1.msra.mxu0 0.0
  %1431 = vmatprep.subr.mxu0 0.0
  %1432 = vmatpush1.msra.mxu0 0.0
  %1433 = vmatprep.subr.mxu0 0.0
  %1434 = vmatpush1.msra.mxu0 0.0
  %1435 = vmatprep.subr.mxu0 0.0
  %1436 = vmatpush1.msra.mxu0 0.0
  %1437 = vmatprep.subr.mxu0 0.0
  %1438 = vmatpush1.msra.mxu0 0.0
  %1439 = vmatprep.subr.mxu0 0.0
  %1440 = vmatpush1.msra.mxu0 0.0
  %1441 = vmatprep.subr.mxu0 0.0
  %1442 = vmatpush1.msra.mxu0 0.0
  %1443 = vmatprep.subr.mxu0 0.0
  %1444 = vmatpush1.msra.mxu0 0.0
  %1445 = vmatprep.subr.mxu0 0.0
  %1446 = vmatpush1.msra.mxu0 0.0
  %1447 = vmatprep.mubr.f32.mxu0 0.0
  %1448 = vmatmul.mubr.f32.gmra.mrb[0].mxu0 %v1360
  %v1449 = vpop.f32.mrb[0].mxu0
  %v1450 = vadd.f32 0.0, %v1449
  %v1451 = vpop.f32.mrb[0].mxu0
  %1452 = vmatprep.mubr.f32.mxu0 0.0
  %1453 = vmatmul.mubr.f32.gmra.mrb[0].mxu0 %v1363
  %v1454 = vpop.f32.mrb[0].mxu0
  %v1455 = vadd.f32 0.0, %v1454
  %v1456 = vpop.f32.mrb[0].mxu0
  %1457 = vmatprep.mubr.f32.mxu0 0.0
  %1458 = vmatmul.mubr.f32.gmra.mrb[0].mxu0 %v1366
  %v1459 = vpop.f32.mrb[0].mxu0
  %v1460 = vadd.f32 0.0, %v1459
  %v1461 = vpop.f32.mrb[0].mxu0
  %1462 = vmatprep.mubr.f32.mxu0 0.0
  %1463 = vmatmul.mubr.f32.gmra.mrb[0].mxu0 %v1369
  %v1464 = vpop.f32.mrb[0].mxu0
  %v1465 = vadd.f32 0.0, %v1464
  %v1466 = vpop.f32.mrb[0].mxu0
  %1467 = vmatprep.mubr.f32.mxu0 0.0
  %1468 = vmatmul.mubr.f32.gmra.mrb[0].mxu0 %v1372
  %v1469 = vpop.f32.mrb[0].mxu0
  %v1470 = vadd.f32 0.0, %v1469
  %v1471 = vpop.f32.mrb[0].mxu0
  %1472 = vmatprep.mubr.f32.mxu0 0.0
  %1473 = vmatmul.mubr.f32.gmra.mrb[0].mxu0 %v1375
  %v1474 = vpop.f32.mrb[0].mxu0
  %v1475 = vadd.f32 0.0, %v1474
  %v1476 = vpop.f32.mrb[0].mxu0
  %1477 = vmatprep.mubr.f32.mxu0 0.0
  %1478 = vmatmul.mubr.f32.gmra.mrb[0].mxu0 %v1378
  %v1479 = vpop.f32.mrb[0].mxu0
  %v1480 = vadd.f32 0.0, %v1479
  %v1481 = vpop.f32.mrb[0].mxu0
  %1482 = vmatprep.mubr.f32.mxu0 0.0
  %1483 = vmatmul.mubr.f32.gmra.mrb[0].mxu0 %v1381
  %v1484 = vpop.f32.mrb[0].mxu0
  %v1485 = vadd.f32 0.0, %v1484
  %v1486 = vpop.f32.mrb[0].mxu0
  %1487 = vdwg.mxu0
  %v1488 = vmul.f32 %v1033, %v1450
  %v1489 = vmul.f32 %v1036, %v1455
  %v1490 = vmul.f32 %v1041, %v1460
  %v1491 = vmul.f32 %v1044, %v1465
  %v1492 = vadd.f32 %v1488, %v1470
  %v1493 = vadd.f32 %v1489, %v1475
  %v1494 = vadd.f32 %v1490, %v1480
  %v1495 = vadd.f32 %v1491, %v1485
  %1498 = vrot.lane.b32.xlu0 %v1494, 16
  %v1499 = vpop.permute.xlu0 %1498
  %1500 = vrot.lane.b32.xlu0 %v1495, 16
  %v1501 = vpop.permute.xlu0 %1500
  %v1504 = vsel %vm1063, %v1492, %v1499
  %v1505 = vsel %vm1063, %v1493, %v1501
  %v1506 = vpack.c.bf16 %v1505, %v1504
  %v1507 = vld [vmem:[%s1] sm:$0xff]
  %v1508 = vld [vmem:[%s1 + $0x8] sm:$0xff]
  %v1509 = vld [vmem:[%s1 + $0x10] sm:$0xff]
  %v1510 = vld [vmem:[%s1 + $0x18] sm:$0xff]
  %v1511 = vpack.c.bf16 %v1508, %v1507
  %v1512 = vpack.c.bf16 %v1510, %v1509
  %v1513 = vld [vmem:[%s1 + $0x20] sm:$0x1]
  %v1514 = vlaneseq
  %v1515 = vshrl.u32 %v1514, 7
  %v1516 = vsub.s32 0, %v1515
  %v1517 = vrot.slane %v1513, %v1516
  %v1519 = vsel %vm991, %v1506, 0
  %1521 = vmatprep.subr.bf16.mxu0 0
  %1522 = vmatpush1.bf16.msra.mxu0 %v1511
  %1523 = vmatprep.subr.bf16.mxu0 0
  %1524 = vmatpush1.bf16.msra.mxu0 %v1512
  %1525 = vmatprep.subr.bf16.mxu0 0
  %1526 = vmatpush1.bf16.msra.mxu0 0
  %1527 = vmatprep.subr.bf16.mxu0 0
  %1528 = vmatpush1.bf16.msra.mxu0 0
  %1529 = vmatprep.subr.bf16.mxu0 0
  %1530 = vmatpush1.bf16.msra.mxu0 0
  %1531 = vmatprep.subr.bf16.mxu0 0
  %1532 = vmatpush1.bf16.msra.mxu0 0
  %1533 = vmatprep.subr.bf16.mxu0 0
  %1534 = vmatpush1.bf16.msra.mxu0 0
  %1535 = vmatprep.subr.bf16.mxu0 0
  %1536 = vmatpush1.bf16.msra.mxu0 0
  %1537 = vmatprep.subr.bf16.mxu0 0
  %1538 = vmatpush1.bf16.msra.mxu0 0
  %1539 = vmatprep.subr.bf16.mxu0 0
  %1540 = vmatpush1.bf16.msra.mxu0 0
  %1541 = vmatprep.subr.bf16.mxu0 0
  %1542 = vmatpush1.bf16.msra.mxu0 0
  %1543 = vmatprep.subr.bf16.mxu0 0
  %1544 = vmatpush1.bf16.msra.mxu0 0
  %1545 = vmatprep.subr.bf16.mxu0 0
  %1546 = vmatpush1.bf16.msra.mxu0 0
  %1547 = vmatprep.subr.bf16.mxu0 0
  %1548 = vmatpush1.bf16.msra.mxu0 0
  %1549 = vmatprep.subr.bf16.mxu0 0
  %1550 = vmatpush1.bf16.msra.mxu0 0
  %1551 = vmatprep.subr.bf16.mxu0 0
  %1552 = vmatpush1.bf16.msra.mxu0 0
  %1553 = vmatprep.mubr.bf16.mxu0 0
  %1554 = vmatmul.mubr.bf16.gmra.mrb[0].mxu0 %v1519
  %v1555 = vpop.f32.mrb[0].mxu0
  %v1556 = vadd.f32 %v1517, %v1555
  %v1557 = vpop.f32.mrb[0].mxu0
  %v1558 = vpop.f32.mrb[0].mxu0
  %v1559 = vadd.f32 %v1517, %v1558
  %v1560 = vpop.f32.mrb[0].mxu0
  %1561 = vdwg.mxu0
  %1564 = vrot.lane.b32.xlu0 %v1556, 32
  %v1565 = vpop.permute.xlu0 %1564
  %1566 = vrot.lane.b32.xlu0 %v1559, 32
  %v1567 = vpop.permute.xlu0 %1566
  %v1570 = vadd.f32 %v96, %v1565
  %v1571 = vadd.f32 %v101, %v1567
  %v1572 = vld [vmem:[%s0 + $0x50] sm:$0xff]
  %v1573 = vld [vmem:[%s0 + $0x58] sm:$0xff]
  %v1574 = vld [vmem:[%s1 + $0xc0] sm:$0xff]
  %v1575 = vld [vmem:[%s1 + $0xc8] sm:$0xff]
  %v1576 = vld [vmem:[%s1 + $0xd0] sm:$0xff]
  %v1577 = vld [vmem:[%s1 + $0xd8] sm:$0xff]
  %v1578 = vld [vmem:[%s1 + $0xe0] sm:$0xff]
  %v1579 = vld [vmem:[%s1 + $0xe8] sm:$0xff]
  %v1580 = vld [vmem:[%s1 + $0xf0] sm:$0xf]
  %v1581 = vld [vmem:[%s1 + $0xf8] sm:$0xff]
  %v1582 = vld [vmem:[%s1 + $0x100] sm:$0xff]
  %v1583 = vld [vmem:[%s1 + $0x108] sm:$0xff]
  %v1584 = vld [vmem:[%s1 + $0x110] sm:$0xff]
  %v1585 = vmul.f32 %v1570, %v1570
  %v1586 = vmul.f32 %v1571, %v1571
  %1591 = vrot.lane.b32.xlu0 %v1570, 96
  %v1592 = vpop.permute.xlu0 %1591
  %1593 = vrot.lane.b32.xlu0 %v1571, 96
  %v1594 = vpop.permute.xlu0 %1593
  %1595 = vrot.lane.b32.xlu0 %v1585, 96
  %v1596 = vpop.permute.xlu0 %1595
  %1597 = vrot.lane.b32.xlu0 %v1586, 96
  %v1598 = vpop.permute.xlu0 %1597
  %v1599 = vsel %vm991, %v1592, 0
  %v1601 = vsel %vm991, %v1594, 0
  %v1603 = vsel %vm991, %v1596, 0
  %v1605 = vsel %vm991, %v1598, 0
  %1607 = vmatprep.subr.mxu0 0.0
  %1608 = vmatpush1.msra.mxu0 %v1574
  %1609 = vmatprep.subr.mxu0 0.0
  %1610 = vmatpush1.msra.mxu0 %v1575
  %1611 = vmatprep.subr.mxu0 0.0
  %1612 = vmatpush1.msra.mxu0 %v1576
  %1613 = vmatprep.subr.mxu0 0.0
  %1614 = vmatpush1.msra.mxu0 %v1577
  %1615 = vmatprep.subr.mxu0 0.0
  %1616 = vmatpush1.msra.mxu0 0.0
  %1617 = vmatprep.subr.mxu0 0.0
  %1618 = vmatpush1.msra.mxu0 0.0
  %1619 = vmatprep.subr.mxu0 0.0
  %1620 = vmatpush1.msra.mxu0 0.0
  %1621 = vmatprep.subr.mxu0 0.0
  %1622 = vmatpush1.msra.mxu0 0.0
  %1623 = vmatprep.subr.mxu0 0.0
  %1624 = vmatpush1.msra.mxu0 0.0
  %1625 = vmatprep.subr.mxu0 0.0
  %1626 = vmatpush1.msra.mxu0 0.0
  %1627 = vmatprep.subr.mxu0 0.0
  %1628 = vmatpush1.msra.mxu0 0.0
  %1629 = vmatprep.subr.mxu0 0.0
  %1630 = vmatpush1.msra.mxu0 0.0
  %1631 = vmatprep.subr.mxu0 0.0
  %1632 = vmatpush1.msra.mxu0 0.0
  %1633 = vmatprep.subr.mxu0 0.0
  %1634 = vmatpush1.msra.mxu0 0.0
  %1635 = vmatprep.subr.mxu0 0.0
  %1636 = vmatpush1.msra.mxu0 0.0
  %1637 = vmatprep.subr.mxu0 0.0
  %1638 = vmatpush1.msra.mxu0 0.0
  %1639 = vmatprep.subr.mxu0 0.0
  %1640 = vmatpush1.msra.mxu0 0.0
  %1641 = vmatprep.subr.mxu0 0.0
  %1642 = vmatpush1.msra.mxu0 0.0
  %1643 = vmatprep.subr.mxu0 0.0
  %1644 = vmatpush1.msra.mxu0 0.0
  %1645 = vmatprep.subr.mxu0 0.0
  %1646 = vmatpush1.msra.mxu0 0.0
  %1647 = vmatprep.subr.mxu0 0.0
  %1648 = vmatpush1.msra.mxu0 0.0
  %1649 = vmatprep.subr.mxu0 0.0
  %1650 = vmatpush1.msra.mxu0 0.0
  %1651 = vmatprep.subr.mxu0 0.0
  %1652 = vmatpush1.msra.mxu0 0.0
  %1653 = vmatprep.subr.mxu0 0.0
  %1654 = vmatpush1.msra.mxu0 0.0
  %1655 = vmatprep.subr.mxu0 0.0
  %1656 = vmatpush1.msra.mxu0 0.0
  %1657 = vmatprep.subr.mxu0 0.0
  %1658 = vmatpush1.msra.mxu0 0.0
  %1659 = vmatprep.subr.mxu0 0.0
  %1660 = vmatpush1.msra.mxu0 0.0
  %1661 = vmatprep.subr.mxu0 0.0
  %1662 = vmatpush1.msra.mxu0 0.0
  %1663 = vmatprep.subr.mxu0 0.0
  %1664 = vmatpush1.msra.mxu0 0.0
  %1665 = vmatprep.subr.mxu0 0.0
  %1666 = vmatpush1.msra.mxu0 0.0
  %1667 = vmatprep.subr.mxu0 0.0
  %1668 = vmatpush1.msra.mxu0 0.0
  %1669 = vmatprep.subr.mxu0 0.0
  %1670 = vmatpush1.msra.mxu0 0.0
  %1671 = vmatprep.mubr.f32.mxu0 0.0
  %1672 = vmatmul.mubr.f32.gmra.mrb[0].mxu0 %v1599
  %v1673 = vpop.f32.mrb[0].mxu0
  %v1674 = vadd.f32 0.0, %v1673
  %v1675 = vpop.f32.mrb[0].mxu0
  %1676 = vmatprep.mubr.f32.mxu0 0.0
  %1677 = vmatmul.mubr.f32.gmra.mrb[0].mxu0 %v1601
  %v1678 = vpop.f32.mrb[0].mxu0
  %v1679 = vadd.f32 0.0, %v1678
  %v1680 = vpop.f32.mrb[0].mxu0
  %1681 = vmatprep.mubr.f32.mxu0 0.0
  %1682 = vmatmul.mubr.f32.gmra.mrb[0].mxu0 %v1603
  %v1683 = vpop.f32.mrb[0].mxu0
  %v1684 = vadd.f32 0.0, %v1683
  %v1685 = vpop.f32.mrb[0].mxu0
  %1686 = vmatprep.mubr.f32.mxu0 0.0
  %1687 = vmatmul.mubr.f32.gmra.mrb[0].mxu0 %v1605
  %v1688 = vpop.f32.mrb[0].mxu0
  %v1689 = vadd.f32 0.0, %v1688
  %v1690 = vpop.f32.mrb[0].mxu0
  %1691 = vdwg.mxu0
  %v1693 = vsel %vm991, %v1580, 0
  %1695 = vmatprep.subr.mxu0 0.0
  %1696 = vmatpush1.msra.mxu0 %v1674
  %1697 = vmatprep.subr.mxu0 0.0
  %1698 = vmatpush1.msra.mxu0 %v1679
  %1699 = vmatprep.subr.mxu0 0.0
  %1700 = vmatpush1.msra.mxu0 %v1684
  %1701 = vmatprep.subr.mxu0 0.0
  %1702 = vmatpush1.msra.mxu0 %v1689
  %1703 = vmatprep.subr.mxu0 0.0
  %1704 = vmatpush1.msra.mxu0 0.0
  %1705 = vmatprep.subr.mxu0 0.0
  %1706 = vmatpush1.msra.mxu0 0.0
  %1707 = vmatprep.subr.mxu0 0.0
  %1708 = vmatpush1.msra.mxu0 0.0
  %1709 = vmatprep.subr.mxu0 0.0
  %1710 = vmatpush1.msra.mxu0 0.0
  %1711 = vmatprep.subr.mxu0 0.0
  %1712 = vmatpush1.msra.mxu0 0.0
  %1713 = vmatprep.subr.mxu0 0.0
  %1714 = vmatpush1.msra.mxu0 0.0
  %1715 = vmatprep.subr.mxu0 0.0
  %1716 = vmatpush1.msra.mxu0 0.0
  %1717 = vmatprep.subr.mxu0 0.0
  %1718 = vmatpush1.msra.mxu0 0.0
  %1719 = vmatprep.subr.mxu0 0.0
  %1720 = vmatpush1.msra.mxu0 0.0
  %1721 = vmatprep.subr.mxu0 0.0
  %1722 = vmatpush1.msra.mxu0 0.0
  %1723 = vmatprep.subr.mxu0 0.0
  %1724 = vmatpush1.msra.mxu0 0.0
  %1725 = vmatprep.subr.mxu0 0.0
  %1726 = vmatpush1.msra.mxu0 0.0
  %1727 = vmatprep.subr.mxu0 0.0
  %1728 = vmatpush1.msra.mxu0 0.0
  %1729 = vmatprep.subr.mxu0 0.0
  %1730 = vmatpush1.msra.mxu0 0.0
  %1731 = vmatprep.subr.mxu0 0.0
  %1732 = vmatpush1.msra.mxu0 0.0
  %1733 = vmatprep.subr.mxu0 0.0
  %1734 = vmatpush1.msra.mxu0 0.0
  %1735 = vmatprep.subr.mxu0 0.0
  %1736 = vmatpush1.msra.mxu0 0.0
  %1737 = vmatprep.subr.mxu0 0.0
  %1738 = vmatpush1.msra.mxu0 0.0
  %1739 = vmatprep.subr.mxu0 0.0
  %1740 = vmatpush1.msra.mxu0 0.0
  %1741 = vmatprep.subr.mxu0 0.0
  %1742 = vmatpush1.msra.mxu0 0.0
  %1743 = vmatprep.subr.mxu0 0.0
  %1744 = vmatpush1.msra.mxu0 0.0
  %1745 = vmatprep.subr.mxu0 0.0
  %1746 = vmatpush1.msra.mxu0 0.0
  %1747 = vmatprep.subr.mxu0 0.0
  %1748 = vmatpush1.msra.mxu0 0.0
  %1749 = vmatprep.subr.mxu0 0.0
  %1750 = vmatpush1.msra.mxu0 0.0
  %1751 = vmatprep.subr.mxu0 0.0
  %1752 = vmatpush1.msra.mxu0 0.0
  %1753 = vmatprep.subr.mxu0 0.0
  %1754 = vmatpush1.msra.mxu0 0.0
  %1755 = vmatprep.subr.mxu0 0.0
  %1756 = vmatpush1.msra.mxu0 0.0
  %1757 = vmatprep.subr.mxu0 0.0
  %1758 = vmatpush1.msra.mxu0 0.0
  %1759 = vmatprep.mubr.f32.mxu0 0.0
  %1760 = vmatmul.mubr.f32.gmra.mrb[0].mxu0 %v1693
  %v1761 = vpop.f32.mrb[0].mxu0
  %v1762 = vadd.f32 0.0, %v1761
  %v1763 = vpop.f32.mrb[0].mxu0
  %1764 = vdwg.mxu0
  %v1765 = vmul.f32 %v1762, 0.0625
  %v1766 = vmul.f32 %v1765, %v1765
  %v1768 = vrot.slane %v1766, 6
  %v1770 = vsub.f32 %v1765, %v1768
  %v1771 = vmax.f32 %v1770, 0.0
  %v1772 = vadd.f32 %v1771, 1e-05
  %v1773 = vrsqrt.pop %v1772
  %v1774 = vsub.f32 0.0, %v1765
  %v1776 = vrot.slane %v1773, 2
  %v1778 = vmul.f32 %v1774, %v1776
  %v1780 = vrot.slane %v1778, 6
  %vm1782 = vcmask 1041408
  %v1783 = vsel %vm1782, %v1776, %v1780
  %v1785 = vsel %vm1063, %v1783, 0
  %1787 = vmatprep.subr.mxu0 0.0
  %1788 = vmatpush1.msra.mxu0 %v1578
  %1789 = vmatprep.subr.mxu0 0.0
  %1790 = vmatpush1.msra.mxu0 %v1579
  %1791 = vmatprep.subr.mxu0 0.0
  %1792 = vmatpush1.msra.mxu0 0.0
  %1793 = vmatprep.subr.mxu0 0.0
  %1794 = vmatpush1.msra.mxu0 0.0
  %1795 = vmatprep.subr.mxu0 0.0
  %1796 = vmatpush1.msra.mxu0 0.0
  %1797 = vmatprep.subr.mxu0 0.0
  %1798 = vmatpush1.msra.mxu0 0.0
  %1799 = vmatprep.subr.mxu0 0.0
  %1800 = vmatpush1.msra.mxu0 0.0
  %1801 = vmatprep.subr.mxu0 0.0
  %1802 = vmatpush1.msra.mxu0 0.0
  %1803 = vmatprep.subr.mxu0 0.0
  %1804 = vmatpush1.msra.mxu0 0.0
  %1805 = vmatprep.subr.mxu0 0.0
  %1806 = vmatpush1.msra.mxu0 0.0
  %1807 = vmatprep.subr.mxu0 0.0
  %1808 = vmatpush1.msra.mxu0 0.0
  %1809 = vmatprep.subr.mxu0 0.0
  %1810 = vmatpush1.msra.mxu0 0.0
  %1811 = vmatprep.subr.mxu0 0.0
  %1812 = vmatpush1.msra.mxu0 0.0
  %1813 = vmatprep.subr.mxu0 0.0
  %1814 = vmatpush1.msra.mxu0 0.0
  %1815 = vmatprep.subr.mxu0 0.0
  %1816 = vmatpush1.msra.mxu0 0.0
  %1817 = vmatprep.subr.mxu0 0.0
  %1818 = vmatpush1.msra.mxu0 0.0
  %1819 = vmatprep.subr.mxu0 0.0
  %1820 = vmatpush1.msra.mxu0 0.0
  %1821 = vmatprep.subr.mxu0 0.0
  %1822 = vmatpush1.msra.mxu0 0.0
  %1823 = vmatprep.subr.mxu0 0.0
  %1824 = vmatpush1.msra.mxu0 0.0
  %1825 = vmatprep.subr.mxu0 0.0
  %1826 = vmatpush1.msra.mxu0 0.0
  %1827 = vmatprep.subr.mxu0 0.0
  %1828 = vmatpush1.msra.mxu0 0.0
  %1829 = vmatprep.subr.mxu0 0.0
  %1830 = vmatpush1.msra.mxu0 0.0
  %1831 = vmatprep.subr.mxu0 0.0
  %1832 = vmatpush1.msra.mxu0 0.0
  %1833 = vmatprep.subr.mxu0 0.0
  %1834 = vmatpush1.msra.mxu0 0.0
  %1835 = vmatprep.subr.mxu0 0.0
  %1836 = vmatpush1.msra.mxu0 0.0
  %1837 = vmatprep.subr.mxu0 0.0
  %1838 = vmatpush1.msra.mxu0 0.0
  %1839 = vmatprep.subr.mxu0 0.0
  %1840 = vmatpush1.msra.mxu0 0.0
  %1841 = vmatprep.subr.mxu0 0.0
  %1842 = vmatpush1.msra.mxu0 0.0
  %1843 = vmatprep.subr.mxu0 0.0
  %1844 = vmatpush1.msra.mxu0 0.0
  %1845 = vmatprep.subr.mxu0 0.0
  %1846 = vmatpush1.msra.mxu0 0.0
  %1847 = vmatprep.subr.mxu0 0.0
  %1848 = vmatpush1.msra.mxu0 0.0
  %1849 = vmatprep.subr.mxu0 0.0
  %1850 = vmatpush1.msra.mxu0 0.0
  %1851 = vmatprep.mubr.f32.mxu0 0.0
  %1852 = vmatmul.mubr.f32.gmra.mrb[0].mxu0 %v1785
  %v1853 = vpop.f32.mrb[0].mxu0
  %v1854 = vadd.f32 0.0, %v1853
  %v1855 = vpop.f32.mrb[0].mxu0
  %1856 = vdwg.mxu0
  %vm1857 = vcmask 31744
  %v1859 = vsel %vm1857, %v1581, 0
  %v1862 = vsel %vm1857, %v1582, 0
  %v1865 = vsel %vm1857, %v1583, 0
  %v1868 = vsel %vm1857, %v1584, 0
  %v1871 = vsel %vm1283, %v1854, 0
  %1873 = vmatprep.subr.mxu0 0.0
  %1874 = vmatpush1.msra.mxu0 %v1871
  %1875 = vmatprep.subr.mxu0 0.0
  %1876 = vmatpush1.msra.mxu0 0.0
  %1877 = vmatprep.subr.mxu0 0.0
  %1878 = vmatpush1.msra.mxu0 0.0
  %1879 = vmatprep.subr.mxu0 0.0
  %1880 = vmatpush1.msra.mxu0 0.0
  %1881 = vmatprep.subr.mxu0 0.0
  %1882 = vmatpush1.msra.mxu0 0.0
  %1883 = vmatprep.subr.mxu0 0.0
  %1884 = vmatpush1.msra.mxu0 0.0
  %1885 = vmatprep.subr.mxu0 0.0
  %1886 = vmatpush1.msra.mxu0 0.0
  %1887 = vmatprep.subr.mxu0 0.0
  %1888 = vmatpush1.msra.mxu0 0.0
  %1889 = vmatprep.subr.mxu0 0.0
  %1890 = vmatpush1.msra.mxu0 0.0
  %1891 = vmatprep.subr.mxu0 0.0
  %1892 = vmatpush1.msra.mxu0 0.0
  %1893 = vmatprep.subr.mxu0 0.0
  %1894 = vmatpush1.msra.mxu0 0.0
  %1895 = vmatprep.subr.mxu0 0.0
  %1896 = vmatpush1.msra.mxu0 0.0
  %1897 = vmatprep.subr.mxu0 0.0
  %1898 = vmatpush1.msra.mxu0 0.0
  %1899 = vmatprep.subr.mxu0 0.0
  %1900 = vmatpush1.msra.mxu0 0.0
  %1901 = vmatprep.subr.mxu0 0.0
  %1902 = vmatpush1.msra.mxu0 0.0
  %1903 = vmatprep.subr.mxu0 0.0
  %1904 = vmatpush1.msra.mxu0 0.0
  %1905 = vmatprep.subr.mxu0 0.0
  %1906 = vmatpush1.msra.mxu0 0.0
  %1907 = vmatprep.subr.mxu0 0.0
  %1908 = vmatpush1.msra.mxu0 0.0
  %1909 = vmatprep.subr.mxu0 0.0
  %1910 = vmatpush1.msra.mxu0 0.0
  %1911 = vmatprep.subr.mxu0 0.0
  %1912 = vmatpush1.msra.mxu0 0.0
  %1913 = vmatprep.subr.mxu0 0.0
  %1914 = vmatpush1.msra.mxu0 0.0
  %1915 = vmatprep.subr.mxu0 0.0
  %1916 = vmatpush1.msra.mxu0 0.0
  %1917 = vmatprep.subr.mxu0 0.0
  %1918 = vmatpush1.msra.mxu0 0.0
  %1919 = vmatprep.subr.mxu0 0.0
  %1920 = vmatpush1.msra.mxu0 0.0
  %1921 = vmatprep.subr.mxu0 0.0
  %1922 = vmatpush1.msra.mxu0 0.0
  %1923 = vmatprep.subr.mxu0 0.0
  %1924 = vmatpush1.msra.mxu0 0.0
  %1925 = vmatprep.subr.mxu0 0.0
  %1926 = vmatpush1.msra.mxu0 0.0
  %1927 = vmatprep.subr.mxu0 0.0
  %1928 = vmatpush1.msra.mxu0 0.0
  %1929 = vmatprep.subr.mxu0 0.0
  %1930 = vmatpush1.msra.mxu0 0.0
  %1931 = vmatprep.subr.mxu0 0.0
  %1932 = vmatpush1.msra.mxu0 0.0
  %1933 = vmatprep.subr.mxu0 0.0
  %1934 = vmatpush1.msra.mxu0 0.0
  %1935 = vmatprep.subr.mxu0 0.0
  %1936 = vmatpush1.msra.mxu0 0.0
  %1937 = vmatprep.mubr.f32.mxu0 0.0
  %1938 = vmatmul.mubr.f32.gmra.mrb[0].mxu0 %v1859
  %v1939 = vpop.f32.mrb[0].mxu0
  %v1940 = vadd.f32 0.0, %v1939
  %v1941 = vpop.f32.mrb[0].mxu0
  %1942 = vmatprep.mubr.f32.mxu0 0.0
  %1943 = vmatmul.mubr.f32.gmra.mrb[0].mxu0 %v1862
  %v1944 = vpop.f32.mrb[0].mxu0
  %v1945 = vadd.f32 0.0, %v1944
  %v1946 = vpop.f32.mrb[0].mxu0
  %1947 = vmatprep.mubr.f32.mxu0 0.0
  %1948 = vmatmul.mubr.f32.gmra.mrb[0].mxu0 %v1865
  %v1949 = vpop.f32.mrb[0].mxu0
  %v1950 = vadd.f32 0.0, %v1949
  %v1951 = vpop.f32.mrb[0].mxu0
  %1952 = vmatprep.mubr.f32.mxu0 0.0
  %1953 = vmatmul.mubr.f32.gmra.mrb[0].mxu0 %v1868
  %v1954 = vpop.f32.mrb[0].mxu0
  %v1955 = vadd.f32 0.0, %v1954
  %v1956 = vpop.f32.mrb[0].mxu0
  %1957 = vdwg.mxu0
  %1960 = vrot.lane.b32.xlu0 %v1940, 32
  %v1961 = vpop.permute.xlu0 %1960
  %1962 = vrot.lane.b32.xlu0 %v1945, 32
  %v1963 = vpop.permute.xlu0 %1962
  %v1966 = vmul.f32 %v1570, %v1961
  %v1967 = vmul.f32 %v1571, %v1963
  %1970 = vrot.lane.b32.xlu0 %v1950, 32
  %v1971 = vpop.permute.xlu0 %1970
  %1972 = vrot.lane.b32.xlu0 %v1955, 32
  %v1973 = vpop.permute.xlu0 %1972
  %v1976 = vadd.f32 %v1966, %v1971
  %v1977 = vadd.f32 %v1967, %v1973
  %1980 = vrot.lane.b32.xlu0 %v1976, 96
  %v1981 = vpop.permute.xlu0 %1980
  %1982 = vrot.lane.b32.xlu0 %v1977, 96
  %v1983 = vpop.permute.xlu0 %1982
  %1988 = vrot.lane.b32.xlu0 %v1572, 32
  %v1989 = vpop.permute.xlu0 %1988
  %1990 = vrot.lane.b32.xlu0 %v1573, 32
  %v1991 = vpop.permute.xlu0 %1990
  %v1994 = vsel %vm991, %v1981, %v1989
  %v1995 = vsel %vm991, %v1983, %v1991
  %v1996 = vpack.c.bf16 %v1995, %v1994
  %v1997 = vld [vmem:[%s1 + $0x28] sm:$0xff]
  %v1998 = vld [vmem:[%s1 + $0x30] sm:$0xff]
  %v1999 = vld [vmem:[%s1 + $0x38] sm:$0xff]
  %v2000 = vld [vmem:[%s1 + $0x40] sm:$0xff]
  %v2001 = vld [vmem:[%s1 + $0x48] sm:$0xff]
  %v2002 = vld [vmem:[%s1 + $0x50] sm:$0xff]
  %v2003 = vld [vmem:[%s1 + $0x58] sm:$0xff]
  %v2004 = vld [vmem:[%s1 + $0x60] sm:$0xff]
  %v2005 = vpack.c.bf16 %v1998, %v1997
  %v2006 = vpack.c.bf16 %v2000, %v1999
  %v2007 = vpack.c.bf16 %v2002, %v2001
  %v2008 = vpack.c.bf16 %v2004, %v2003
  %v2009 = vld [vmem:[%s1 + $0x68] sm:$0x1]
  %v2010 = vlaneseq
  %v2011 = vshrl.u32 %v2010, 7
  %v2012 = vsub.s32 0, %v2011
  %v2013 = vrot.slane %v2009, %v2012
  %v2015 = vsel %vm22, %v1996, 0
  %2017 = vmatprep.subr.bf16.mxu0 0
  %2018 = vmatpush1.bf16.msra.mxu0 %v2005
  %2019 = vmatprep.subr.bf16.mxu0 0
  %2020 = vmatpush1.bf16.msra.mxu0 %v2006
  %2021 = vmatprep.subr.bf16.mxu0 0
  %2022 = vmatpush1.bf16.msra.mxu0 %v2007
  %2023 = vmatprep.subr.bf16.mxu0 0
  %2024 = vmatpush1.bf16.msra.mxu0 %v2008
  %2025 = vmatprep.subr.bf16.mxu0 0
  %2026 = vmatpush1.bf16.msra.mxu0 0
  %2027 = vmatprep.subr.bf16.mxu0 0
  %2028 = vmatpush1.bf16.msra.mxu0 0
  %2029 = vmatprep.subr.bf16.mxu0 0
  %2030 = vmatpush1.bf16.msra.mxu0 0
  %2031 = vmatprep.subr.bf16.mxu0 0
  %2032 = vmatpush1.bf16.msra.mxu0 0
  %2033 = vmatprep.subr.bf16.mxu0 0
  %2034 = vmatpush1.bf16.msra.mxu0 0
  %2035 = vmatprep.subr.bf16.mxu0 0
  %2036 = vmatpush1.bf16.msra.mxu0 0
  %2037 = vmatprep.subr.bf16.mxu0 0
  %2038 = vmatpush1.bf16.msra.mxu0 0
  %2039 = vmatprep.subr.bf16.mxu0 0
  %2040 = vmatpush1.bf16.msra.mxu0 0
  %2041 = vmatprep.subr.bf16.mxu0 0
  %2042 = vmatpush1.bf16.msra.mxu0 0
  %2043 = vmatprep.subr.bf16.mxu0 0
  %2044 = vmatpush1.bf16.msra.mxu0 0
  %2045 = vmatprep.subr.bf16.mxu0 0
  %2046 = vmatpush1.bf16.msra.mxu0 0
  %2047 = vmatprep.subr.bf16.mxu0 0
  %2048 = vmatpush1.bf16.msra.mxu0 0
  %2049 = vmatprep.mubr.bf16.mxu0 0
  %2050 = vmatmul.mubr.bf16.gmra.mrb[0].mxu0 %v2015
  %v2051 = vpop.f32.mrb[0].mxu0
  %v2052 = vadd.f32 %v2013, %v2051
  %v2053 = vpop.f32.mrb[0].mxu0
  %v2054 = vpop.f32.mrb[0].mxu0
  %v2055 = vadd.f32 %v2013, %v2054
  %v2056 = vpop.f32.mrb[0].mxu0
  %2057 = vdwg.mxu0
  %v2058 = vmul.f32 %v2052, %v2052
  %v2059 = vmul.f32 %v2055, %v2055
  %v2060 = vmul.f32 %v2052, %v2058
  %v2061 = vmul.f32 %v2055, %v2059
  %v2062 = vmul.f32 %v2060, 0.044715
  %v2063 = vmul.f32 %v2061, 0.044715
  %v2064 = vadd.f32 %v2052, %v2062
  %v2065 = vadd.f32 %v2055, %v2063
  %v2066 = vmul.f32 %v2064, 0.7978846
  %v2067 = vmul.f32 %v2065, 0.7978846
  %v2068 = vtanh.pop %v2066
  %v2069 = vtanh.pop %v2067
  %v2070 = vadd.f32 %v2068, 1.0
  %v2071 = vadd.f32 %v2069, 1.0
  %v2072 = vmul.f32 %v2070, 0.5
  %v2073 = vmul.f32 %v2071, 0.5
  %v2074 = vmul.f32 %v2052, %v2072
  %v2075 = vmul.f32 %v2055, %v2073
  %v2076 = vpack.c.bf16 %v2075, %v2074
  %v2077 = vld [vmem:[%s1 + $0x70] sm:$0xff]
  %v2078 = vld [vmem:[%s1 + $0x78] sm:$0xff]
  %v2079 = vld [vmem:[%s1 + $0x80] sm:$0xff]
  %v2080 = vld [vmem:[%s1 + $0x88] sm:$0xff]
  %v2081 = vpack.c.bf16 %v2078, %v2077
  %v2082 = vpack.c.bf16 %v2080, %v2079
  %v2084 = vsel %vm991, %v2076, 0
  %2086 = vmatprep.subr.bf16.mxu0 0
  %2087 = vmatpush1.bf16.msra.mxu0 %v2081
  %2088 = vmatprep.subr.bf16.mxu0 0
  %2089 = vmatpush1.bf16.msra.mxu0 %v2082
  %2090 = vmatprep.subr.bf16.mxu0 0
  %2091 = vmatpush1.bf16.msra.mxu0 0
  %2092 = vmatprep.subr.bf16.mxu0 0
  %2093 = vmatpush1.bf16.msra.mxu0 0
  %2094 = vmatprep.subr.bf16.mxu0 0
  %2095 = vmatpush1.bf16.msra.mxu0 0
  %2096 = vmatprep.subr.bf16.mxu0 0
  %2097 = vmatpush1.bf16.msra.mxu0 0
  %2098 = vmatprep.subr.bf16.mxu0 0
  %2099 = vmatpush1.bf16.msra.mxu0 0
  %2100 = vmatprep.subr.bf16.mxu0 0
  %2101 = vmatpush1.bf16.msra.mxu0 0
  %2102 = vmatprep.subr.bf16.mxu0 0
  %2103 = vmatpush1.bf16.msra.mxu0 0
  %2104 = vmatprep.subr.bf16.mxu0 0
  %2105 = vmatpush1.bf16.msra.mxu0 0
  %2106 = vmatprep.subr.bf16.mxu0 0
  %2107 = vmatpush1.bf16.msra.mxu0 0
  %2108 = vmatprep.subr.bf16.mxu0 0
  %2109 = vmatpush1.bf16.msra.mxu0 0
  %2110 = vmatprep.subr.bf16.mxu0 0
  %2111 = vmatpush1.bf16.msra.mxu0 0
  %2112 = vmatprep.subr.bf16.mxu0 0
  %2113 = vmatpush1.bf16.msra.mxu0 0
  %2114 = vmatprep.subr.bf16.mxu0 0
  %2115 = vmatpush1.bf16.msra.mxu0 0
  %2116 = vmatprep.subr.bf16.mxu0 0
  %2117 = vmatpush1.bf16.msra.mxu0 0
  %2118 = vmatprep.mubr.bf16.mxu0 0
  %2119 = vmatmul.mubr.bf16.gmra.mrb[0].mxu0 %v2084
  %v2120 = vpop.f32.mrb[0].mxu0
  %v2121 = vadd.f32 0.0, %v2120
  %v2122 = vpop.f32.mrb[0].mxu0
  %v2123 = vpop.f32.mrb[0].mxu0
  %v2124 = vadd.f32 0.0, %v2123
  %v2125 = vpop.f32.mrb[0].mxu0
  %2126 = vdwg.mxu0
  %2129 = vrot.lane.b32.xlu0 %v2121, 32
  %v2130 = vpop.permute.xlu0 %2129
  %2131 = vrot.lane.b32.xlu0 %v2124, 32
  %v2132 = vpop.permute.xlu0 %2131
  %v2135 = vadd.f32 %v1570, %v2130
  %v2136 = vadd.f32 %v1571, %v2132
  %v2137 = vld [vmem:[%s1 + $0x90] sm:$0x1]
  %v2138 = vlaneseq
  %v2139 = vshrl.u32 %v2138, 7
  %v2140 = vsub.s32 0, %v2139
  %v2141 = vrot.slane %v2137, %v2140
  %2143 = vrot.lane.b32.xlu0 %v2141, 32
  %v2144 = vpop.permute.xlu0 %2143
  %v2146 = vadd.f32 %v2135, %v2144
  %v2147 = vadd.f32 %v2136, %v2144
  %v2148 = vmul.f32 %v2146, %v2146
  %v2149 = vmul.f32 %v2147, %v2147
  %2154 = vrot.lane.b32.xlu0 %v2146, 96
  %v2155 = vpop.permute.xlu0 %2154
  %2156 = vrot.lane.b32.xlu0 %v2147, 96
  %v2157 = vpop.permute.xlu0 %2156
  %2158 = vrot.lane.b32.xlu0 %v2148, 96
  %v2159 = vpop.permute.xlu0 %2158
  %2160 = vrot.lane.b32.xlu0 %v2149, 96
  %v2161 = vpop.permute.xlu0 %2160
  %v2162 = vsel %vm991, %v2155, 0
  %v2164 = vsel %vm991, %v2157, 0
  %v2166 = vsel %vm991, %v2159, 0
  %v2168 = vsel %vm991, %v2161, 0
  %2170 = vmatprep.subr.mxu0 0.0
  %2171 = vmatpush1.msra.mxu0 %v1574
  %2172 = vmatprep.subr.mxu0 0.0
  %2173 = vmatpush1.msra.mxu0 %v1575
  %2174 = vmatprep.subr.mxu0 0.0
  %2175 = vmatpush1.msra.mxu0 %v1576
  %2176 = vmatprep.subr.mxu0 0.0
  %2177 = vmatpush1.msra.mxu0 %v1577
  %2178 = vmatprep.subr.mxu0 0.0
  %2179 = vmatpush1.msra.mxu0 0.0
  %2180 = vmatprep.subr.mxu0 0.0
  %2181 = vmatpush1.msra.mxu0 0.0
  %2182 = vmatprep.subr.mxu0 0.0
  %2183 = vmatpush1.msra.mxu0 0.0
  %2184 = vmatprep.subr.mxu0 0.0
  %2185 = vmatpush1.msra.mxu0 0.0
  %2186 = vmatprep.subr.mxu0 0.0
  %2187 = vmatpush1.msra.mxu0 0.0
  %2188 = vmatprep.subr.mxu0 0.0
  %2189 = vmatpush1.msra.mxu0 0.0
  %2190 = vmatprep.subr.mxu0 0.0
  %2191 = vmatpush1.msra.mxu0 0.0
  %2192 = vmatprep.subr.mxu0 0.0
  %2193 = vmatpush1.msra.mxu0 0.0
  %2194 = vmatprep.subr.mxu0 0.0
  %2195 = vmatpush1.msra.mxu0 0.0
  %2196 = vmatprep.subr.mxu0 0.0
  %2197 = vmatpush1.msra.mxu0 0.0
  %2198 = vmatprep.subr.mxu0 0.0
  %2199 = vmatpush1.msra.mxu0 0.0
  %2200 = vmatprep.subr.mxu0 0.0
  %2201 = vmatpush1.msra.mxu0 0.0
  %2202 = vmatprep.subr.mxu0 0.0
  %2203 = vmatpush1.msra.mxu0 0.0
  %2204 = vmatprep.subr.mxu0 0.0
  %2205 = vmatpush1.msra.mxu0 0.0
  %2206 = vmatprep.subr.mxu0 0.0
  %2207 = vmatpush1.msra.mxu0 0.0
  %2208 = vmatprep.subr.mxu0 0.0
  %2209 = vmatpush1.msra.mxu0 0.0
  %2210 = vmatprep.subr.mxu0 0.0
  %2211 = vmatpush1.msra.mxu0 0.0
  %2212 = vmatprep.subr.mxu0 0.0
  %2213 = vmatpush1.msra.mxu0 0.0
  %2214 = vmatprep.subr.mxu0 0.0
  %2215 = vmatpush1.msra.mxu0 0.0
  %2216 = vmatprep.subr.mxu0 0.0
  %2217 = vmatpush1.msra.mxu0 0.0
  %2218 = vmatprep.subr.mxu0 0.0
  %2219 = vmatpush1.msra.mxu0 0.0
  %2220 = vmatprep.subr.mxu0 0.0
  %2221 = vmatpush1.msra.mxu0 0.0
  %2222 = vmatprep.subr.mxu0 0.0
  %2223 = vmatpush1.msra.mxu0 0.0
  %2224 = vmatprep.subr.mxu0 0.0
  %2225 = vmatpush1.msra.mxu0 0.0
  %2226 = vmatprep.subr.mxu0 0.0
  %2227 = vmatpush1.msra.mxu0 0.0
  %2228 = vmatprep.subr.mxu0 0.0
  %2229 = vmatpush1.msra.mxu0 0.0
  %2230 = vmatprep.subr.mxu0 0.0
  %2231 = vmatpush1.msra.mxu0 0.0
  %2232 = vmatprep.subr.mxu0 0.0
  %2233 = vmatpush1.msra.mxu0 0.0
  %2234 = vmatprep.mubr.f32.mxu0 0.0
  %2235 = vmatmul.mubr.f32.gmra.mrb[0].mxu0 %v2162
  %v2236 = vpop.f32.mrb[0].mxu0
  %v2237 = vadd.f32 0.0, %v2236
  %v2238 = vpop.f32.mrb[0].mxu0
  %2239 = vmatprep.mubr.f32.mxu0 0.0
  %2240 = vmatmul.mubr.f32.gmra.mrb[0].mxu0 %v2164
  %v2241 = vpop.f32.mrb[0].mxu0
  %v2242 = vadd.f32 0.0, %v2241
  %v2243 = vpop.f32.mrb[0].mxu0
  %2244 = vmatprep.mubr.f32.mxu0 0.0
  %2245 = vmatmul.mubr.f32.gmra.mrb[0].mxu0 %v2166
  %v2246 = vpop.f32.mrb[0].mxu0
  %v2247 = vadd.f32 0.0, %v2246
  %v2248 = vpop.f32.mrb[0].mxu0
  %2249 = vmatprep.mubr.f32.mxu0 0.0
  %2250 = vmatmul.mubr.f32.gmra.mrb[0].mxu0 %v2168
  %v2251 = vpop.f32.mrb[0].mxu0
  %v2252 = vadd.f32 0.0, %v2251
  %v2253 = vpop.f32.mrb[0].mxu0
  %2254 = vdwg.mxu0
  %2255 = vmatprep.subr.mxu0 0.0
  %2256 = vmatpush1.msra.mxu0 %v2237
  %2257 = vmatprep.subr.mxu0 0.0
  %2258 = vmatpush1.msra.mxu0 %v2242
  %2259 = vmatprep.subr.mxu0 0.0
  %2260 = vmatpush1.msra.mxu0 %v2247
  %2261 = vmatprep.subr.mxu0 0.0
  %2262 = vmatpush1.msra.mxu0 %v2252
  %2263 = vmatprep.subr.mxu0 0.0
  %2264 = vmatpush1.msra.mxu0 0.0
  %2265 = vmatprep.subr.mxu0 0.0
  %2266 = vmatpush1.msra.mxu0 0.0
  %2267 = vmatprep.subr.mxu0 0.0
  %2268 = vmatpush1.msra.mxu0 0.0
  %2269 = vmatprep.subr.mxu0 0.0
  %2270 = vmatpush1.msra.mxu0 0.0
  %2271 = vmatprep.subr.mxu0 0.0
  %2272 = vmatpush1.msra.mxu0 0.0
  %2273 = vmatprep.subr.mxu0 0.0
  %2274 = vmatpush1.msra.mxu0 0.0
  %2275 = vmatprep.subr.mxu0 0.0
  %2276 = vmatpush1.msra.mxu0 0.0
  %2277 = vmatprep.subr.mxu0 0.0
  %2278 = vmatpush1.msra.mxu0 0.0
  %2279 = vmatprep.subr.mxu0 0.0
  %2280 = vmatpush1.msra.mxu0 0.0
  %2281 = vmatprep.subr.mxu0 0.0
  %2282 = vmatpush1.msra.mxu0 0.0
  %2283 = vmatprep.subr.mxu0 0.0
  %2284 = vmatpush1.msra.mxu0 0.0
  %2285 = vmatprep.subr.mxu0 0.0
  %2286 = vmatpush1.msra.mxu0 0.0
  %2287 = vmatprep.subr.mxu0 0.0
  %2288 = vmatpush1.msra.mxu0 0.0
  %2289 = vmatprep.subr.mxu0 0.0
  %2290 = vmatpush1.msra.mxu0 0.0
  %2291 = vmatprep.subr.mxu0 0.0
  %2292 = vmatpush1.msra.mxu0 0.0
  %2293 = vmatprep.subr.mxu0 0.0
  %2294 = vmatpush1.msra.mxu0 0.0
  %2295 = vmatprep.subr.mxu0 0.0
  %2296 = vmatpush1.msra.mxu0 0.0
  %2297 = vmatprep.subr.mxu0 0.0
  %2298 = vmatpush1.msra.mxu0 0.0
  %2299 = vmatprep.subr.mxu0 0.0
  %2300 = vmatpush1.msra.mxu0 0.0
  %2301 = vmatprep.subr.mxu0 0.0
  %2302 = vmatpush1.msra.mxu0 0.0
  %2303 = vmatprep.subr.mxu0 0.0
  %2304 = vmatpush1.msra.mxu0 0.0
  %2305 = vmatprep.subr.mxu0 0.0
  %2306 = vmatpush1.msra.mxu0 0.0
  %2307 = vmatprep.subr.mxu0 0.0
  %2308 = vmatpush1.msra.mxu0 0.0
  %2309 = vmatprep.subr.mxu0 0.0
  %2310 = vmatpush1.msra.mxu0 0.0
  %2311 = vmatprep.subr.mxu0 0.0
  %2312 = vmatpush1.msra.mxu0 0.0
  %2313 = vmatprep.subr.mxu0 0.0
  %2314 = vmatpush1.msra.mxu0 0.0
  %2315 = vmatprep.subr.mxu0 0.0
  %2316 = vmatpush1.msra.mxu0 0.0
  %2317 = vmatprep.subr.mxu0 0.0
  %2318 = vmatpush1.msra.mxu0 0.0
  %2319 = vmatprep.mubr.f32.mxu0 0.0
  %2320 = vmatmul.mubr.f32.gmra.mrb[0].mxu0 %v1693
  %v2321 = vpop.f32.mrb[0].mxu0
  %v2322 = vadd.f32 0.0, %v2321
  %v2323 = vpop.f32.mrb[0].mxu0
  %2324 = vdwg.mxu0
  %v2325 = vmul.f32 %v2322, 0.0625
  %v2326 = vmul.f32 %v2325, %v2325
  %v2328 = vrot.slane %v2326, 6
  %v2330 = vsub.f32 %v2325, %v2328
  %v2331 = vmax.f32 %v2330, 0.0
  %v2332 = vadd.f32 %v2331, 1e-05
  %v2333 = vrsqrt.pop %v2332
  %v2334 = vsub.f32 0.0, %v2325
  %v2336 = vrot.slane %v2333, 2
  %v2338 = vmul.f32 %v2334, %v2336
  %v2340 = vrot.slane %v2338, 6
  %v2342 = vsel %vm1782, %v2336, %v2340
  %v2344 = vsel %vm1063, %v2342, 0
  %2346 = vmatprep.subr.mxu0 0.0
  %2347 = vmatpush1.msra.mxu0 %v1578
  %2348 = vmatprep.subr.mxu0 0.0
  %2349 = vmatpush1.msra.mxu0 %v1579
  %2350 = vmatprep.subr.mxu0 0.0
  %2351 = vmatpush1.msra.mxu0 0.0
  %2352 = vmatprep.subr.mxu0 0.0
  %2353 = vmatpush1.msra.mxu0 0.0
  %2354 = vmatprep.subr.mxu0 0.0
  %2355 = vmatpush1.msra.mxu0 0.0
  %2356 = vmatprep.subr.mxu0 0.0
  %2357 = vmatpush1.msra.mxu0 0.0
  %2358 = vmatprep.subr.mxu0 0.0
  %2359 = vmatpush1.msra.mxu0 0.0
  %2360 = vmatprep.subr.mxu0 0.0
  %2361 = vmatpush1.msra.mxu0 0.0
  %2362 = vmatprep.subr.mxu0 0.0
  %2363 = vmatpush1.msra.mxu0 0.0
  %2364 = vmatprep.subr.mxu0 0.0
  %2365 = vmatpush1.msra.mxu0 0.0
  %2366 = vmatprep.subr.mxu0 0.0
  %2367 = vmatpush1.msra.mxu0 0.0
  %2368 = vmatprep.subr.mxu0 0.0
  %2369 = vmatpush1.msra.mxu0 0.0
  %2370 = vmatprep.subr.mxu0 0.0
  %2371 = vmatpush1.msra.mxu0 0.0
  %2372 = vmatprep.subr.mxu0 0.0
  %2373 = vmatpush1.msra.mxu0 0.0
  %2374 = vmatprep.subr.mxu0 0.0
  %2375 = vmatpush1.msra.mxu0 0.0
  %2376 = vmatprep.subr.mxu0 0.0
  %2377 = vmatpush1.msra.mxu0 0.0
  %2378 = vmatprep.subr.mxu0 0.0
  %2379 = vmatpush1.msra.mxu0 0.0
  %2380 = vmatprep.subr.mxu0 0.0
  %2381 = vmatpush1.msra.mxu0 0.0
  %2382 = vmatprep.subr.mxu0 0.0
  %2383 = vmatpush1.msra.mxu0 0.0
  %2384 = vmatprep.subr.mxu0 0.0
  %2385 = vmatpush1.msra.mxu0 0.0
  %2386 = vmatprep.subr.mxu0 0.0
  %2387 = vmatpush1.msra.mxu0 0.0
  %2388 = vmatprep.subr.mxu0 0.0
  %2389 = vmatpush1.msra.mxu0 0.0
  %2390 = vmatprep.subr.mxu0 0.0
  %2391 = vmatpush1.msra.mxu0 0.0
  %2392 = vmatprep.subr.mxu0 0.0
  %2393 = vmatpush1.msra.mxu0 0.0
  %2394 = vmatprep.subr.mxu0 0.0
  %2395 = vmatpush1.msra.mxu0 0.0
  %2396 = vmatprep.subr.mxu0 0.0
  %2397 = vmatpush1.msra.mxu0 0.0
  %2398 = vmatprep.subr.mxu0 0.0
  %2399 = vmatpush1.msra.mxu0 0.0
  %2400 = vmatprep.subr.mxu0 0.0
  %2401 = vmatpush1.msra.mxu0 0.0
  %2402 = vmatprep.subr.mxu0 0.0
  %2403 = vmatpush1.msra.mxu0 0.0
  %2404 = vmatprep.subr.mxu0 0.0
  %2405 = vmatpush1.msra.mxu0 0.0
  %2406 = vmatprep.subr.mxu0 0.0
  %2407 = vmatpush1.msra.mxu0 0.0
  %2408 = vmatprep.subr.mxu0 0.0
  %2409 = vmatpush1.msra.mxu0 0.0
  %2410 = vmatprep.mubr.f32.mxu0 0.0
  %2411 = vmatmul.mubr.f32.gmra.mrb[0].mxu0 %v2344
  %v2412 = vpop.f32.mrb[0].mxu0
  %v2413 = vadd.f32 0.0, %v2412
  %v2414 = vpop.f32.mrb[0].mxu0
  %2415 = vdwg.mxu0
  %v2417 = vsel %vm1283, %v2413, 0
  %2419 = vmatprep.subr.mxu0 0.0
  %2420 = vmatpush1.msra.mxu0 %v2417
  %2421 = vmatprep.subr.mxu0 0.0
  %2422 = vmatpush1.msra.mxu0 0.0
  %2423 = vmatprep.subr.mxu0 0.0
  %2424 = vmatpush1.msra.mxu0 0.0
  %2425 = vmatprep.subr.mxu0 0.0
  %2426 = vmatpush1.msra.mxu0 0.0
  %2427 = vmatprep.subr.mxu0 0.0
  %2428 = vmatpush1.msra.mxu0 0.0
  %2429 = vmatprep.subr.mxu0 0.0
  %2430 = vmatpush1.msra.mxu0 0.0
  %2431 = vmatprep.subr.mxu0 0.0
  %2432 = vmatpush1.msra.mxu0 0.0
  %2433 = vmatprep.subr.mxu0 0.0
  %2434 = vmatpush1.msra.mxu0 0.0
  %2435 = vmatprep.subr.mxu0 0.0
  %2436 = vmatpush1.msra.mxu0 0.0
  %2437 = vmatprep.subr.mxu0 0.0
  %2438 = vmatpush1.msra.mxu0 0.0
  %2439 = vmatprep.subr.mxu0 0.0
  %2440 = vmatpush1.msra.mxu0 0.0
  %2441 = vmatprep.subr.mxu0 0.0
  %2442 = vmatpush1.msra.mxu0 0.0
  %2443 = vmatprep.subr.mxu0 0.0
  %2444 = vmatpush1.msra.mxu0 0.0
  %2445 = vmatprep.subr.mxu0 0.0
  %2446 = vmatpush1.msra.mxu0 0.0
  %2447 = vmatprep.subr.mxu0 0.0
  %2448 = vmatpush1.msra.mxu0 0.0
  %2449 = vmatprep.subr.mxu0 0.0
  %2450 = vmatpush1.msra.mxu0 0.0
  %2451 = vmatprep.subr.mxu0 0.0
  %2452 = vmatpush1.msra.mxu0 0.0
  %2453 = vmatprep.subr.mxu0 0.0
  %2454 = vmatpush1.msra.mxu0 0.0
  %2455 = vmatprep.subr.mxu0 0.0
  %2456 = vmatpush1.msra.mxu0 0.0
  %2457 = vmatprep.subr.mxu0 0.0
  %2458 = vmatpush1.msra.mxu0 0.0
  %2459 = vmatprep.subr.mxu0 0.0
  %2460 = vmatpush1.msra.mxu0 0.0
  %2461 = vmatprep.subr.mxu0 0.0
  %2462 = vmatpush1.msra.mxu0 0.0
  %2463 = vmatprep.subr.mxu0 0.0
  %2464 = vmatpush1.msra.mxu0 0.0
  %2465 = vmatprep.subr.mxu0 0.0
  %2466 = vmatpush1.msra.mxu0 0.0
  %2467 = vmatprep.subr.mxu0 0.0
  %2468 = vmatpush1.msra.mxu0 0.0
  %2469 = vmatprep.subr.mxu0 0.0
  %2470 = vmatpush1.msra.mxu0 0.0
  %2471 = vmatprep.subr.mxu0 0.0
  %2472 = vmatpush1.msra.mxu0 0.0
  %2473 = vmatprep.subr.mxu0 0.0
  %2474 = vmatpush1.msra.mxu0 0.0
  %2475 = vmatprep.subr.mxu0 0.0
  %2476 = vmatpush1.msra.mxu0 0.0
  %2477 = vmatprep.subr.mxu0 0.0
  %2478 = vmatpush1.msra.mxu0 0.0
  %2479 = vmatprep.subr.mxu0 0.0
  %2480 = vmatpush1.msra.mxu0 0.0
  %2481 = vmatprep.subr.mxu0 0.0
  %2482 = vmatpush1.msra.mxu0 0.0
  %2483 = vmatprep.mubr.f32.mxu0 0.0
  %2484 = vmatmul.mubr.f32.gmra.mrb[0].mxu0 %v1859
  %v2485 = vpop.f32.mrb[0].mxu0
  %v2486 = vadd.f32 0.0, %v2485
  %v2487 = vpop.f32.mrb[0].mxu0
  %2488 = vmatprep.mubr.f32.mxu0 0.0
  %2489 = vmatmul.mubr.f32.gmra.mrb[0].mxu0 %v1862
  %v2490 = vpop.f32.mrb[0].mxu0
  %v2491 = vadd.f32 0.0, %v2490
  %v2492 = vpop.f32.mrb[0].mxu0
  %2493 = vmatprep.mubr.f32.mxu0 0.0
  %2494 = vmatmul.mubr.f32.gmra.mrb[0].mxu0 %v1865
  %v2495 = vpop.f32.mrb[0].mxu0
  %v2496 = vadd.f32 0.0, %v2495
  %v2497 = vpop.f32.mrb[0].mxu0
  %2498 = vmatprep.mubr.f32.mxu0 0.0
  %2499 = vmatmul.mubr.f32.gmra.mrb[0].mxu0 %v1868
  %v2500 = vpop.f32.mrb[0].mxu0
  %v2501 = vadd.f32 0.0, %v2500
  %v2502 = vpop.f32.mrb[0].mxu0
  %2503 = vdwg.mxu0
  %2506 = vrot.lane.b32.xlu0 %v2486, 32
  %v2507 = vpop.permute.xlu0 %2506
  %2508 = vrot.lane.b32.xlu0 %v2491, 32
  %v2509 = vpop.permute.xlu0 %2508
  %v2512 = vmul.f32 %v2146, %v2507
  %v2513 = vmul.f32 %v2147, %v2509
  %2516 = vrot.lane.b32.xlu0 %v2496, 32
  %v2517 = vpop.permute.xlu0 %2516
  %2518 = vrot.lane.b32.xlu0 %v2501, 32
  %v2519 = vpop.permute.xlu0 %2518
  %v2522 = vadd.f32 %v2512, %v2517
  %v2523 = vadd.f32 %v2513, %v2519
  %v2524 = vpack.c.bf16 %v2523, %v2522
  %v2525 = vld [vmem:[%s1 + $0x98] sm:$0xff]
  %v2526 = vld [vmem:[%s1 + $0xa0] sm:$0xff]
  %v2527 = vld [vmem:[%s1 + $0xa8] sm:$0xff]
  %v2528 = vld [vmem:[%s1 + $0xb0] sm:$0xff]
  %v2529 = vpack.c.bf16 %v2526, %v2525
  %v2530 = vpack.c.bf16 %v2528, %v2527
  %v2531 = vld [vmem:[%s1 + $0xb8] sm:$0x1]
  %v2532 = vlaneseq
  %v2533 = vshrl.u32 %v2532, 7
  %v2534 = vsub.s32 0, %v2533
  %v2535 = vrot.slane %v2531, %v2534
  %2537 = vrot.lane.b32.xlu0 %v2524, 96
  %v2538 = vpop.permute.xlu0 %2537
  %v2540 = vsel %vm991, %v2538, 0
  %2542 = vmatprep.subr.bf16.mxu0 0
  %2543 = vmatpush1.bf16.msra.mxu0 %v2529
  %2544 = vmatprep.subr.bf16.mxu0 0
  %2545 = vmatpush1.bf16.msra.mxu0 %v2530
  %2546 = vmatprep.subr.bf16.mxu0 0
  %2547 = vmatpush1.bf16.msra.mxu0 0
  %2548 = vmatprep.subr.bf16.mxu0 0
  %2549 = vmatpush1.bf16.msra.mxu0 0
  %2550 = vmatprep.subr.bf16.mxu0 0
  %2551 = vmatpush1.bf16.msra.mxu0 0
  %2552 = vmatprep.subr.bf16.mxu0 0
  %2553 = vmatpush1.bf16.msra.mxu0 0
  %2554 = vmatprep.subr.bf16.mxu0 0
  %2555 = vmatpush1.bf16.msra.mxu0 0
  %2556 = vmatprep.subr.bf16.mxu0 0
  %2557 = vmatpush1.bf16.msra.mxu0 0
  %2558 = vmatprep.subr.bf16.mxu0 0
  %2559 = vmatpush1.bf16.msra.mxu0 0
  %2560 = vmatprep.subr.bf16.mxu0 0
  %2561 = vmatpush1.bf16.msra.mxu0 0
  %2562 = vmatprep.subr.bf16.mxu0 0
  %2563 = vmatpush1.bf16.msra.mxu0 0
  %2564 = vmatprep.subr.bf16.mxu0 0
  %2565 = vmatpush1.bf16.msra.mxu0 0
  %2566 = vmatprep.subr.bf16.mxu0 0
  %2567 = vmatpush1.bf16.msra.mxu0 0
  %2568 = vmatprep.subr.bf16.mxu0 0
  %2569 = vmatpush1.bf16.msra.mxu0 0
  %2570 = vmatprep.subr.bf16.mxu0 0
  %2571 = vmatpush1.bf16.msra.mxu0 0
  %2572 = vmatprep.subr.bf16.mxu0 0
  %2573 = vmatpush1.bf16.msra.mxu0 0
  %2574 = vmatprep.mubr.bf16.mxu0 0
  %2575 = vmatmul.mubr.bf16.gmra.mrb[0].mxu0 %v2540
  %v2576 = vpop.f32.mrb[0].mxu0
  %v2577 = vadd.f32 %v2535, %v2576
  %v2578 = vpop.f32.mrb[0].mxu0
  %v2579 = vpop.f32.mrb[0].mxu0
  %v2580 = vadd.f32 %v2535, %v2579
  %v2581 = vpop.f32.mrb[0].mxu0
  %2582 = vdwg.mxu0
  %2583 = vst.msk [vmem:[%s2] sm:$0xff] %vm991, %v2577
  %2584 = vst.msk [vmem:[%s2 + $0x8] sm:$0xff] %vm991, %v2580
  // Predicated region
  $region10: #{ray_network_forward.1} parent=0 // pred_check
    _
  $region11: #{ray_network_forward.1} parent=0 // pred_check_branch
    %2586 = sbr.rel (0) target = $region13
  $region12: #{ray_network_forward.1} parent=0 // pred_region
    _
  $region13: #{ray_network_forward.1} parent=0 // pred_fallthru
    _
  // Predicated region
  $region14: #{ray_network_forward.1} parent=0 // pred_check
    _
  $region15: #{ray_network_forward.1} parent=0 // pred_check_branch
    %2588 = sbr.rel (0) target = $region17
  $region16: #{ray_network_forward.1} parent=0 // pred_region
    _
  $region17: #{ray_network_forward.1} parent=0 // pred_fallthru
    _

</llo_original>
